<compile_context>
chip_gen: v7x
topology: tpu7x:2x2x1
jax: 0.10.0
libtpu: 0.0.40
codegen_flags: <defaults>
</compile_context>

<pallas_src>
import jax
import jax.numpy as jnp
from jax.experimental import pallas as pl
from jax.experimental.pallas import tpu as pltpu

IMG_SHAPE = (1, 28, 28)
LATENT_DIM = 784            # forward implies z has 784 features (Linear(784, 128))
PADDED_DIM = 896            # 7 * 128 lane-dense padding of the 784-wide dims
DIMS = [784, 128, 256, 512, 1024, 784]
BN_EPS = 0.8
LEAKY_SLOPE = 0.2


def _leaky_relu(x):
    return jnp.where(x > 0, x, LEAKY_SLOPE * x)


def _dq_bf16(wq_i8):
    # int8 -> bf16 (exact for |v| <= 127); route through f32 for safe lowering.
    return wq_i8.astype(jnp.float32).astype(jnp.bfloat16)


def _qmm_bn_leaky(h_f32, wq_i8, s, g, be):
    """Linear (quantized weights) + training-mode BatchNorm1d(eps=0.8) + LeakyReLU.

    The matmul runs on the raw integer weight values; the dequant scale `s`
    (per output column) is folded into the BN scale/shift, and the Linear bias
    is omitted because it cancels exactly against the batch-mean subtraction.
    One-pass statistics (sum / sum-of-squares); eps=0.8 makes E[x^2]-E[x]^2 safe.
    """
    q = jnp.dot(h_f32.astype(jnp.bfloat16), _dq_bf16(wq_i8),
                preferred_element_type=jnp.float32)
    inv_b = 1.0 / q.shape[0]
    mean_q = jnp.sum(q, axis=0, keepdims=True) * inv_b
    var_q = jnp.sum(q * q, axis=0, keepdims=True) * inv_b - mean_q * mean_q
    scale = g * s * jax.lax.rsqrt(s * s * var_q + BN_EPS)
    shift = be - mean_q * scale
    return _leaky_relu(q * scale + shift)


def generator_kernel(
    z_ref,
    w1_ref, s1_ref, b1_ref,
    w2_ref, s2_ref, g2_ref, be2_ref,
    w3_ref, s3_ref, g3_ref, be3_ref,
    s4_ref, g4_ref, be4_ref,
    s5_ref, b5_ref,
    w4_hbm, w5_hbm,            # int8 weights left in HBM (pl.ANY), copied manually
    out_ref,
    w4_buf, w5_buf, dma_sems,  # VMEM scratch + DMA semaphores
):
    # Kick off the two largest weight DMAs (~80% of all weight bytes) so they
    # overlap with layers 1-3 compute and the small-weight dequant casts.
    cp4 = pltpu.make_async_copy(w4_hbm, w4_buf, dma_sems.at[0])
    cp5 = pltpu.make_async_copy(w5_hbm, w5_buf, dma_sems.at[1])
    cp4.start()
    cp5.start()

    z = z_ref[...]                                      # bf16, K padded 784 -> 896

    # Layer 1: Linear(784->128) + LeakyReLU; dequant folded into one FMA.
    q1 = jnp.dot(z, _dq_bf16(w1_ref[...]), preferred_element_type=jnp.float32)
    h = _leaky_relu(q1 * s1_ref[...] + b1_ref[...])

    # Layers 2-4: Linear + BatchNorm(batch stats, eps=0.8) + LeakyReLU.
    h = _qmm_bn_leaky(h, w2_ref[...], s2_ref[...], g2_ref[...], be2_ref[...])   # 128 -> 256
    h = _qmm_bn_leaky(h, w3_ref[...], s3_ref[...], g3_ref[...], be3_ref[...])   # 256 -> 512
    cp4.wait()
    h = _qmm_bn_leaky(h, w4_buf[...], s4_ref[...], g4_ref[...], be4_ref[...])   # 512 -> 1024

    # Layer 5: Linear(1024 -> 784, N padded to 896) + Tanh, bf16 output.
    cp5.wait()
    q5 = jnp.dot(h.astype(jnp.bfloat16), _dq_bf16(w5_buf[...]),
                 preferred_element_type=jnp.float32)
    out_ref[...] = jnp.tanh(q5 * s5_ref[...] + b5_ref[...]).astype(out_ref.dtype)


# ----------------------------- parameter handling -----------------------------

def init_params(key):
    """Deterministic f32 parameter init, shapes matching the PyTorch module."""
    params = {}
    keys = jax.random.split(key, 10)
    ki = 0
    for li, (din, dout) in enumerate(zip(DIMS[:-1], DIMS[1:]), start=1):
        # Weights stored (in, out) so forward computes x @ W
        # (equivalent to PyTorch's x @ W.T with W stored (out, in)).
        bound = 1.0 / float(din) ** 0.5
        params[f"w{li}"] = jax.random.uniform(
            keys[ki], (din, dout), jnp.float32, -bound, bound)
        params[f"b{li}"] = jax.random.uniform(
            keys[ki + 1], (1, dout), jnp.float32, -bound, bound)
        ki += 2
    for li in (2, 3, 4):  # BatchNorm affine params (PyTorch init: gamma=1, beta=0)
        dout = DIMS[li]
        params[f"g{li}"] = jnp.ones((1, dout), jnp.float32)
        params[f"be{li}"] = jnp.zeros((1, dout), jnp.float32)
    return params


def _quantize_per_col(w):
    """Symmetric int8 quantization with a per-output-column scale."""
    amax = jnp.max(jnp.abs(w), axis=0, keepdims=True)
    scale = jnp.maximum(amax, 1e-8) / 127.0
    wq = jnp.clip(jnp.round(w / scale), -127.0, 127.0).astype(jnp.int8)
    return wq, scale


def pack_params(params):
    """int8 weights + per-column f32 scales + lane-dense padding of 784-wide dims."""
    p = {}
    # w1: pad K 784 -> 896 with zero rows (zero z-padding makes this a no-op).
    w1 = jnp.zeros((PADDED_DIM, DIMS[1]), jnp.float32).at[:DIMS[0]].set(params["w1"])
    p["w1q"], p["s1"] = _quantize_per_col(w1)
    p["b1"] = params["b1"]
    for li in (2, 3, 4):
        p[f"w{li}q"], p[f"s{li}"] = _quantize_per_col(params[f"w{li}"])
        p[f"g{li}"] = params[f"g{li}"]
        p[f"be{li}"] = params[f"be{li}"]
        # b2/b3/b4 intentionally not packed: cancelled by training-mode BatchNorm.
    # w5/b5: pad N 784 -> 896 with zero cols; padded outputs are tanh(0)=0.
    w5 = jnp.zeros((DIMS[4], PADDED_DIM), jnp.float32).at[:, :DIMS[5]].set(params["w5"])
    p["w5q"], p["s5"] = _quantize_per_col(w5)
    p["b5"] = jnp.zeros((1, PADDED_DIM), jnp.float32).at[:, :DIMS[5]].set(params["b5"])
    # TODO(synk): use fp8 (e4m3) storage on v7x instead of int8 if its byte
    # savings matter there; the kernel math is unchanged (MXU still sees bf16).
    return p


def _pad_latent(z):
    B = z.shape[0]
    return jnp.zeros((B, PADDED_DIM), jnp.bfloat16).at[:, :LATENT_DIM].set(
        z.astype(jnp.bfloat16))


# --------------------------------- wrapper ------------------------------------

def generator_forward(z, kp):
    B = z.shape[0]
    z_p = _pad_latent(z)
    args = (
        z_p,
        kp["w1q"], kp["s1"], kp["b1"],
        kp["w2q"], kp["s2"], kp["g2"], kp["be2"],
        kp["w3q"], kp["s3"], kp["g3"], kp["be3"],
        kp["s4"], kp["g4"], kp["be4"],
        kp["s5"], kp["b5"],
        kp["w4q"], kp["w5q"],
    )
    vmem = pl.BlockSpec(memory_space=pltpu.MemorySpace.VMEM)
    hbm = pl.BlockSpec(memory_space=pl.ANY)
    flat = pl.pallas_call(
        generator_kernel,
        out_shape=jax.ShapeDtypeStruct((B, PADDED_DIM), jnp.bfloat16),
        in_specs=[vmem] * 17 + [hbm, hbm],
        out_specs=vmem,
        scratch_shapes=[
            pltpu.VMEM((DIMS[3], DIMS[4]), jnp.int8),        # w4 buffer (512, 1024)
            pltpu.VMEM((DIMS[4], PADDED_DIM), jnp.int8),     # w5 buffer (1024, 896)
            pltpu.SemaphoreType.DMA((2,)),
        ],
        compiler_params=pltpu.CompilerParams(vmem_limit_bytes=32 << 20),
    )(*args)
    # Glue: drop lane padding, reshape (B, 784) -> (B, 1, 28, 28) like img.view(...)
    return flat[:, :LATENT_DIM].reshape(B, *IMG_SHAPE)


# -------------------------------- references ----------------------------------

def reference_forward_quant(z, kp):
    """Plain-JAX reference using the SAME quantized / folded math as the kernel."""
    B = z.shape[0]
    z_p = _pad_latent(z)
    q1 = jnp.dot(z_p, _dq_bf16(kp["w1q"]), preferred_element_type=jnp.float32)
    h = _leaky_relu(q1 * kp["s1"] + kp["b1"])
    for li in (2, 3, 4):
        h = _qmm_bn_leaky(h, kp[f"w{li}q"], kp[f"s{li}"], kp[f"g{li}"], kp[f"be{li}"])
    q5 = jnp.dot(h.astype(jnp.bfloat16), _dq_bf16(kp["w5q"]),
                 preferred_element_type=jnp.float32)
    h = jnp.tanh(q5 * kp["s5"] + kp["b5"])
    return h[:, :LATENT_DIM].reshape(B, *IMG_SHAPE)


def reference_forward_f32(z, params):
    """True f32, unfolded reference of the original PyTorch module (training-mode
    BatchNorm with biased batch variance, eps=0.8, all Linear biases present)."""
    B = z.shape[0]
    hi = jax.lax.Precision.HIGHEST
    h = jnp.dot(z, params["w1"], precision=hi) + params["b1"]
    h = _leaky_relu(h)
    for li in (2, 3, 4):
        h = jnp.dot(h, params[f"w{li}"], precision=hi) + params[f"b{li}"]
        mean = jnp.mean(h, axis=0, keepdims=True)
        var = jnp.mean((h - mean) ** 2, axis=0, keepdims=True)
        h = (h - mean) * jax.lax.rsqrt(var + BN_EPS) * params[f"g{li}"] + params[f"be{li}"]
        h = _leaky_relu(h)
    h = jnp.tanh(jnp.dot(h, params["w5"], precision=hi) + params["b5"])
    return h.reshape(B, *IMG_SHAPE)


if __name__ == "__main__":
    key = jax.random.PRNGKey(0)
    pkey, zkey = jax.random.split(key)
    params = init_params(pkey)
    kparams = pack_params(params)

    B = 8
    z = jax.random.normal(zkey, (B, LATENT_DIM), jnp.float32)

    img = generator_forward(z, kparams)
    jax.block_until_ready(img)

    assert img.shape == (B, 1, 28, 28), img.shape
    img_f32 = img.astype(jnp.float32)
    assert bool(jnp.all(jnp.isfinite(img_f32))), "non-finite output"

    # (a) Self-consistency vs. the identical quantized/folded math outside Pallas.
    ref_q = reference_forward_quant(z, kparams)
    assert jnp.allclose(img_f32, ref_q, atol=1e-2), "mismatch vs quantized reference"

    # (b) Drift vs. the true f32, unfolded original-module math (tolerance covers
    #     int8 weights + bf16 activations + bf16 output).
    ref_f = reference_forward_f32(z, params)
    assert jnp.allclose(img_f32, ref_f, atol=3e-2), "mismatch vs f32 reference"

    print("KERNEL_OK")
</pallas_src>

<mosaic_0001>
module attributes {stable_mosaic.version = 11 : i64} {
  func.func @generator_kernel(%arg0: memref<8x896xbf16, #tpu.memory_space<vmem>>, %arg1: memref<896x128xi8, #tpu.memory_space<vmem>>, %arg2: memref<1x128xf32, #tpu.memory_space<vmem>>, %arg3: memref<1x128xf32, #tpu.memory_space<vmem>>, %arg4: memref<128x256xi8, #tpu.memory_space<vmem>>, %arg5: memref<1x256xf32, #tpu.memory_space<vmem>>, %arg6: memref<1x256xf32, #tpu.memory_space<vmem>>, %arg7: memref<1x256xf32, #tpu.memory_space<vmem>>, %arg8: memref<256x512xi8, #tpu.memory_space<vmem>>, %arg9: memref<1x512xf32, #tpu.memory_space<vmem>>, %arg10: memref<1x512xf32, #tpu.memory_space<vmem>>, %arg11: memref<1x512xf32, #tpu.memory_space<vmem>>, %arg12: memref<1x1024xf32, #tpu.memory_space<vmem>>, %arg13: memref<1x1024xf32, #tpu.memory_space<vmem>>, %arg14: memref<1x1024xf32, #tpu.memory_space<vmem>>, %arg15: memref<1x896xf32, #tpu.memory_space<vmem>>, %arg16: memref<1x896xf32, #tpu.memory_space<vmem>>, %arg17: memref<512x1024xi8, #tpu.memory_space<any>>, %arg18: memref<1024x896xi8, #tpu.memory_space<any>>, %arg19: memref<8x896xbf16, #tpu.memory_space<vmem>>, %arg20: memref<512x1024xi8, #tpu.memory_space<vmem>>, %arg21: memref<1024x896xi8, #tpu.memory_space<vmem>>, %arg22: memref<2x!tpu.dma_semaphore, #tpu.memory_space<semaphore_mem>>) attributes {dimension_semantics = [], scalar_prefetch = 0 : i64, scratch_operands = 3 : i64, tpu.core_type = #tpu.core_type<tc>} {
    %c0_i32 = arith.constant 0 : i32
    %0 = tpu.memref_slice %arg22[%c0_i32] : memref<2x!tpu.dma_semaphore, #tpu.memory_space<semaphore_mem>> -> memref<1x!tpu.dma_semaphore, #tpu.memory_space<semaphore_mem>>
    %1 = tpu.memref_squeeze %0 : memref<1x!tpu.dma_semaphore, #tpu.memory_space<semaphore_mem>> -> memref<!tpu.dma_semaphore, #tpu.memory_space<semaphore_mem>>
    tpu.enqueue_dma source(%arg17 : memref<512x1024xi8, #tpu.memory_space<any>>) target(%arg20 : memref<512x1024xi8, #tpu.memory_space<vmem>>) target_semaphore(%1 : memref<!tpu.dma_semaphore, #tpu.memory_space<semaphore_mem>>)
    %c1_i32 = arith.constant 1 : i32
    %2 = tpu.memref_slice %arg22[%c1_i32] : memref<2x!tpu.dma_semaphore, #tpu.memory_space<semaphore_mem>> -> memref<1x!tpu.dma_semaphore, #tpu.memory_space<semaphore_mem>>
    %3 = tpu.memref_squeeze %2 : memref<1x!tpu.dma_semaphore, #tpu.memory_space<semaphore_mem>> -> memref<!tpu.dma_semaphore, #tpu.memory_space<semaphore_mem>>
    tpu.enqueue_dma source(%arg18 : memref<1024x896xi8, #tpu.memory_space<any>>) target(%arg21 : memref<1024x896xi8, #tpu.memory_space<vmem>>) target_semaphore(%3 : memref<!tpu.dma_semaphore, #tpu.memory_space<semaphore_mem>>)
    %c0 = arith.constant 0 : index
    %c0_0 = arith.constant 0 : index
    %4 = vector.load %arg0[%c0, %c0_0] : memref<8x896xbf16, #tpu.memory_space<vmem>>, vector<8x896xbf16>
    %c0_1 = arith.constant 0 : index
    %c0_2 = arith.constant 0 : index
    %5 = vector.load %arg1[%c0_1, %c0_2] : memref<896x128xi8, #tpu.memory_space<vmem>>, vector<896x128xi8>
    %6 = arith.sitofp %5 : vector<896x128xi8> to vector<896x128xf32>
    %7 = arith.truncf %6 : vector<896x128xf32> to vector<896x128xbf16>
    %cst = arith.constant dense<0.000000e+00> : vector<8x128xf32>
    %8 = tpu.matmul %4, %7, %cst {dimension_numbers = #tpu.dot_dimension_numbers<[1], [0], [0], [1], [0, 0, 1, 1], [], []>} : vector<8x896xbf16>, vector<896x128xbf16>, vector<8x128xf32> -> vector<8x128xf32>
    %c0_3 = arith.constant 0 : index
    %c0_4 = arith.constant 0 : index
    %9 = vector.load %arg2[%c0_3, %c0_4] : memref<1x128xf32, #tpu.memory_space<vmem>>, vector<1x128xf32>
    %10 = vector.broadcast %9 : vector<1x128xf32> to vector<8x128xf32>
    %11 = arith.mulf %8, %10 : vector<8x128xf32>
    %c0_5 = arith.constant 0 : index
    %c0_6 = arith.constant 0 : index
    %12 = vector.load %arg3[%c0_5, %c0_6] : memref<1x128xf32, #tpu.memory_space<vmem>>, vector<1x128xf32>
    %13 = vector.broadcast %12 : vector<1x128xf32> to vector<8x128xf32>
    %14 = arith.addf %11, %13 : vector<8x128xf32>
    %cst_7 = arith.constant 0.000000e+00 : f32
    %15 = vector.broadcast %cst_7 : f32 to vector<8x128xf32>
    %16 = arith.cmpf ogt, %14, %15 : vector<8x128xf32>
    %cst_8 = arith.constant 2.000000e-01 : f32
    %17 = vector.broadcast %cst_8 : f32 to vector<8x128xf32>
    %18 = arith.mulf %17, %14 : vector<8x128xf32>
    %19 = arith.select %16, %14, %18 : vector<8x128xi1>, vector<8x128xf32>
    %c0_9 = arith.constant 0 : index
    %c0_10 = arith.constant 0 : index
    %20 = vector.load %arg4[%c0_9, %c0_10] : memref<128x256xi8, #tpu.memory_space<vmem>>, vector<128x256xi8>
    %c0_11 = arith.constant 0 : index
    %c0_12 = arith.constant 0 : index
    %21 = vector.load %arg5[%c0_11, %c0_12] : memref<1x256xf32, #tpu.memory_space<vmem>>, vector<1x256xf32>
    %c0_13 = arith.constant 0 : index
    %c0_14 = arith.constant 0 : index
    %22 = vector.load %arg6[%c0_13, %c0_14] : memref<1x256xf32, #tpu.memory_space<vmem>>, vector<1x256xf32>
    %c0_15 = arith.constant 0 : index
    %c0_16 = arith.constant 0 : index
    %23 = vector.load %arg7[%c0_15, %c0_16] : memref<1x256xf32, #tpu.memory_space<vmem>>, vector<1x256xf32>
    %24 = arith.truncf %19 : vector<8x128xf32> to vector<8x128xbf16>
    %25 = arith.sitofp %20 : vector<128x256xi8> to vector<128x256xf32>
    %26 = arith.truncf %25 : vector<128x256xf32> to vector<128x256xbf16>
    %cst_17 = arith.constant dense<0.000000e+00> : vector<8x256xf32>
    %27 = tpu.matmul %24, %26, %cst_17 {dimension_numbers = #tpu.dot_dimension_numbers<[1], [0], [0], [1], [0, 0, 1, 1], [], []>} : vector<8x128xbf16>, vector<128x256xbf16>, vector<8x256xf32> -> vector<8x256xf32>
    %cst_18 = arith.constant dense<0.000000e+00> : vector<256xf32>
    %28 = vector.multi_reduction <add>, %27, %cst_18 [0] : vector<8x256xf32> to vector<256xf32>
    %29 = vector.shape_cast %28 : vector<256xf32> to vector<1x256xf32>
    %cst_19 = arith.constant 1.250000e-01 : f32
    %30 = vector.broadcast %cst_19 : f32 to vector<1x256xf32>
    %31 = arith.mulf %29, %30 : vector<1x256xf32>
    %32 = arith.mulf %27, %27 : vector<8x256xf32>
    %cst_20 = arith.constant dense<0.000000e+00> : vector<256xf32>
    %33 = vector.multi_reduction <add>, %32, %cst_20 [0] : vector<8x256xf32> to vector<256xf32>
    %34 = vector.shape_cast %33 : vector<256xf32> to vector<1x256xf32>
    %cst_21 = arith.constant 1.250000e-01 : f32
    %35 = vector.broadcast %cst_21 : f32 to vector<1x256xf32>
    %36 = arith.mulf %34, %35 : vector<1x256xf32>
    %37 = arith.mulf %31, %31 : vector<1x256xf32>
    %38 = arith.subf %36, %37 : vector<1x256xf32>
    %39 = arith.mulf %22, %21 : vector<1x256xf32>
    %40 = arith.mulf %21, %21 : vector<1x256xf32>
    %41 = arith.mulf %40, %38 : vector<1x256xf32>
    %cst_22 = arith.constant 8.000000e-01 : f32
    %42 = vector.broadcast %cst_22 : f32 to vector<1x256xf32>
    %43 = arith.addf %41, %42 : vector<1x256xf32>
    %44 = math.rsqrt %43 : vector<1x256xf32>
    %45 = arith.mulf %39, %44 : vector<1x256xf32>
    %46 = arith.mulf %31, %45 : vector<1x256xf32>
    %47 = arith.subf %23, %46 : vector<1x256xf32>
    %48 = vector.broadcast %45 : vector<1x256xf32> to vector<8x256xf32>
    %49 = arith.mulf %27, %48 : vector<8x256xf32>
    %50 = vector.broadcast %47 : vector<1x256xf32> to vector<8x256xf32>
    %51 = arith.addf %49, %50 : vector<8x256xf32>
    %cst_23 = arith.constant 0.000000e+00 : f32
    %52 = vector.broadcast %cst_23 : f32 to vector<8x256xf32>
    %53 = arith.cmpf ogt, %51, %52 : vector<8x256xf32>
    %cst_24 = arith.constant 2.000000e-01 : f32
    %54 = vector.broadcast %cst_24 : f32 to vector<8x256xf32>
    %55 = arith.mulf %54, %51 : vector<8x256xf32>
    %56 = arith.select %53, %51, %55 : vector<8x256xi1>, vector<8x256xf32>
    %c0_25 = arith.constant 0 : index
    %c0_26 = arith.constant 0 : index
    %57 = vector.load %arg8[%c0_25, %c0_26] : memref<256x512xi8, #tpu.memory_space<vmem>>, vector<256x512xi8>
    %c0_27 = arith.constant 0 : index
    %c0_28 = arith.constant 0 : index
    %58 = vector.load %arg9[%c0_27, %c0_28] : memref<1x512xf32, #tpu.memory_space<vmem>>, vector<1x512xf32>
    %c0_29 = arith.constant 0 : index
    %c0_30 = arith.constant 0 : index
    %59 = vector.load %arg10[%c0_29, %c0_30] : memref<1x512xf32, #tpu.memory_space<vmem>>, vector<1x512xf32>
    %c0_31 = arith.constant 0 : index
    %c0_32 = arith.constant 0 : index
    %60 = vector.load %arg11[%c0_31, %c0_32] : memref<1x512xf32, #tpu.memory_space<vmem>>, vector<1x512xf32>
    %61 = arith.truncf %56 : vector<8x256xf32> to vector<8x256xbf16>
    %62 = arith.sitofp %57 : vector<256x512xi8> to vector<256x512xf32>
    %63 = arith.truncf %62 : vector<256x512xf32> to vector<256x512xbf16>
    %cst_33 = arith.constant dense<0.000000e+00> : vector<8x512xf32>
    %64 = tpu.matmul %61, %63, %cst_33 {dimension_numbers = #tpu.dot_dimension_numbers<[1], [0], [0], [1], [0, 0, 1, 1], [], []>} : vector<8x256xbf16>, vector<256x512xbf16>, vector<8x512xf32> -> vector<8x512xf32>
    %cst_34 = arith.constant dense<0.000000e+00> : vector<512xf32>
    %65 = vector.multi_reduction <add>, %64, %cst_34 [0] : vector<8x512xf32> to vector<512xf32>
    %66 = vector.shape_cast %65 : vector<512xf32> to vector<1x512xf32>
    %cst_35 = arith.constant 1.250000e-01 : f32
    %67 = vector.broadcast %cst_35 : f32 to vector<1x512xf32>
    %68 = arith.mulf %66, %67 : vector<1x512xf32>
    %69 = arith.mulf %64, %64 : vector<8x512xf32>
    %cst_36 = arith.constant dense<0.000000e+00> : vector<512xf32>
    %70 = vector.multi_reduction <add>, %69, %cst_36 [0] : vector<8x512xf32> to vector<512xf32>
    %71 = vector.shape_cast %70 : vector<512xf32> to vector<1x512xf32>
    %cst_37 = arith.constant 1.250000e-01 : f32
    %72 = vector.broadcast %cst_37 : f32 to vector<1x512xf32>
    %73 = arith.mulf %71, %72 : vector<1x512xf32>
    %74 = arith.mulf %68, %68 : vector<1x512xf32>
    %75 = arith.subf %73, %74 : vector<1x512xf32>
    %76 = arith.mulf %59, %58 : vector<1x512xf32>
    %77 = arith.mulf %58, %58 : vector<1x512xf32>
    %78 = arith.mulf %77, %75 : vector<1x512xf32>
    %cst_38 = arith.constant 8.000000e-01 : f32
    %79 = vector.broadcast %cst_38 : f32 to vector<1x512xf32>
    %80 = arith.addf %78, %79 : vector<1x512xf32>
    %81 = math.rsqrt %80 : vector<1x512xf32>
    %82 = arith.mulf %76, %81 : vector<1x512xf32>
    %83 = arith.mulf %68, %82 : vector<1x512xf32>
    %84 = arith.subf %60, %83 : vector<1x512xf32>
    %85 = vector.broadcast %82 : vector<1x512xf32> to vector<8x512xf32>
    %86 = arith.mulf %64, %85 : vector<8x512xf32>
    %87 = vector.broadcast %84 : vector<1x512xf32> to vector<8x512xf32>
    %88 = arith.addf %86, %87 : vector<8x512xf32>
    %cst_39 = arith.constant 0.000000e+00 : f32
    %89 = vector.broadcast %cst_39 : f32 to vector<8x512xf32>
    %90 = arith.cmpf ogt, %88, %89 : vector<8x512xf32>
    %cst_40 = arith.constant 2.000000e-01 : f32
    %91 = vector.broadcast %cst_40 : f32 to vector<8x512xf32>
    %92 = arith.mulf %91, %88 : vector<8x512xf32>
    %93 = arith.select %90, %88, %92 : vector<8x512xi1>, vector<8x512xf32>
    %c0_i32_41 = arith.constant 0 : i32
    %94 = tpu.memref_slice %arg22[%c0_i32_41] : memref<2x!tpu.dma_semaphore, #tpu.memory_space<semaphore_mem>> -> memref<1x!tpu.dma_semaphore, #tpu.memory_space<semaphore_mem>>
    %95 = tpu.memref_squeeze %94 : memref<1x!tpu.dma_semaphore, #tpu.memory_space<semaphore_mem>> -> memref<!tpu.dma_semaphore, #tpu.memory_space<semaphore_mem>>
    tpu.wait_dma2 semaphore(%95 : memref<!tpu.dma_semaphore, #tpu.memory_space<semaphore_mem>>) src(%arg17 : memref<512x1024xi8, #tpu.memory_space<any>>) dst(%arg20 : memref<512x1024xi8, #tpu.memory_space<vmem>>)
    %c0_42 = arith.constant 0 : index
    %c0_43 = arith.constant 0 : index
    %96 = vector.load %arg20[%c0_42, %c0_43] : memref<512x1024xi8, #tpu.memory_space<vmem>>, vector<512x1024xi8>
    %c0_44 = arith.constant 0 : index
    %c0_45 = arith.constant 0 : index
    %97 = vector.load %arg12[%c0_44, %c0_45] : memref<1x1024xf32, #tpu.memory_space<vmem>>, vector<1x1024xf32>
    %c0_46 = arith.constant 0 : index
    %c0_47 = arith.constant 0 : index
    %98 = vector.load %arg13[%c0_46, %c0_47] : memref<1x1024xf32, #tpu.memory_space<vmem>>, vector<1x1024xf32>
    %c0_48 = arith.constant 0 : index
    %c0_49 = arith.constant 0 : index
    %99 = vector.load %arg14[%c0_48, %c0_49] : memref<1x1024xf32, #tpu.memory_space<vmem>>, vector<1x1024xf32>
    %100 = arith.truncf %93 : vector<8x512xf32> to vector<8x512xbf16>
    %101 = arith.sitofp %96 : vector<512x1024xi8> to vector<512x1024xf32>
    %102 = arith.truncf %101 : vector<512x1024xf32> to vector<512x1024xbf16>
    %cst_50 = arith.constant dense<0.000000e+00> : vector<8x1024xf32>
    %103 = tpu.matmul %100, %102, %cst_50 {dimension_numbers = #tpu.dot_dimension_numbers<[1], [0], [0], [1], [0, 0, 1, 1], [], []>} : vector<8x512xbf16>, vector<512x1024xbf16>, vector<8x1024xf32> -> vector<8x1024xf32>
    %cst_51 = arith.constant dense<0.000000e+00> : vector<1024xf32>
    %104 = vector.multi_reduction <add>, %103, %cst_51 [0] : vector<8x1024xf32> to vector<1024xf32>
    %105 = vector.shape_cast %104 : vector<1024xf32> to vector<1x1024xf32>
    %cst_52 = arith.constant 1.250000e-01 : f32
    %106 = vector.broadcast %cst_52 : f32 to vector<1x1024xf32>
    %107 = arith.mulf %105, %106 : vector<1x1024xf32>
    %108 = arith.mulf %103, %103 : vector<8x1024xf32>
    %cst_53 = arith.constant dense<0.000000e+00> : vector<1024xf32>
    %109 = vector.multi_reduction <add>, %108, %cst_53 [0] : vector<8x1024xf32> to vector<1024xf32>
    %110 = vector.shape_cast %109 : vector<1024xf32> to vector<1x1024xf32>
    %cst_54 = arith.constant 1.250000e-01 : f32
    %111 = vector.broadcast %cst_54 : f32 to vector<1x1024xf32>
    %112 = arith.mulf %110, %111 : vector<1x1024xf32>
    %113 = arith.mulf %107, %107 : vector<1x1024xf32>
    %114 = arith.subf %112, %113 : vector<1x1024xf32>
    %115 = arith.mulf %98, %97 : vector<1x1024xf32>
    %116 = arith.mulf %97, %97 : vector<1x1024xf32>
    %117 = arith.mulf %116, %114 : vector<1x1024xf32>
    %cst_55 = arith.constant 8.000000e-01 : f32
    %118 = vector.broadcast %cst_55 : f32 to vector<1x1024xf32>
    %119 = arith.addf %117, %118 : vector<1x1024xf32>
    %120 = math.rsqrt %119 : vector<1x1024xf32>
    %121 = arith.mulf %115, %120 : vector<1x1024xf32>
    %122 = arith.mulf %107, %121 : vector<1x1024xf32>
    %123 = arith.subf %99, %122 : vector<1x1024xf32>
    %124 = vector.broadcast %121 : vector<1x1024xf32> to vector<8x1024xf32>
    %125 = arith.mulf %103, %124 : vector<8x1024xf32>
    %126 = vector.broadcast %123 : vector<1x1024xf32> to vector<8x1024xf32>
    %127 = arith.addf %125, %126 : vector<8x1024xf32>
    %cst_56 = arith.constant 0.000000e+00 : f32
    %128 = vector.broadcast %cst_56 : f32 to vector<8x1024xf32>
    %129 = arith.cmpf ogt, %127, %128 : vector<8x1024xf32>
    %cst_57 = arith.constant 2.000000e-01 : f32
    %130 = vector.broadcast %cst_57 : f32 to vector<8x1024xf32>
    %131 = arith.mulf %130, %127 : vector<8x1024xf32>
    %132 = arith.select %129, %127, %131 : vector<8x1024xi1>, vector<8x1024xf32>
    %c1_i32_58 = arith.constant 1 : i32
    %133 = tpu.memref_slice %arg22[%c1_i32_58] : memref<2x!tpu.dma_semaphore, #tpu.memory_space<semaphore_mem>> -> memref<1x!tpu.dma_semaphore, #tpu.memory_space<semaphore_mem>>
    %134 = tpu.memref_squeeze %133 : memref<1x!tpu.dma_semaphore, #tpu.memory_space<semaphore_mem>> -> memref<!tpu.dma_semaphore, #tpu.memory_space<semaphore_mem>>
    tpu.wait_dma2 semaphore(%134 : memref<!tpu.dma_semaphore, #tpu.memory_space<semaphore_mem>>) src(%arg18 : memref<1024x896xi8, #tpu.memory_space<any>>) dst(%arg21 : memref<1024x896xi8, #tpu.memory_space<vmem>>)
    %135 = arith.truncf %132 : vector<8x1024xf32> to vector<8x1024xbf16>
    %c0_59 = arith.constant 0 : index
    %c0_60 = arith.constant 0 : index
    %136 = vector.load %arg21[%c0_59, %c0_60] : memref<1024x896xi8, #tpu.memory_space<vmem>>, vector<1024x896xi8>
    %137 = arith.sitofp %136 : vector<1024x896xi8> to vector<1024x896xf32>
    %138 = arith.truncf %137 : vector<1024x896xf32> to vector<1024x896xbf16>
    %cst_61 = arith.constant dense<0.000000e+00> : vector<8x896xf32>
    %139 = tpu.matmul %135, %138, %cst_61 {dimension_numbers = #tpu.dot_dimension_numbers<[1], [0], [0], [1], [0, 0, 1, 1], [], []>} : vector<8x1024xbf16>, vector<1024x896xbf16>, vector<8x896xf32> -> vector<8x896xf32>
    %c0_62 = arith.constant 0 : index
    %c0_63 = arith.constant 0 : index
    %140 = vector.load %arg15[%c0_62, %c0_63] : memref<1x896xf32, #tpu.memory_space<vmem>>, vector<1x896xf32>
    %141 = vector.broadcast %140 : vector<1x896xf32> to vector<8x896xf32>
    %142 = arith.mulf %139, %141 : vector<8x896xf32>
    %c0_64 = arith.constant 0 : index
    %c0_65 = arith.constant 0 : index
    %143 = vector.load %arg16[%c0_64, %c0_65] : memref<1x896xf32, #tpu.memory_space<vmem>>, vector<1x896xf32>
    %144 = vector.broadcast %143 : vector<1x896xf32> to vector<8x896xf32>
    %145 = arith.addf %142, %144 : vector<8x896xf32>
    %146 = math.tanh %145 : vector<8x896xf32>
    %147 = arith.truncf %146 : vector<8x896xf32> to vector<8x896xbf16>
    %c0_66 = arith.constant 0 : index
    %c0_67 = arith.constant 0 : index
    %148 = vector.load %arg19[%c0_66, %c0_67] : memref<8x896xbf16, #tpu.memory_space<vmem>>, vector<8x896xbf16>
    tpu.vector_store %arg19[%c0_66, %c0_67], %147 {strides = array<i32>} : memref<8x896xbf16, #tpu.memory_space<vmem>>, vector<8x896xbf16>,
    return
  }
}

</mosaic_0001>

<llo_original>
// kernel: tpu_custom_call.1
$region0: #{tpu_custom_call.1}
  #allocation0 [shape = 'u32[]', space=smem, size = 0x4, offset = 0x4, fixed_abs, tag = 'smem constant byte address 0x4 - core index']
  #allocation1 [shape = 'u32[144,128]{1,0:T(1,128)}', space=vmem, size = 0x12000, scoped, tag = 'internal scratch']
  #allocation2 [shape = 's8[512,1024]{1,0:T(32,128)(4,1)}', space=vmem, size = 0x80000, scoped, tag = 'scratch operand']
  #allocation3 [shape = 's8[1024,896]{1,0:T(32,128)(4,1)}', space=vmem, size = 0xe0000, scoped, tag = 'scratch operand']
  #allocation4 [shape = 's32[2]{0}', space=sflag, size = 0x8, scoped, tag = 'scratch operand']
  #allocation24 [shape = 's32[]', space=sflag, size = 0x4, offset = 0, fixed_abs, tag = 'sflag constant byte address 0x0 - dummy sync flag']
  #allocation25 [shape = 's32[]', space=sflag, size = 0x4, offset = 0, fixed_abs, tag = 'sflag constant byte address 0x0 - dummy sync flag']
  #allocation26 [shape = 'u32[]', space=smem, size = 0x4, offset = 0x44, fixed_abs, tag = 'smem constant byte address 0x44 - assertion arg 0']
  #allocation27 [shape = 'u32[]', space=smem, size = 0x4, offset = 0x48, fixed_abs, tag = 'smem constant byte address 0x48 - assertion arg 1']
  #allocation28 [shape = 's32[]', space=sflag, size = 0x4, offset = 0, fixed_abs, tag = 'sflag constant byte address 0x0 - dummy sync flag']
  #allocation29 [shape = 's32[]', space=sflag, size = 0x4, offset = 0, fixed_abs, tag = 'sflag constant byte address 0x0 - dummy sync flag']
  %s0 = inlined_call_operand.hbm [shape: bf16[8,896], index: 0, kind: input, shape index: {}]
  %s1 = inlined_call_operand.hbm [shape: s8[896,128], index: 1, kind: input, shape index: {}]
  %s2 = inlined_call_operand.hbm [shape: f32[1,128], index: 2, kind: input, shape index: {}]
  %s3 = inlined_call_operand.hbm [shape: f32[1,128], index: 3, kind: input, shape index: {}]
  %s4 = inlined_call_operand.hbm [shape: s8[128,256], index: 4, kind: input, shape index: {}]
  %s5 = inlined_call_operand.vmem [shape: f32[1,256], index: 5, kind: input, shape index: {}]
  %s6 = inlined_call_operand.hbm [shape: f32[1,256], index: 6, kind: input, shape index: {}]
  %s7 = inlined_call_operand.hbm [shape: f32[1,256], index: 7, kind: input, shape index: {}]
  %s8 = inlined_call_operand.hbm [shape: s8[256,512], index: 8, kind: input, shape index: {}]
  %s9 = inlined_call_operand.hbm [shape: f32[1,512], index: 9, kind: input, shape index: {}]
  %s10 = inlined_call_operand.hbm [shape: f32[1,512], index: 10, kind: input, shape index: {}]
  %s11 = inlined_call_operand.hbm [shape: f32[1,512], index: 11, kind: input, shape index: {}]
  %s12 = inlined_call_operand.vmem [shape: f32[1,1024], index: 12, kind: input, shape index: {}]
  %s13 = inlined_call_operand.vmem [shape: f32[1,1024], index: 13, kind: input, shape index: {}]
  %s14 = inlined_call_operand.vmem [shape: f32[1,1024], index: 14, kind: input, shape index: {}]
  %s15 = inlined_call_operand.vmem [shape: f32[1,896], index: 15, kind: input, shape index: {}]
  %s16 = inlined_call_operand.vmem [shape: f32[1,896], index: 16, kind: input, shape index: {}]
  %s17 = inlined_call_operand.hbm [shape: s8[512,1024], index: 17, kind: input, shape index: {}]
  %s18 = inlined_call_operand.hbm [shape: s8[1024,896], index: 18, kind: input, shape index: {}]
  %s19 = inlined_call_operand.hbm [shape: bf16[8,896], index: 19, kind: output, shape index: {}]
  %s20 = sld [smem:[#allocation0]]
  $region130: #{tpu_custom_call.1} parent=0
    _
  %s22 = ssub.s32 1, %s20
  %s23 = scalar_select 0, %s22, %s20
  $region1: #{tpu_custom_call.1} parent=0
    #allocation5 [shape = 'u8[14336]{0}', space=vmem, size = 0x3800, scoped, tag = 'input window, operand 0, single buffered']
    #allocation6 [shape = 's32[1]{0}', space=sflag, size = 0x4, scoped, tag = 'scoped memory for tpu_custom_call.1']
    #allocation7 [shape = 's32[1]{0}', space=sflag, size = 0x4, scoped, tag = 'scoped memory for tpu_custom_call.1']
    #allocation8 [shape = 'u8[114688]{0}', space=vmem, size = 0x1c000, scoped, tag = 'input window, operand 1, single buffered']
    #allocation9 [shape = 's32[1]{0}', space=sflag, size = 0x4, scoped, tag = 'scoped memory for tpu_custom_call.1']
    #allocation10 [shape = 'u8[512]{0}', space=vmem, size = 0x400, scoped, tag = 'input window, operand 2, single buffered']
    #allocation11 [shape = 'u8[512]{0}', space=vmem, size = 0x400, scoped, tag = 'input window, operand 3, single buffered']
    #allocation12 [shape = 's32[1]{0}', space=sflag, size = 0x4, scoped, tag = 'scoped memory for tpu_custom_call.1']
    #allocation13 [shape = 'u8[32768]{0}', space=vmem, size = 0x8000, scoped, tag = 'input window, operand 4, single buffered']
    #allocation14 [shape = 'u8[1024]{0}', space=vmem, size = 0x400, scoped, tag = 'input window, operand 6, single buffered']
    #allocation15 [shape = 's32[1]{0}', space=sflag, size = 0x4, scoped, tag = 'scoped memory for tpu_custom_call.1']
    #allocation16 [shape = 'u8[1024]{0}', space=vmem, size = 0x400, scoped, tag = 'input window, operand 7, single buffered']
    #allocation17 [shape = 'u8[131072]{0}', space=vmem, size = 0x20000, scoped, tag = 'input window, operand 8, single buffered']
    #allocation18 [shape = 's32[1]{0}', space=sflag, size = 0x4, scoped, tag = 'scoped memory for tpu_custom_call.1']
    #allocation19 [shape = 'u8[2048]{0}', space=vmem, size = 0x800, scoped, tag = 'input window, operand 9, single buffered']
    #allocation20 [shape = 'u8[2048]{0}', space=vmem, size = 0x800, scoped, tag = 'input window, operand 10, single buffered']
    #allocation21 [shape = 's32[1]{0}', space=sflag, size = 0x4, scoped, tag = 'scoped memory for tpu_custom_call.1']
    #allocation22 [shape = 'u8[2048]{0}', space=vmem, size = 0x800, scoped, tag = 'input window, operand 11, single buffered']
    #allocation23 [shape = 'u8[14336]{0}', space=vmem, size = 0x3800, scoped, tag = 'output window, operand 0, single buffered']
    %24 = vsyncpa [#allocation6], 0
    %25 = vsyncpa [#allocation9], 0
    %26 = vsyncpa [#allocation12], 0
    %27 = vsyncpa [#allocation15], 0
    %28 = vsyncpa [#allocation18], 0
    %29 = vsyncpa [#allocation21], 0
    %30 = vsyncpa [#allocation7], 0
    // Predicated region
    $region2: #{tpu_custom_call.1} parent=1 // pred_check
      _
    $region3: #{tpu_custom_call.1} parent=1 // pred_check_branch
      %32 = sbr.rel (0) target = $region5
    $region4: #{tpu_custom_call.1} parent=1 // pred_region
      %s34 = ssub.s32 448, 448
      %35 = vsyncadd [#allocation6], %s34
      %s37 = sshll.u32 [#allocation5], 4
      %s38 = int_to_ptr.vmem [resolvable:$true] %s37
      %40 = dma.hbm_to_vmem [thread:$0]  %s0, 448, %s38, [#allocation6]
    $region5: #{tpu_custom_call.1} parent=1 // pred_fallthru
      _
    // Predicated region
    $region6: #{tpu_custom_call.1} parent=1 // pred_check
      _
    $region7: #{tpu_custom_call.1} parent=1 // pred_check_branch
      %42 = sbr.rel (0) target = $region9
    $region8: #{tpu_custom_call.1} parent=1 // pred_region
      %s44 = ssub.s32 3584, 3584
      %45 = vsyncadd [#allocation9], %s44
      %s46 = sshll.u32 [#allocation8], 4
      %s47 = int_to_ptr.vmem [resolvable:$true] %s46
      %52 = dma.hbm_to_vmem [thread:$0]  %s1, 3584, %s47, [#allocation9], 128, 128, 8
    $region9: #{tpu_custom_call.1} parent=1 // pred_fallthru
      _
    // Predicated region
    $region10: #{tpu_custom_call.1} parent=1 // pred_check
      _
    $region11: #{tpu_custom_call.1} parent=1 // pred_check_branch
      %54 = sbr.rel (0) target = $region13
    $region12: #{tpu_custom_call.1} parent=1 // pred_region
      %s56 = ssub.s32 16, 16
      %57 = vsyncadd [#allocation9], %s56
      %s59 = sshll.u32 [#allocation10], 4
      %s60 = int_to_ptr.vmem [resolvable:$true] %s59
      %62 = dma.hbm_to_vmem [thread:$0]  %s2, 16, %s60, [#allocation9]
    $region13: #{tpu_custom_call.1} parent=1 // pred_fallthru
      _
    // Predicated region
    $region14: #{tpu_custom_call.1} parent=1 // pred_check
      _
    $region15: #{tpu_custom_call.1} parent=1 // pred_check_branch
      %64 = sbr.rel (0) target = $region17
    $region16: #{tpu_custom_call.1} parent=1 // pred_region
      %s66 = ssub.s32 16, 16
      %67 = vsyncadd [#allocation12], %s66
      %s69 = sshll.u32 [#allocation11], 4
      %s70 = int_to_ptr.vmem [resolvable:$true] %s69
      %72 = dma.hbm_to_vmem [thread:$0]  %s3, 16, %s70, [#allocation12]
    $region17: #{tpu_custom_call.1} parent=1 // pred_fallthru
      _
    // Predicated region
    $region18: #{tpu_custom_call.1} parent=1 // pred_check
      _
    $region19: #{tpu_custom_call.1} parent=1 // pred_check_branch
      %74 = sbr.rel (0) target = $region21
    $region20: #{tpu_custom_call.1} parent=1 // pred_region
      %s76 = ssub.s32 1024, 1024
      %77 = vsyncadd [#allocation12], %s76
      %s78 = sshll.u32 [#allocation13], 4
      %s79 = int_to_ptr.vmem [resolvable:$true] %s78
      %84 = dma.hbm_to_vmem [thread:$0]  %s4, 1024, %s79, [#allocation12], 256, 256, 16
    $region21: #{tpu_custom_call.1} parent=1 // pred_fallthru
      _
    // Predicated region
    $region22: #{tpu_custom_call.1} parent=1 // pred_check
      _
    $region23: #{tpu_custom_call.1} parent=1 // pred_check_branch
      %86 = sbr.rel (0) target = $region25
    $region24: #{tpu_custom_call.1} parent=1 // pred_region
      _
    $region25: #{tpu_custom_call.1} parent=1 // pred_fallthru
      _
    // Predicated region
    $region26: #{tpu_custom_call.1} parent=1 // pred_check
      _
    $region27: #{tpu_custom_call.1} parent=1 // pred_check_branch
      %88 = sbr.rel (0) target = $region29
    $region28: #{tpu_custom_call.1} parent=1 // pred_region
      %s90 = ssub.s32 32, 32
      %91 = vsyncadd [#allocation15], %s90
      %s93 = sshll.u32 [#allocation14], 4
      %s94 = int_to_ptr.vmem [resolvable:$true] %s93
      %96 = dma.hbm_to_vmem [thread:$0]  %s6, 32, %s94, [#allocation15]
    $region29: #{tpu_custom_call.1} parent=1 // pred_fallthru
      _
    // Predicated region
    $region30: #{tpu_custom_call.1} parent=1 // pred_check
      _
    $region31: #{tpu_custom_call.1} parent=1 // pred_check_branch
      %98 = sbr.rel (0) target = $region33
    $region32: #{tpu_custom_call.1} parent=1 // pred_region
      %s100 = ssub.s32 32, 32
      %101 = vsyncadd [#allocation15], %s100
      %s103 = sshll.u32 [#allocation16], 4
      %s104 = int_to_ptr.vmem [resolvable:$true] %s103
      %106 = dma.hbm_to_vmem [thread:$0]  %s7, 32, %s104, [#allocation15]
    $region33: #{tpu_custom_call.1} parent=1 // pred_fallthru
      _
    // Predicated region
    $region34: #{tpu_custom_call.1} parent=1 // pred_check
      _
    $region35: #{tpu_custom_call.1} parent=1 // pred_check_branch
      %108 = sbr.rel (0) target = $region37
    $region36: #{tpu_custom_call.1} parent=1 // pred_region
      %s110 = ssub.s32 4096, 4096
      %111 = vsyncadd [#allocation18], %s110
      %s112 = sshll.u32 [#allocation17], 4
      %s113 = int_to_ptr.vmem [resolvable:$true] %s112
      %118 = dma.hbm_to_vmem [thread:$0]  %s8, 4096, %s113, [#allocation18], 512, 512, 32
    $region37: #{tpu_custom_call.1} parent=1 // pred_fallthru
      _
    // Predicated region
    $region38: #{tpu_custom_call.1} parent=1 // pred_check
      _
    $region39: #{tpu_custom_call.1} parent=1 // pred_check_branch
      %120 = sbr.rel (0) target = $region41
    $region40: #{tpu_custom_call.1} parent=1 // pred_region
      %s122 = ssub.s32 64, 64
      %123 = vsyncadd [#allocation18], %s122
      %s125 = sshll.u32 [#allocation19], 4
      %s126 = int_to_ptr.vmem [resolvable:$true] %s125
      %128 = dma.hbm_to_vmem [thread:$0]  %s9, 64, %s126, [#allocation18]
    $region41: #{tpu_custom_call.1} parent=1 // pred_fallthru
      _
    // Predicated region
    $region42: #{tpu_custom_call.1} parent=1 // pred_check
      _
    $region43: #{tpu_custom_call.1} parent=1 // pred_check_branch
      %130 = sbr.rel (0) target = $region45
    $region44: #{tpu_custom_call.1} parent=1 // pred_region
      %s132 = ssub.s32 64, 64
      %133 = vsyncadd [#allocation21], %s132
      %s135 = sshll.u32 [#allocation20], 4
      %s136 = int_to_ptr.vmem [resolvable:$true] %s135
      %138 = dma.hbm_to_vmem [thread:$0]  %s10, 64, %s136, [#allocation21]
    $region45: #{tpu_custom_call.1} parent=1 // pred_fallthru
      _
    // Predicated region
    $region46: #{tpu_custom_call.1} parent=1 // pred_check
      _
    $region47: #{tpu_custom_call.1} parent=1 // pred_check_branch
      %140 = sbr.rel (0) target = $region49
    $region48: #{tpu_custom_call.1} parent=1 // pred_region
      %s142 = ssub.s32 64, 64
      %143 = vsyncadd [#allocation21], %s142
      %s145 = sshll.u32 [#allocation22], 4
      %s146 = int_to_ptr.vmem [resolvable:$true] %s145
      %148 = dma.hbm_to_vmem [thread:$0]  %s11, 64, %s146, [#allocation21]
    $region49: #{tpu_custom_call.1} parent=1 // pred_fallthru
      _
    // Predicated region
    $region50: #{tpu_custom_call.1} parent=1 // pred_check
      _
    $region51: #{tpu_custom_call.1} parent=1 // pred_check_branch
      %150 = sbr.rel (0) target = $region53
    $region52: #{tpu_custom_call.1} parent=1 // pred_region
      _
    $region53: #{tpu_custom_call.1} parent=1 // pred_fallthru
      _
    // Predicated region
    $region54: #{tpu_custom_call.1} parent=1 // pred_check
      _
    $region55: #{tpu_custom_call.1} parent=1 // pred_check_branch
      %152 = sbr.rel (0) target = $region57
    $region56: #{tpu_custom_call.1} parent=1 // pred_region
      _
    $region57: #{tpu_custom_call.1} parent=1 // pred_fallthru
      _
    // Predicated region
    $region58: #{tpu_custom_call.1} parent=1 // pred_check
      _
    $region59: #{tpu_custom_call.1} parent=1 // pred_check_branch
      %154 = sbr.rel (0) target = $region61
    $region60: #{tpu_custom_call.1} parent=1 // pred_region
      _
    $region61: #{tpu_custom_call.1} parent=1 // pred_fallthru
      _
    // Predicated region
    $region62: #{tpu_custom_call.1} parent=1 // pred_check
      _
    $region63: #{tpu_custom_call.1} parent=1 // pred_check_branch
      %156 = sbr.rel (0) target = $region65
    $region64: #{tpu_custom_call.1} parent=1 // pred_region
      _
    $region65: #{tpu_custom_call.1} parent=1 // pred_fallthru
      _
    // Predicated region
    $region66: #{tpu_custom_call.1} parent=1 // pred_check
      _
    $region67: #{tpu_custom_call.1} parent=1 // pred_check_branch
      %158 = sbr.rel (0) target = $region69
    $region68: #{tpu_custom_call.1} parent=1 // pred_region
      _
    $region69: #{tpu_custom_call.1} parent=1 // pred_fallthru
      _
    // Predicated region
    $region70: #{tpu_custom_call.1} parent=1 // pred_check
      _
    $region71: #{tpu_custom_call.1} parent=1 // pred_check_branch
      %160 = sbr.rel (0) target = $region73
    $region72: #{tpu_custom_call.1} parent=1 // pred_region
      %161 = dma.done [#allocation6], 448
    $region73: #{tpu_custom_call.1} parent=1 // pred_fallthru
      _
    // Predicated region
    $region74: #{tpu_custom_call.1} parent=1 // pred_check
      _
    $region75: #{tpu_custom_call.1} parent=1 // pred_check_branch
      %163 = sbr.rel (0) target = $region77
    $region76: #{tpu_custom_call.1} parent=1 // pred_region
      %164 = dma.done [#allocation9], 3584
    $region77: #{tpu_custom_call.1} parent=1 // pred_fallthru
      _
    // Predicated region
    $region78: #{tpu_custom_call.1} parent=1 // pred_check
      _
    $region79: #{tpu_custom_call.1} parent=1 // pred_check_branch
      %166 = sbr.rel (0) target = $region81
    $region80: #{tpu_custom_call.1} parent=1 // pred_region
      %167 = dma.done [#allocation9], 16
    $region81: #{tpu_custom_call.1} parent=1 // pred_fallthru
      _
    // Predicated region
    $region82: #{tpu_custom_call.1} parent=1 // pred_check
      _
    $region83: #{tpu_custom_call.1} parent=1 // pred_check_branch
      %169 = sbr.rel (0) target = $region85
    $region84: #{tpu_custom_call.1} parent=1 // pred_region
      %170 = dma.done [#allocation12], 16
    $region85: #{tpu_custom_call.1} parent=1 // pred_fallthru
      _
    // Predicated region
    $region86: #{tpu_custom_call.1} parent=1 // pred_check
      _
    $region87: #{tpu_custom_call.1} parent=1 // pred_check_branch
      %172 = sbr.rel (0) target = $region89
    $region88: #{tpu_custom_call.1} parent=1 // pred_region
      %173 = dma.done [#allocation12], 1024
    $region89: #{tpu_custom_call.1} parent=1 // pred_fallthru
      _
    // Predicated region
    $region90: #{tpu_custom_call.1} parent=1 // pred_check
      _
    $region91: #{tpu_custom_call.1} parent=1 // pred_check_branch
      %175 = sbr.rel (0) target = $region93
    $region92: #{tpu_custom_call.1} parent=1 // pred_region
      %176 = dma.done [#allocation15], 32
    $region93: #{tpu_custom_call.1} parent=1 // pred_fallthru
      _
    // Predicated region
    $region94: #{tpu_custom_call.1} parent=1 // pred_check
      _
    $region95: #{tpu_custom_call.1} parent=1 // pred_check_branch
      %178 = sbr.rel (0) target = $region97
    $region96: #{tpu_custom_call.1} parent=1 // pred_region
      %179 = dma.done [#allocation15], 32
    $region97: #{tpu_custom_call.1} parent=1 // pred_fallthru
      _
    // Predicated region
    $region98: #{tpu_custom_call.1} parent=1 // pred_check
      _
    $region99: #{tpu_custom_call.1} parent=1 // pred_check_branch
      %181 = sbr.rel (0) target = $region101
    $region100: #{tpu_custom_call.1} parent=1 // pred_region
      %182 = dma.done [#allocation18], 4096
    $region101: #{tpu_custom_call.1} parent=1 // pred_fallthru
      _
    // Predicated region
    $region102: #{tpu_custom_call.1} parent=1 // pred_check
      _
    $region103: #{tpu_custom_call.1} parent=1 // pred_check_branch
      %184 = sbr.rel (0) target = $region105
    $region104: #{tpu_custom_call.1} parent=1 // pred_region
      %185 = dma.done [#allocation18], 64
    $region105: #{tpu_custom_call.1} parent=1 // pred_fallthru
      _
    // Predicated region
    $region106: #{tpu_custom_call.1} parent=1 // pred_check
      _
    $region107: #{tpu_custom_call.1} parent=1 // pred_check_branch
      %187 = sbr.rel (0) target = $region109
    $region108: #{tpu_custom_call.1} parent=1 // pred_region
      %188 = dma.done [#allocation21], 64
    $region109: #{tpu_custom_call.1} parent=1 // pred_fallthru
      _
    // Predicated region
    $region110: #{tpu_custom_call.1} parent=1 // pred_check
      _
    $region111: #{tpu_custom_call.1} parent=1 // pred_check_branch
      %190 = sbr.rel (0) target = $region113
    $region112: #{tpu_custom_call.1} parent=1 // pred_region
      %191 = dma.done [#allocation21], 64
    $region113: #{tpu_custom_call.1} parent=1 // pred_fallthru
      _
    // Predicated region
    $region114: #{tpu_custom_call.1} parent=1 // pred_check
      _
    $region115: #{tpu_custom_call.1} parent=1 // pred_check_branch
      %194 = sbr.rel target = $region117
    $region116: #{tpu_custom_call.1} parent=1 // pred_region
      %195 = sst [smem:[#allocation26]] [#allocation25]
      %196 = sst [smem:[#allocation27]] [#allocation24]
    $region117: #{tpu_custom_call.1} parent=1 // pred_fallthru
      _
    %198 = shalt.err (0)
    %s200 = sshll.u32 [#allocation2], 4
    %s201 = int_to_ptr.vmem [resolvable:$true] %s200
    %203 = dma.hbm_to_vmem [thread:$0]  %s17, 16384, %s201, [#allocation4]
    %s204 = scalar_lea.sflag [#allocation4], 1
    // Predicated region
    $region118: #{tpu_custom_call.1} parent=1 // pred_check
      _
    $region119: #{tpu_custom_call.1} parent=1 // pred_check_branch
      %206 = sbr.rel target = $region121
    $region120: #{tpu_custom_call.1} parent=1 // pred_region
      %207 = sst [smem:[#allocation26]] [#allocation29]
      %208 = sst [smem:[#allocation27]] [#allocation28]
    $region121: #{tpu_custom_call.1} parent=1 // pred_fallthru
      _
    %210 = shalt.err (0)
    %s212 = sshll.u32 [#allocation3], 4
    %s213 = int_to_ptr.vmem [resolvable:$true] %s212
    %215 = dma.hbm_to_vmem [thread:$0]  %s18, 28672, %s213, %s204
    %v216 = vld [vmem:[#allocation5] sm:$0xff]
    %v217 = vld [vmem:[#allocation5 + $0x8] sm:$0xff]
    %v218 = vld [vmem:[#allocation5 + $0x10] sm:$0xff]
    %v219 = vld [vmem:[#allocation5 + $0x18] sm:$0xf]
    %v220 = vld [vmem:[#allocation8] sm:$0xff]
    %v221 = vld [vmem:[#allocation8 + $0x8] sm:$0xff]
    %v222 = vld [vmem:[#allocation8 + $0x10] sm:$0xff]
    %v223 = vld [vmem:[#allocation8 + $0x18] sm:$0xff]
    %v224 = vld [vmem:[#allocation8 + $0x20] sm:$0xff]
    %v225 = vld [vmem:[#allocation8 + $0x28] sm:$0xff]
    %v226 = vld [vmem:[#allocation8 + $0x30] sm:$0xff]
    %v227 = vld [vmem:[#allocation8 + $0x38] sm:$0xff]
    %v228 = vld [vmem:[#allocation8 + $0x40] sm:$0xff]
    %v229 = vld [vmem:[#allocation8 + $0x48] sm:$0xff]
    %v230 = vld [vmem:[#allocation8 + $0x50] sm:$0xff]
    %v231 = vld [vmem:[#allocation8 + $0x58] sm:$0xff]
    %v232 = vld [vmem:[#allocation8 + $0x60] sm:$0xff]
    %v233 = vld [vmem:[#allocation8 + $0x68] sm:$0xff]
    %v234 = vld [vmem:[#allocation8 + $0x70] sm:$0xff]
    %v235 = vld [vmem:[#allocation8 + $0x78] sm:$0xff]
    %v236 = vld [vmem:[#allocation8 + $0x80] sm:$0xff]
    %v237 = vld [vmem:[#allocation8 + $0x88] sm:$0xff]
    %v238 = vld [vmem:[#allocation8 + $0x90] sm:$0xff]
    %v239 = vld [vmem:[#allocation8 + $0x98] sm:$0xff]
    %v240 = vld [vmem:[#allocation8 + $0xa0] sm:$0xff]
    %v241 = vld [vmem:[#allocation8 + $0xa8] sm:$0xff]
    %v242 = vld [vmem:[#allocation8 + $0xb0] sm:$0xff]
    %v243 = vld [vmem:[#allocation8 + $0xb8] sm:$0xff]
    %v244 = vld [vmem:[#allocation8 + $0xc0] sm:$0xff]
    %v245 = vld [vmem:[#allocation8 + $0xc8] sm:$0xff]
    %v246 = vld [vmem:[#allocation8 + $0xd0] sm:$0xff]
    %v247 = vld [vmem:[#allocation8 + $0xd8] sm:$0xff]
    %v248 = vunpack.c.l.s8.bf16 %v220
    %v249 = vunpack.c.h.s8.bf16 %v220
    %v250 = vunpack.c.l.s8.bf16 %v221
    %v251 = vunpack.c.h.s8.bf16 %v221
    %v252 = vunpack.c.l.s8.bf16 %v222
    %v253 = vunpack.c.h.s8.bf16 %v222
    %v254 = vunpack.c.l.s8.bf16 %v223
    %v255 = vunpack.c.h.s8.bf16 %v223
    %v256 = vunpack.c.l.s8.bf16 %v224
    %v257 = vunpack.c.h.s8.bf16 %v224
    %v258 = vunpack.c.l.s8.bf16 %v225
    %v259 = vunpack.c.h.s8.bf16 %v225
    %v260 = vunpack.c.l.s8.bf16 %v226
    %v261 = vunpack.c.h.s8.bf16 %v226
    %v262 = vunpack.c.l.s8.bf16 %v227
    %v263 = vunpack.c.h.s8.bf16 %v227
    %v264 = vunpack.c.l.s8.bf16 %v228
    %v265 = vunpack.c.h.s8.bf16 %v228
    %v266 = vunpack.c.l.s8.bf16 %v229
    %v267 = vunpack.c.h.s8.bf16 %v229
    %v268 = vunpack.c.l.s8.bf16 %v230
    %v269 = vunpack.c.h.s8.bf16 %v230
    %v270 = vunpack.c.l.s8.bf16 %v231
    %v271 = vunpack.c.h.s8.bf16 %v231
    %v272 = vunpack.c.l.s8.bf16 %v232
    %v273 = vunpack.c.h.s8.bf16 %v232
    %v274 = vunpack.c.l.s8.bf16 %v233
    %v275 = vunpack.c.h.s8.bf16 %v233
    %v276 = vunpack.c.l.s8.bf16 %v234
    %v277 = vunpack.c.h.s8.bf16 %v234
    %v278 = vunpack.c.l.s8.bf16 %v235
    %v279 = vunpack.c.h.s8.bf16 %v235
    %v280 = vunpack.c.l.s8.bf16 %v236
    %v281 = vunpack.c.h.s8.bf16 %v236
    %v282 = vunpack.c.l.s8.bf16 %v237
    %v283 = vunpack.c.h.s8.bf16 %v237
    %v284 = vunpack.c.l.s8.bf16 %v238
    %v285 = vunpack.c.h.s8.bf16 %v238
    %v286 = vunpack.c.l.s8.bf16 %v239
    %v287 = vunpack.c.h.s8.bf16 %v239
    %v288 = vunpack.c.l.s8.bf16 %v240
    %v289 = vunpack.c.h.s8.bf16 %v240
    %v290 = vunpack.c.l.s8.bf16 %v241
    %v291 = vunpack.c.h.s8.bf16 %v241
    %v292 = vunpack.c.l.s8.bf16 %v242
    %v293 = vunpack.c.h.s8.bf16 %v242
    %v294 = vunpack.c.l.s8.bf16 %v243
    %v295 = vunpack.c.h.s8.bf16 %v243
    %v296 = vunpack.c.l.s8.bf16 %v244
    %v297 = vunpack.c.h.s8.bf16 %v244
    %v298 = vunpack.c.l.s8.bf16 %v245
    %v299 = vunpack.c.h.s8.bf16 %v245
    %v300 = vunpack.c.l.s8.bf16 %v246
    %v301 = vunpack.c.h.s8.bf16 %v246
    %v302 = vunpack.c.l.s8.bf16 %v247
    %v303 = vunpack.c.h.s8.bf16 %v247
    %v308 = vunpack.c.l.b16 %v216
    %v309 = vunpack.c.h.b16 %v216
    %v310 = vunpack.c.l.b16 %v217
    %v311 = vunpack.c.h.b16 %v217
    %v312 = vunpack.c.l.b16 %v218
    %v313 = vunpack.c.h.b16 %v218
    %v314 = vunpack.c.l.b16 %v219
    %v315 = vpack.c.b16 %v308, %v308
    %v316 = vpack.c.b16 %v309, %v309
    %v317 = vpack.c.b16 %v310, %v310
    %v318 = vpack.c.b16 %v311, %v311
    %v319 = vpack.c.b16 %v312, %v312
    %v320 = vpack.c.b16 %v313, %v313
    %v321 = vpack.c.b16 %v314, %v314
    %329 = vmatprep.subr.bf16.mxu0 0
    %330 = vmatpush1.bf16.msra.mxu0 %v248
    %331 = vmatprep.subr.bf16.mxu0 0
    %332 = vmatpush1.bf16.msra.mxu0 %v249
    %333 = vmatprep.subr.bf16.mxu0 0
    %334 = vmatpush1.bf16.msra.mxu0 %v250
    %335 = vmatprep.subr.bf16.mxu0 0
    %336 = vmatpush1.bf16.msra.mxu0 %v251
    %337 = vmatprep.subr.bf16.mxu0 0
    %338 = vmatpush1.bf16.msra.mxu0 %v252
    %339 = vmatprep.subr.bf16.mxu0 0
    %340 = vmatpush1.bf16.msra.mxu0 %v253
    %341 = vmatprep.subr.bf16.mxu0 0
    %342 = vmatpush1.bf16.msra.mxu0 %v254
    %343 = vmatprep.subr.bf16.mxu0 0
    %344 = vmatpush1.bf16.msra.mxu0 %v255
    %345 = vmatprep.subr.bf16.mxu0 0
    %346 = vmatpush1.bf16.msra.mxu0 %v256
    %347 = vmatprep.subr.bf16.mxu0 0
    %348 = vmatpush1.bf16.msra.mxu0 %v257
    %349 = vmatprep.subr.bf16.mxu0 0
    %350 = vmatpush1.bf16.msra.mxu0 %v258
    %351 = vmatprep.subr.bf16.mxu0 0
    %352 = vmatpush1.bf16.msra.mxu0 %v259
    %353 = vmatprep.subr.bf16.mxu0 0
    %354 = vmatpush1.bf16.msra.mxu0 %v260
    %355 = vmatprep.subr.bf16.mxu0 0
    %356 = vmatpush1.bf16.msra.mxu0 %v261
    %357 = vmatprep.subr.bf16.mxu0 0
    %358 = vmatpush1.bf16.msra.mxu0 %v262
    %359 = vmatprep.subr.bf16.mxu0 0
    %360 = vmatpush1.bf16.msra.mxu0 %v263
    %361 = vmatprep.mubr.bf16.mxu0 %v316
    %362 = vmatmul.mubr.bf16.gmra.mrb[0].mxu0 %v315
    %v363 = vpop.f32.mrb[0].mxu0
    %v364 = vadd.f32 0.0, %v363
    %v365 = vpop.f32.mrb[0].mxu0
    %v366 = vpop.f32.mrb[0].mxu0
    %v367 = vpop.f32.mrb[0].mxu0
    %368 = vdwg.mxu0
    %369 = vmatprep.subr.bf16.mxu0 0
    %370 = vmatpush1.bf16.msra.mxu0 %v264
    %371 = vmatprep.subr.bf16.mxu0 0
    %372 = vmatpush1.bf16.msra.mxu0 %v265
    %373 = vmatprep.subr.bf16.mxu0 0
    %374 = vmatpush1.bf16.msra.mxu0 %v266
    %375 = vmatprep.subr.bf16.mxu0 0
    %376 = vmatpush1.bf16.msra.mxu0 %v267
    %377 = vmatprep.subr.bf16.mxu0 0
    %378 = vmatpush1.bf16.msra.mxu0 %v268
    %379 = vmatprep.subr.bf16.mxu0 0
    %380 = vmatpush1.bf16.msra.mxu0 %v269
    %381 = vmatprep.subr.bf16.mxu0 0
    %382 = vmatpush1.bf16.msra.mxu0 %v270
    %383 = vmatprep.subr.bf16.mxu0 0
    %384 = vmatpush1.bf16.msra.mxu0 %v271
    %385 = vmatprep.subr.bf16.mxu0 0
    %386 = vmatpush1.bf16.msra.mxu0 %v272
    %387 = vmatprep.subr.bf16.mxu0 0
    %388 = vmatpush1.bf16.msra.mxu0 %v273
    %389 = vmatprep.subr.bf16.mxu0 0
    %390 = vmatpush1.bf16.msra.mxu0 %v274
    %391 = vmatprep.subr.bf16.mxu0 0
    %392 = vmatpush1.bf16.msra.mxu0 %v275
    %393 = vmatprep.subr.bf16.mxu0 0
    %394 = vmatpush1.bf16.msra.mxu0 %v276
    %395 = vmatprep.subr.bf16.mxu0 0
    %396 = vmatpush1.bf16.msra.mxu0 %v277
    %397 = vmatprep.subr.bf16.mxu0 0
    %398 = vmatpush1.bf16.msra.mxu0 %v278
    %399 = vmatprep.subr.bf16.mxu0 0
    %400 = vmatpush1.bf16.msra.mxu0 %v279
    %401 = vmatprep.mubr.bf16.mxu0 %v318
    %402 = vmatmul.mubr.bf16.gmra.mrb[0].mxu0 %v317
    %v403 = vpop.f32.mrb[0].mxu0
    %v404 = vadd.f32 %v364, %v403
    %v405 = vpop.f32.mrb[0].mxu0
    %v406 = vpop.f32.mrb[0].mxu0
    %v407 = vpop.f32.mrb[0].mxu0
    %408 = vdwg.mxu0
    %409 = vmatprep.subr.bf16.mxu0 0
    %410 = vmatpush1.bf16.msra.mxu0 %v280
    %411 = vmatprep.subr.bf16.mxu0 0
    %412 = vmatpush1.bf16.msra.mxu0 %v281
    %413 = vmatprep.subr.bf16.mxu0 0
    %414 = vmatpush1.bf16.msra.mxu0 %v282
    %415 = vmatprep.subr.bf16.mxu0 0
    %416 = vmatpush1.bf16.msra.mxu0 %v283
    %417 = vmatprep.subr.bf16.mxu0 0
    %418 = vmatpush1.bf16.msra.mxu0 %v284
    %419 = vmatprep.subr.bf16.mxu0 0
    %420 = vmatpush1.bf16.msra.mxu0 %v285
    %421 = vmatprep.subr.bf16.mxu0 0
    %422 = vmatpush1.bf16.msra.mxu0 %v286
    %423 = vmatprep.subr.bf16.mxu0 0
    %424 = vmatpush1.bf16.msra.mxu0 %v287
    %425 = vmatprep.subr.bf16.mxu0 0
    %426 = vmatpush1.bf16.msra.mxu0 %v288
    %427 = vmatprep.subr.bf16.mxu0 0
    %428 = vmatpush1.bf16.msra.mxu0 %v289
    %429 = vmatprep.subr.bf16.mxu0 0
    %430 = vmatpush1.bf16.msra.mxu0 %v290
    %431 = vmatprep.subr.bf16.mxu0 0
    %432 = vmatpush1.bf16.msra.mxu0 %v291
    %433 = vmatprep.subr.bf16.mxu0 0
    %434 = vmatpush1.bf16.msra.mxu0 %v292
    %435 = vmatprep.subr.bf16.mxu0 0
    %436 = vmatpush1.bf16.msra.mxu0 %v293
    %437 = vmatprep.subr.bf16.mxu0 0
    %438 = vmatpush1.bf16.msra.mxu0 %v294
    %439 = vmatprep.subr.bf16.mxu0 0
    %440 = vmatpush1.bf16.msra.mxu0 %v295
    %441 = vmatprep.mubr.bf16.mxu0 %v320
    %442 = vmatmul.mubr.bf16.gmra.mrb[0].mxu0 %v319
    %v443 = vpop.f32.mrb[0].mxu0
    %v444 = vadd.f32 %v404, %v443
    %v445 = vpop.f32.mrb[0].mxu0
    %v446 = vpop.f32.mrb[0].mxu0
    %v447 = vpop.f32.mrb[0].mxu0
    %448 = vdwg.mxu0
    %449 = vmatprep.subr.bf16.mxu0 0
    %450 = vmatpush1.bf16.msra.mxu0 %v296
    %451 = vmatprep.subr.bf16.mxu0 0
    %452 = vmatpush1.bf16.msra.mxu0 %v297
    %453 = vmatprep.subr.bf16.mxu0 0
    %454 = vmatpush1.bf16.msra.mxu0 %v298
    %455 = vmatprep.subr.bf16.mxu0 0
    %456 = vmatpush1.bf16.msra.mxu0 %v299
    %457 = vmatprep.subr.bf16.mxu0 0
    %458 = vmatpush1.bf16.msra.mxu0 %v300
    %459 = vmatprep.subr.bf16.mxu0 0
    %460 = vmatpush1.bf16.msra.mxu0 %v301
    %461 = vmatprep.subr.bf16.mxu0 0
    %462 = vmatpush1.bf16.msra.mxu0 %v302
    %463 = vmatprep.subr.bf16.mxu0 0
    %464 = vmatpush1.bf16.msra.mxu0 %v303
    %465 = vmatprep.subr.bf16.mxu0 0
    %466 = vmatpush1.bf16.msra.mxu0 0
    %467 = vmatprep.subr.bf16.mxu0 0
    %468 = vmatpush1.bf16.msra.mxu0 0
    %469 = vmatprep.subr.bf16.mxu0 0
    %470 = vmatpush1.bf16.msra.mxu0 0
    %471 = vmatprep.subr.bf16.mxu0 0
    %472 = vmatpush1.bf16.msra.mxu0 0
    %473 = vmatprep.subr.bf16.mxu0 0
    %474 = vmatpush1.bf16.msra.mxu0 0
    %475 = vmatprep.subr.bf16.mxu0 0
    %476 = vmatpush1.bf16.msra.mxu0 0
    %477 = vmatprep.subr.bf16.mxu0 0
    %478 = vmatpush1.bf16.msra.mxu0 0
    %479 = vmatprep.subr.bf16.mxu0 0
    %480 = vmatpush1.bf16.msra.mxu0 0
    %481 = vmatprep.mubr.bf16.mxu0 0
    %482 = vmatmul.mubr.bf16.gmra.mrb[0].mxu0 %v321
    %v483 = vpop.f32.mrb[0].mxu0
    %v484 = vadd.f32 %v444, %v483
    %v485 = vpop.f32.mrb[0].mxu0
    %v486 = vpop.f32.mrb[0].mxu0
    %v487 = vpop.f32.mrb[0].mxu0
    %488 = vdwg.mxu0
    %v489 = vld [vmem:[#allocation10] sm:$0x1]
    %v491 = vlaneseq
    %v492 = vshrl.u32 %v491, 7
    %v493 = vsub.s32 0, %v492
    %v494 = vrot.slane %v489, %v493
    %v496 = vmul.f32 %v484, %v494
    %v497 = vld [vmem:[#allocation11] sm:$0x1]
    %v499 = vlaneseq
    %v500 = vshrl.u32 %v499, 7
    %v501 = vsub.s32 0, %v500
    %v502 = vrot.slane %v497, %v501
    %v504 = vadd.f32 %v496, %v502
    %vm505 = vcmp.gt.f32.partialorder %v504, 0.0
    %v506 = vmul.f32 %v504, 0.2
    %v507 = vsel %vm505, %v504, %v506
    %v508 = vld [vmem:[#allocation13] sm:$0xff]
    %v509 = vld [vmem:[#allocation13 + $0x8] sm:$0xff]
    %v510 = vld [vmem:[#allocation13 + $0x10] sm:$0xff]
    %v511 = vld [vmem:[#allocation13 + $0x18] sm:$0xff]
    %v512 = vld [vmem:[#allocation13 + $0x20] sm:$0xff]
    %v513 = vld [vmem:[#allocation13 + $0x28] sm:$0xff]
    %v514 = vld [vmem:[#allocation13 + $0x30] sm:$0xff]
    %v515 = vld [vmem:[#allocation13 + $0x38] sm:$0xff]
    %v516 = vld [vmem:[%s5] sm:$0x3]
    %v517 = vld [vmem:[#allocation14] sm:$0x3]
    %v518 = vld [vmem:[#allocation16] sm:$0x3]
    %v519 = vpack.c.bf16 %v507, %v507
    %v520 = vunpack.c.l.s8.bf16 %v508
    %v521 = vunpack.c.l.s8.bf16 %v509
    %v522 = vunpack.c.h.s8.bf16 %v508
    %v523 = vunpack.c.h.s8.bf16 %v509
    %v524 = vunpack.c.l.s8.bf16 %v510
    %v525 = vunpack.c.l.s8.bf16 %v511
    %v526 = vunpack.c.h.s8.bf16 %v510
    %v527 = vunpack.c.h.s8.bf16 %v511
    %v528 = vunpack.c.l.s8.bf16 %v512
    %v529 = vunpack.c.l.s8.bf16 %v513
    %v530 = vunpack.c.h.s8.bf16 %v512
    %v531 = vunpack.c.h.s8.bf16 %v513
    %v532 = vunpack.c.l.s8.bf16 %v514
    %v533 = vunpack.c.l.s8.bf16 %v515
    %v534 = vunpack.c.h.s8.bf16 %v514
    %v535 = vunpack.c.h.s8.bf16 %v515
    %536 = vmatprep.subr.bf16.mxu0 %v521
    %537 = vmatpush1.bf16.msra.mxu0 %v520
    %538 = vmatprep.subr.bf16.mxu0 %v523
    %539 = vmatpush1.bf16.msra.mxu0 %v522
    %540 = vmatprep.subr.bf16.mxu0 %v525
    %541 = vmatpush1.bf16.msra.mxu0 %v524
    %542 = vmatprep.subr.bf16.mxu0 %v527
    %543 = vmatpush1.bf16.msra.mxu0 %v526
    %544 = vmatprep.subr.bf16.mxu0 %v529
    %545 = vmatpush1.bf16.msra.mxu0 %v528
    %546 = vmatprep.subr.bf16.mxu0 %v531
    %547 = vmatpush1.bf16.msra.mxu0 %v530
    %548 = vmatprep.subr.bf16.mxu0 %v533
    %549 = vmatpush1.bf16.msra.mxu0 %v532
    %550 = vmatprep.subr.bf16.mxu0 %v535
    %551 = vmatpush1.bf16.msra.mxu0 %v534
    %552 = vmatprep.subr.bf16.mxu0 0
    %553 = vmatpush1.bf16.msra.mxu0 0
    %554 = vmatprep.subr.bf16.mxu0 0
    %555 = vmatpush1.bf16.msra.mxu0 0
    %556 = vmatprep.subr.bf16.mxu0 0
    %557 = vmatpush1.bf16.msra.mxu0 0
    %558 = vmatprep.subr.bf16.mxu0 0
    %559 = vmatpush1.bf16.msra.mxu0 0
    %560 = vmatprep.subr.bf16.mxu0 0
    %561 = vmatpush1.bf16.msra.mxu0 0
    %562 = vmatprep.subr.bf16.mxu0 0
    %563 = vmatpush1.bf16.msra.mxu0 0
    %564 = vmatprep.subr.bf16.mxu0 0
    %565 = vmatpush1.bf16.msra.mxu0 0
    %566 = vmatprep.subr.bf16.mxu0 0
    %567 = vmatpush1.bf16.msra.mxu0 0
    %568 = vmatprep.mubr.bf16.mxu0 0
    %569 = vmatmul.mubr.bf16.gmra.mrb[0].mxu0 %v519
    %v570 = vpop.f32.mrb[0].mxu0
    %v571 = vadd.f32 0.0, %v570
    %v572 = vpop.f32.mrb[0].mxu0
    %v573 = vadd.f32 0.0, %v572
    %v574 = vpop.f32.mrb[0].mxu0
    %v575 = vpop.f32.mrb[0].mxu0
    %576 = vdwg.mxu0
    %v577 = vrot.slane %v571, 4
    %v578 = vadd.f32 %v571, %v577
    %v579 = vrot.slane %v578, 2
    %v580 = vadd.f32 %v578, %v579
    %v581 = vrot.slane %v580, 1
    %v582 = vadd.f32 %v580, %v581
    %v583 = vrot.slane %v573, 4
    %v584 = vadd.f32 %v573, %v583
    %v585 = vrot.slane %v584, 2
    %v586 = vadd.f32 %v584, %v585
    %v587 = vrot.slane %v586, 1
    %v588 = vadd.f32 %v586, %v587
    %v589 = vmul.f32 %v582, 0.125
    %v590 = vmul.f32 %v588, 0.125
    %v591 = vmul.f32 %v571, %v571
    %v592 = vmul.f32 %v573, %v573
    %v593 = vrot.slane %v591, 4
    %v594 = vadd.f32 %v591, %v593
    %v595 = vrot.slane %v594, 2
    %v596 = vadd.f32 %v594, %v595
    %v597 = vrot.slane %v596, 1
    %v598 = vadd.f32 %v596, %v597
    %v599 = vrot.slane %v592, 4
    %v600 = vadd.f32 %v592, %v599
    %v601 = vrot.slane %v600, 2
    %v602 = vadd.f32 %v600, %v601
    %v603 = vrot.slane %v602, 1
    %v604 = vadd.f32 %v602, %v603
    %v605 = vmul.f32 %v598, 0.125
    %v606 = vmul.f32 %v604, 0.125
    %v607 = vmul.f32 %v589, %v589
    %v608 = vmul.f32 %v590, %v590
    %v609 = vsub.f32 %v605, %v607
    %v610 = vsub.f32 %v606, %v608
    %v611 = vmul.f32 %v517, %v516
    %v612 = vmul.f32 %v516, %v516
    %v615 = vcombine.low %v609, %v610
    %v617 = vunpack.c.l.s4 1966171168
    %v618 = vunpack.c.0.s8 %v617
    %v619 = vlaneseq
    %v620 = vshrl.u32 %v619, 7
    %v621 = vsub.s32 %v618, %v620
    %v622 = vrot.slane %v615, %v621
    %v624 = vunpack.c.l.s4 1966171168
    %v625 = vunpack.c.0.s8 %v624
    %v626 = vlaneseq
    %v627 = vshrl.u32 %v626, 7
    %v628 = vsub.s32 %v625, %v627
    %v629 = vrot.slane %v622, %v628
    %v631 = vmul.f32 %v612, %v629
    %v632 = vadd.f32 %v631, 0.8
    %v633 = vrsqrt.pop %v632
    %v634 = vmul.f32 %v611, %v633
    %v636 = vlaneseq
    %v637 = vshrl.u32 %v636, 7
    %v638 = vsub.s32 0, %v637
    %v639 = vrot.slane %v634, %v638
    %v640 = vlaneseq
    %v641 = vshrl.u32 %v640, 7
    %v642 = vsub.s32 1, %v641
    %v643 = vrot.slane %v634, %v642
    %v646 = vmul.f32 %v589, %v639
    %v647 = vmul.f32 %v590, %v643
    %v650 = vcombine.low %v646, %v647
    %v652 = vunpack.c.l.s4 1966171168
    %v653 = vunpack.c.0.s8 %v652
    %v654 = vlaneseq
    %v655 = vshrl.u32 %v654, 7
    %v656 = vsub.s32 %v653, %v655
    %v657 = vrot.slane %v650, %v656
    %v659 = vunpack.c.l.s4 1966171168
    %v660 = vunpack.c.0.s8 %v659
    %v661 = vlaneseq
    %v662 = vshrl.u32 %v661, 7
    %v663 = vsub.s32 %v660, %v662
    %v664 = vrot.slane %v657, %v663
    %v666 = vsub.f32 %v518, %v664
    %v667 = vmul.f32 %v571, %v639
    %v668 = vmul.f32 %v573, %v643
    %v670 = vlaneseq
    %v671 = vshrl.u32 %v670, 7
    %v672 = vsub.s32 0, %v671
    %v673 = vrot.slane %v666, %v672
    %v674 = vlaneseq
    %v675 = vshrl.u32 %v674, 7
    %v676 = vsub.s32 1, %v675
    %v677 = vrot.slane %v666, %v676
    %v680 = vadd.f32 %v667, %v673
    %v681 = vadd.f32 %v668, %v677
    %vm682 = vcmp.gt.f32.partialorder %v680, 0.0
    %vm683 = vcmp.gt.f32.partialorder %v681, 0.0
    %v684 = vmul.f32 %v680, 0.2
    %v685 = vmul.f32 %v681, 0.2
    %v686 = vsel %vm682, %v680, %v684
    %v687 = vsel %vm683, %v681, %v685
    %v688 = vld [vmem:[#allocation17] sm:$0xff]
    %v689 = vld [vmem:[#allocation17 + $0x8] sm:$0xff]
    %v690 = vld [vmem:[#allocation17 + $0x10] sm:$0xff]
    %v691 = vld [vmem:[#allocation17 + $0x18] sm:$0xff]
    %v692 = vld [vmem:[#allocation17 + $0x20] sm:$0xff]
    %v693 = vld [vmem:[#allocation17 + $0x28] sm:$0xff]
    %v694 = vld [vmem:[#allocation17 + $0x30] sm:$0xff]
    %v695 = vld [vmem:[#allocation17 + $0x38] sm:$0xff]
    %v696 = vld [vmem:[#allocation17 + $0x40] sm:$0xff]
    %v697 = vld [vmem:[#allocation17 + $0x48] sm:$0xff]
    %v698 = vld [vmem:[#allocation17 + $0x50] sm:$0xff]
    %v699 = vld [vmem:[#allocation17 + $0x58] sm:$0xff]
    %v700 = vld [vmem:[#allocation17 + $0x60] sm:$0xff]
    %v701 = vld [vmem:[#allocation17 + $0x68] sm:$0xff]
    %v702 = vld [vmem:[#allocation17 + $0x70] sm:$0xff]
    %v703 = vld [vmem:[#allocation17 + $0x78] sm:$0xff]
    %v704 = vld [vmem:[#allocation17 + $0x80] sm:$0xff]
    %v705 = vld [vmem:[#allocation17 + $0x88] sm:$0xff]
    %v706 = vld [vmem:[#allocation17 + $0x90] sm:$0xff]
    %v707 = vld [vmem:[#allocation17 + $0x98] sm:$0xff]
    %v708 = vld [vmem:[#allocation17 + $0xa0] sm:$0xff]
    %v709 = vld [vmem:[#allocation17 + $0xa8] sm:$0xff]
    %v710 = vld [vmem:[#allocation17 + $0xb0] sm:$0xff]
    %v711 = vld [vmem:[#allocation17 + $0xb8] sm:$0xff]
    %v712 = vld [vmem:[#allocation17 + $0xc0] sm:$0xff]
    %v713 = vld [vmem:[#allocation17 + $0xc8] sm:$0xff]
    %v714 = vld [vmem:[#allocation17 + $0xd0] sm:$0xff]
    %v715 = vld [vmem:[#allocation17 + $0xd8] sm:$0xff]
    %v716 = vld [vmem:[#allocation17 + $0xe0] sm:$0xff]
    %v717 = vld [vmem:[#allocation17 + $0xe8] sm:$0xff]
    %v718 = vld [vmem:[#allocation17 + $0xf0] sm:$0xff]
    %v719 = vld [vmem:[#allocation17 + $0xf8] sm:$0xff]
    %v720 = vld [vmem:[#allocation19] sm:$0xf]
    %v721 = vld [vmem:[#allocation20] sm:$0xf]
    %v722 = vld [vmem:[#allocation22] sm:$0xf]
    %v723 = vpack.c.bf16 %v686, %v686
    %v724 = vpack.c.bf16 %v687, %v687
    %v725 = vunpack.c.l.s8.bf16 %v688
    %v726 = vunpack.c.l.s8.bf16 %v689
    %v727 = vunpack.c.l.s8.bf16 %v690
    %v728 = vunpack.c.l.s8.bf16 %v691
    %v729 = vunpack.c.h.s8.bf16 %v688
    %v730 = vunpack.c.h.s8.bf16 %v689
    %v731 = vunpack.c.h.s8.bf16 %v690
    %v732 = vunpack.c.h.s8.bf16 %v691
    %v733 = vunpack.c.l.s8.bf16 %v692
    %v734 = vunpack.c.l.s8.bf16 %v693
    %v735 = vunpack.c.l.s8.bf16 %v694
    %v736 = vunpack.c.l.s8.bf16 %v695
    %v737 = vunpack.c.h.s8.bf16 %v692
    %v738 = vunpack.c.h.s8.bf16 %v693
    %v739 = vunpack.c.h.s8.bf16 %v694
    %v740 = vunpack.c.h.s8.bf16 %v695
    %v741 = vunpack.c.l.s8.bf16 %v696
    %v742 = vunpack.c.l.s8.bf16 %v697
    %v743 = vunpack.c.l.s8.bf16 %v698
    %v744 = vunpack.c.l.s8.bf16 %v699
    %v745 = vunpack.c.h.s8.bf16 %v696
    %v746 = vunpack.c.h.s8.bf16 %v697
    %v747 = vunpack.c.h.s8.bf16 %v698
    %v748 = vunpack.c.h.s8.bf16 %v699
    %v749 = vunpack.c.l.s8.bf16 %v700
    %v750 = vunpack.c.l.s8.bf16 %v701
    %v751 = vunpack.c.l.s8.bf16 %v702
    %v752 = vunpack.c.l.s8.bf16 %v703
    %v753 = vunpack.c.h.s8.bf16 %v700
    %v754 = vunpack.c.h.s8.bf16 %v701
    %v755 = vunpack.c.h.s8.bf16 %v702
    %v756 = vunpack.c.h.s8.bf16 %v703
    %v757 = vunpack.c.l.s8.bf16 %v704
    %v758 = vunpack.c.l.s8.bf16 %v705
    %v759 = vunpack.c.l.s8.bf16 %v706
    %v760 = vunpack.c.l.s8.bf16 %v707
    %v761 = vunpack.c.h.s8.bf16 %v704
    %v762 = vunpack.c.h.s8.bf16 %v705
    %v763 = vunpack.c.h.s8.bf16 %v706
    %v764 = vunpack.c.h.s8.bf16 %v707
    %v765 = vunpack.c.l.s8.bf16 %v708
    %v766 = vunpack.c.l.s8.bf16 %v709
    %v767 = vunpack.c.l.s8.bf16 %v710
    %v768 = vunpack.c.l.s8.bf16 %v711
    %v769 = vunpack.c.h.s8.bf16 %v708
    %v770 = vunpack.c.h.s8.bf16 %v709
    %v771 = vunpack.c.h.s8.bf16 %v710
    %v772 = vunpack.c.h.s8.bf16 %v711
    %v773 = vunpack.c.l.s8.bf16 %v712
    %v774 = vunpack.c.l.s8.bf16 %v713
    %v775 = vunpack.c.l.s8.bf16 %v714
    %v776 = vunpack.c.l.s8.bf16 %v715
    %v777 = vunpack.c.h.s8.bf16 %v712
    %v778 = vunpack.c.h.s8.bf16 %v713
    %v779 = vunpack.c.h.s8.bf16 %v714
    %v780 = vunpack.c.h.s8.bf16 %v715
    %v781 = vunpack.c.l.s8.bf16 %v716
    %v782 = vunpack.c.l.s8.bf16 %v717
    %v783 = vunpack.c.l.s8.bf16 %v718
    %v784 = vunpack.c.l.s8.bf16 %v719
    %v785 = vunpack.c.h.s8.bf16 %v716
    %v786 = vunpack.c.h.s8.bf16 %v717
    %v787 = vunpack.c.h.s8.bf16 %v718
    %v788 = vunpack.c.h.s8.bf16 %v719
    %789 = vmatprep.subr.bf16.mxu0 %v726
    %790 = vmatpush1.bf16.msra.mxu0 %v725
    %791 = vmatprep.subr.bf16.mxu0 %v730
    %792 = vmatpush1.bf16.msra.mxu0 %v729
    %793 = vmatprep.subr.bf16.mxu0 %v734
    %794 = vmatpush1.bf16.msra.mxu0 %v733
    %795 = vmatprep.subr.bf16.mxu0 %v738
    %796 = vmatpush1.bf16.msra.mxu0 %v737
    %797 = vmatprep.subr.bf16.mxu0 %v742
    %798 = vmatpush1.bf16.msra.mxu0 %v741
    %799 = vmatprep.subr.bf16.mxu0 %v746
    %800 = vmatpush1.bf16.msra.mxu0 %v745
    %801 = vmatprep.subr.bf16.mxu0 %v750
    %802 = vmatpush1.bf16.msra.mxu0 %v749
    %803 = vmatprep.subr.bf16.mxu0 %v754
    %804 = vmatpush1.bf16.msra.mxu0 %v753
    %805 = vmatprep.subr.bf16.mxu0 %v758
    %806 = vmatpush1.bf16.msra.mxu0 %v757
    %807 = vmatprep.subr.bf16.mxu0 %v762
    %808 = vmatpush1.bf16.msra.mxu0 %v761
    %809 = vmatprep.subr.bf16.mxu0 %v766
    %810 = vmatpush1.bf16.msra.mxu0 %v765
    %811 = vmatprep.subr.bf16.mxu0 %v770
    %812 = vmatpush1.bf16.msra.mxu0 %v769
    %813 = vmatprep.subr.bf16.mxu0 %v774
    %814 = vmatpush1.bf16.msra.mxu0 %v773
    %815 = vmatprep.subr.bf16.mxu0 %v778
    %816 = vmatpush1.bf16.msra.mxu0 %v777
    %817 = vmatprep.subr.bf16.mxu0 %v782
    %818 = vmatpush1.bf16.msra.mxu0 %v781
    %819 = vmatprep.subr.bf16.mxu0 %v786
    %820 = vmatpush1.bf16.msra.mxu0 %v785
    %821 = vmatprep.mubr.bf16.mxu0 %v724
    %822 = vmatmul.mubr.bf16.gmra.mrb[0].mxu0 %v723
    %v823 = vpop.f32.mrb[0].mxu0
    %v824 = vadd.f32 0.0, %v823
    %v825 = vpop.f32.mrb[0].mxu0
    %v826 = vadd.f32 0.0, %v825
    %v827 = vpop.f32.mrb[0].mxu0
    %v828 = vpop.f32.mrb[0].mxu0
    %829 = vdwg.mxu0
    %830 = vmatprep.subr.bf16.mxu0 %v728
    %831 = vmatpush1.bf16.msra.mxu0 %v727
    %832 = vmatprep.subr.bf16.mxu0 %v732
    %833 = vmatpush1.bf16.msra.mxu0 %v731
    %834 = vmatprep.subr.bf16.mxu0 %v736
    %835 = vmatpush1.bf16.msra.mxu0 %v735
    %836 = vmatprep.subr.bf16.mxu0 %v740
    %837 = vmatpush1.bf16.msra.mxu0 %v739
    %838 = vmatprep.subr.bf16.mxu0 %v744
    %839 = vmatpush1.bf16.msra.mxu0 %v743
    %840 = vmatprep.subr.bf16.mxu0 %v748
    %841 = vmatpush1.bf16.msra.mxu0 %v747
    %842 = vmatprep.subr.bf16.mxu0 %v752
    %843 = vmatpush1.bf16.msra.mxu0 %v751
    %844 = vmatprep.subr.bf16.mxu0 %v756
    %845 = vmatpush1.bf16.msra.mxu0 %v755
    %846 = vmatprep.subr.bf16.mxu0 %v760
    %847 = vmatpush1.bf16.msra.mxu0 %v759
    %848 = vmatprep.subr.bf16.mxu0 %v764
    %849 = vmatpush1.bf16.msra.mxu0 %v763
    %850 = vmatprep.subr.bf16.mxu0 %v768
    %851 = vmatpush1.bf16.msra.mxu0 %v767
    %852 = vmatprep.subr.bf16.mxu0 %v772
    %853 = vmatpush1.bf16.msra.mxu0 %v771
    %854 = vmatprep.subr.bf16.mxu0 %v776
    %855 = vmatpush1.bf16.msra.mxu0 %v775
    %856 = vmatprep.subr.bf16.mxu0 %v780
    %857 = vmatpush1.bf16.msra.mxu0 %v779
    %858 = vmatprep.subr.bf16.mxu0 %v784
    %859 = vmatpush1.bf16.msra.mxu0 %v783
    %860 = vmatprep.subr.bf16.mxu0 %v788
    %861 = vmatpush1.bf16.msra.mxu0 %v787
    %862 = vmatprep.mubr.bf16.mxu0 %v724
    %863 = vmatmul.mubr.bf16.gmra.mrb[0].mxu0 %v723
    %v864 = vpop.f32.mrb[0].mxu0
    %v865 = vadd.f32 0.0, %v864
    %v866 = vpop.f32.mrb[0].mxu0
    %v867 = vadd.f32 0.0, %v866
    %v868 = vpop.f32.mrb[0].mxu0
    %v869 = vpop.f32.mrb[0].mxu0
    %870 = vdwg.mxu0
    %v871 = vrot.slane %v824, 4
    %v872 = vadd.f32 %v824, %v871
    %v873 = vrot.slane %v872, 2
    %v874 = vadd.f32 %v872, %v873
    %v875 = vrot.slane %v874, 1
    %v876 = vadd.f32 %v874, %v875
    %v877 = vrot.slane %v826, 4
    %v878 = vadd.f32 %v826, %v877
    %v879 = vrot.slane %v878, 2
    %v880 = vadd.f32 %v878, %v879
    %v881 = vrot.slane %v880, 1
    %v882 = vadd.f32 %v880, %v881
    %v883 = vrot.slane %v865, 4
    %v884 = vadd.f32 %v865, %v883
    %v885 = vrot.slane %v884, 2
    %v886 = vadd.f32 %v884, %v885
    %v887 = vrot.slane %v886, 1
    %v888 = vadd.f32 %v886, %v887
    %v889 = vrot.slane %v867, 4
    %v890 = vadd.f32 %v867, %v889
    %v891 = vrot.slane %v890, 2
    %v892 = vadd.f32 %v890, %v891
    %v893 = vrot.slane %v892, 1
    %v894 = vadd.f32 %v892, %v893
    %v895 = vmul.f32 %v876, 0.125
    %v896 = vmul.f32 %v882, 0.125
    %v897 = vmul.f32 %v888, 0.125
    %v898 = vmul.f32 %v894, 0.125
    %v899 = vmul.f32 %v824, %v824
    %v900 = vmul.f32 %v826, %v826
    %v901 = vmul.f32 %v865, %v865
    %v902 = vmul.f32 %v867, %v867
    %v903 = vrot.slane %v899, 4
    %v904 = vadd.f32 %v899, %v903
    %v905 = vrot.slane %v904, 2
    %v906 = vadd.f32 %v904, %v905
    %v907 = vrot.slane %v906, 1
    %v908 = vadd.f32 %v906, %v907
    %v909 = vrot.slane %v900, 4
    %v910 = vadd.f32 %v900, %v909
    %v911 = vrot.slane %v910, 2
    %v912 = vadd.f32 %v910, %v911
    %v913 = vrot.slane %v912, 1
    %v914 = vadd.f32 %v912, %v913
    %v915 = vrot.slane %v901, 4
    %v916 = vadd.f32 %v901, %v915
    %v917 = vrot.slane %v916, 2
    %v918 = vadd.f32 %v916, %v917
    %v919 = vrot.slane %v918, 1
    %v920 = vadd.f32 %v918, %v919
    %v921 = vrot.slane %v902, 4
    %v922 = vadd.f32 %v902, %v921
    %v923 = vrot.slane %v922, 2
    %v924 = vadd.f32 %v922, %v923
    %v925 = vrot.slane %v924, 1
    %v926 = vadd.f32 %v924, %v925
    %v927 = vmul.f32 %v908, 0.125
    %v928 = vmul.f32 %v914, 0.125
    %v929 = vmul.f32 %v920, 0.125
    %v930 = vmul.f32 %v926, 0.125
    %v931 = vmul.f32 %v895, %v895
    %v932 = vmul.f32 %v896, %v896
    %v933 = vmul.f32 %v897, %v897
    %v934 = vmul.f32 %v898, %v898
    %v935 = vsub.f32 %v927, %v931
    %v936 = vsub.f32 %v928, %v932
    %v937 = vsub.f32 %v929, %v933
    %v938 = vsub.f32 %v930, %v934
    %v939 = vmul.f32 %v721, %v720
    %v940 = vmul.f32 %v720, %v720
    %v945 = vcombine.low %v935, %v936
    %v946 = vcombine.low %v937, %v938
    %v948 = vunpack.c.l.s4 1966171168
    %v949 = vunpack.c.0.s8 %v948
    %v950 = vlaneseq
    %v951 = vshrl.u32 %v950, 7
    %v952 = vsub.s32 %v949, %v951
    %v953 = vrot.slane %v945, %v952
    %v955 = vunpack.c.l.s4 1966171168
    %v956 = vunpack.c.0.s8 %v955
    %v957 = vlaneseq
    %v958 = vshrl.u32 %v957, 7
    %v959 = vsub.s32 %v956, %v958
    %v960 = vrot.slane %v946, %v959
    %v961 = vcombine.low %v953, %v960
    %v963 = vunpack.c.l.s4 1966171168
    %v964 = vunpack.c.0.s8 %v963
    %v965 = vlaneseq
    %v966 = vshrl.u32 %v965, 7
    %v967 = vsub.s32 %v964, %v966
    %v968 = vrot.slane %v961, %v967
    %v970 = vmul.f32 %v940, %v968
    %v971 = vadd.f32 %v970, 0.8
    %v972 = vrsqrt.pop %v971
    %v973 = vmul.f32 %v939, %v972
    %v975 = vlaneseq
    %v976 = vshrl.u32 %v975, 7
    %v977 = vsub.s32 0, %v976
    %v978 = vrot.slane %v973, %v977
    %v979 = vlaneseq
    %v980 = vshrl.u32 %v979, 7
    %v981 = vsub.s32 1, %v980
    %v982 = vrot.slane %v973, %v981
    %v983 = vlaneseq
    %v984 = vshrl.u32 %v983, 7
    %v985 = vsub.s32 2, %v984
    %v986 = vrot.slane %v973, %v985
    %v987 = vlaneseq
    %v988 = vshrl.u32 %v987, 7
    %v989 = vsub.s32 3, %v988
    %v990 = vrot.slane %v973, %v989
    %v995 = vmul.f32 %v895, %v978
    %v996 = vmul.f32 %v896, %v982
    %v997 = vmul.f32 %v897, %v986
    %v998 = vmul.f32 %v898, %v990
    %v1003 = vcombine.low %v995, %v996
    %v1004 = vcombine.low %v997, %v998
    %v1006 = vunpack.c.l.s4 1966171168
    %v1007 = vunpack.c.0.s8 %v1006
    %v1008 = vlaneseq
    %v1009 = vshrl.u32 %v1008, 7
    %v1010 = vsub.s32 %v1007, %v1009
    %v1011 = vrot.slane %v1003, %v1010
    %v1013 = vunpack.c.l.s4 1966171168
    %v1014 = vunpack.c.0.s8 %v1013
    %v1015 = vlaneseq
    %v1016 = vshrl.u32 %v1015, 7
    %v1017 = vsub.s32 %v1014, %v1016
    %v1018 = vrot.slane %v1004, %v1017
    %v1019 = vcombine.low %v1011, %v1018
    %v1021 = vunpack.c.l.s4 1966171168
    %v1022 = vunpack.c.0.s8 %v1021
    %v1023 = vlaneseq
    %v1024 = vshrl.u32 %v1023, 7
    %v1025 = vsub.s32 %v1022, %v1024
    %v1026 = vrot.slane %v1019, %v1025
    %v1028 = vsub.f32 %v722, %v1026
    %v1029 = vmul.f32 %v824, %v978
    %v1030 = vmul.f32 %v826, %v982
    %v1031 = vmul.f32 %v865, %v986
    %v1032 = vmul.f32 %v867, %v990
    %v1034 = vlaneseq
    %v1035 = vshrl.u32 %v1034, 7
    %v1036 = vsub.s32 0, %v1035
    %v1037 = vrot.slane %v1028, %v1036
    %v1038 = vlaneseq
    %v1039 = vshrl.u32 %v1038, 7
    %v1040 = vsub.s32 1, %v1039
    %v1041 = vrot.slane %v1028, %v1040
    %v1042 = vlaneseq
    %v1043 = vshrl.u32 %v1042, 7
    %v1044 = vsub.s32 2, %v1043
    %v1045 = vrot.slane %v1028, %v1044
    %v1046 = vlaneseq
    %v1047 = vshrl.u32 %v1046, 7
    %v1048 = vsub.s32 3, %v1047
    %v1049 = vrot.slane %v1028, %v1048
    %v1054 = vadd.f32 %v1029, %v1037
    %v1055 = vadd.f32 %v1030, %v1041
    %v1056 = vadd.f32 %v1031, %v1045
    %v1057 = vadd.f32 %v1032, %v1049
    %vm1058 = vcmp.gt.f32.partialorder %v1054, 0.0
    %vm1059 = vcmp.gt.f32.partialorder %v1055, 0.0
    %vm1060 = vcmp.gt.f32.partialorder %v1056, 0.0
    %vm1061 = vcmp.gt.f32.partialorder %v1057, 0.0
    %v1062 = vmul.f32 %v1054, 0.2
    %v1063 = vmul.f32 %v1055, 0.2
    %v1064 = vmul.f32 %v1056, 0.2
    %v1065 = vmul.f32 %v1057, 0.2
    %v1066 = vsel %vm1058, %v1054, %v1062
    %v1067 = vsel %vm1059, %v1055, %v1063
    %v1068 = vsel %vm1060, %v1056, %v1064
    %v1069 = vsel %vm1061, %v1057, %v1065
    %s1070 = smul.u32 2, 64
    %s1071 = smul.u32 %s1070, 8
    %s1072 = sshll.u32 %s1071, 4
    %1073 = dma.done [#allocation4], %s1072
    %v1074 = vld [vmem:[#allocation2] sm:$0xff]
    %v1075 = vld [vmem:[#allocation2 + $0x8] sm:$0xff]
    %v1076 = vld [vmem:[#allocation2 + $0x10] sm:$0xff]
    %v1077 = vld [vmem:[#allocation2 + $0x18] sm:$0xff]
    %v1078 = vld [vmem:[#allocation2 + $0x20] sm:$0xff]
    %v1079 = vld [vmem:[#allocation2 + $0x28] sm:$0xff]
    %v1080 = vld [vmem:[#allocation2 + $0x30] sm:$0xff]
    %v1081 = vld [vmem:[#allocation2 + $0x38] sm:$0xff]
    %v1082 = vld [vmem:[#allocation2 + $0x40] sm:$0xff]
    %v1083 = vld [vmem:[#allocation2 + $0x48] sm:$0xff]
    %v1084 = vld [vmem:[#allocation2 + $0x50] sm:$0xff]
    %v1085 = vld [vmem:[#allocation2 + $0x58] sm:$0xff]
    %v1086 = vld [vmem:[#allocation2 + $0x60] sm:$0xff]
    %v1087 = vld [vmem:[#allocation2 + $0x68] sm:$0xff]
    %v1088 = vld [vmem:[#allocation2 + $0x70] sm:$0xff]
    %v1089 = vld [vmem:[#allocation2 + $0x78] sm:$0xff]
    %v1090 = vld [vmem:[#allocation2 + $0x80] sm:$0xff]
    %v1091 = vld [vmem:[#allocation2 + $0x88] sm:$0xff]
    %v1092 = vld [vmem:[#allocation2 + $0x90] sm:$0xff]
    %v1093 = vld [vmem:[#allocation2 + $0x98] sm:$0xff]
    %v1094 = vld [vmem:[#allocation2 + $0xa0] sm:$0xff]
    %v1095 = vld [vmem:[#allocation2 + $0xa8] sm:$0xff]
    %v1096 = vld [vmem:[#allocation2 + $0xb0] sm:$0xff]
    %v1097 = vld [vmem:[#allocation2 + $0xb8] sm:$0xff]
    %v1098 = vld [vmem:[#allocation2 + $0xc0] sm:$0xff]
    %v1099 = vld [vmem:[#allocation2 + $0xc8] sm:$0xff]
    %v1100 = vld [vmem:[#allocation2 + $0xd0] sm:$0xff]
    %v1101 = vld [vmem:[#allocation2 + $0xd8] sm:$0xff]
    %v1102 = vld [vmem:[#allocation2 + $0xe0] sm:$0xff]
    %v1103 = vld [vmem:[#allocation2 + $0xe8] sm:$0xff]
    %v1104 = vld [vmem:[#allocation2 + $0xf0] sm:$0xff]
    %v1105 = vld [vmem:[#allocation2 + $0xf8] sm:$0xff]
    %v1106 = vld [vmem:[#allocation2 + $0x100] sm:$0xff]
    %v1107 = vld [vmem:[#allocation2 + $0x108] sm:$0xff]
    %v1108 = vld [vmem:[#allocation2 + $0x110] sm:$0xff]
    %v1109 = vld [vmem:[#allocation2 + $0x118] sm:$0xff]
    %v1110 = vld [vmem:[#allocation2 + $0x120] sm:$0xff]
    %v1111 = vld [vmem:[#allocation2 + $0x128] sm:$0xff]
    %v1112 = vld [vmem:[#allocation2 + $0x130] sm:$0xff]
    %v1113 = vld [vmem:[#allocation2 + $0x138] sm:$0xff]
    %v1114 = vld [vmem:[#allocation2 + $0x140] sm:$0xff]
    %v1115 = vld [vmem:[#allocation2 + $0x148] sm:$0xff]
    %v1116 = vld [vmem:[#allocation2 + $0x150] sm:$0xff]
    %v1117 = vld [vmem:[#allocation2 + $0x158] sm:$0xff]
    %v1118 = vld [vmem:[#allocation2 + $0x160] sm:$0xff]
    %v1119 = vld [vmem:[#allocation2 + $0x168] sm:$0xff]
    %v1120 = vld [vmem:[#allocation2 + $0x170] sm:$0xff]
    %v1121 = vld [vmem:[#allocation2 + $0x178] sm:$0xff]
    %v1122 = vld [vmem:[#allocation2 + $0x180] sm:$0xff]
    %v1123 = vld [vmem:[#allocation2 + $0x188] sm:$0xff]
    %v1124 = vld [vmem:[#allocation2 + $0x190] sm:$0xff]
    %v1125 = vld [vmem:[#allocation2 + $0x198] sm:$0xff]
    %v1126 = vld [vmem:[#allocation2 + $0x1a0] sm:$0xff]
    %v1127 = vld [vmem:[#allocation2 + $0x1a8] sm:$0xff]
    %v1128 = vld [vmem:[#allocation2 + $0x1b0] sm:$0xff]
    %v1129 = vld [vmem:[#allocation2 + $0x1b8] sm:$0xff]
    %v1130 = vld [vmem:[#allocation2 + $0x1c0] sm:$0xff]
    %v1131 = vld [vmem:[#allocation2 + $0x1c8] sm:$0xff]
    %v1132 = vld [vmem:[#allocation2 + $0x1d0] sm:$0xff]
    %v1133 = vld [vmem:[#allocation2 + $0x1d8] sm:$0xff]
    %v1134 = vld [vmem:[#allocation2 + $0x1e0] sm:$0xff]
    %v1135 = vld [vmem:[#allocation2 + $0x1e8] sm:$0xff]
    %v1136 = vld [vmem:[#allocation2 + $0x1f0] sm:$0xff]
    %v1137 = vld [vmem:[#allocation2 + $0x1f8] sm:$0xff]
    %v1138 = vld [vmem:[#allocation2 + $0x200] sm:$0xff]
    %v1139 = vld [vmem:[#allocation2 + $0x208] sm:$0xff]
    %v1140 = vld [vmem:[#allocation2 + $0x210] sm:$0xff]
    %v1141 = vld [vmem:[#allocation2 + $0x218] sm:$0xff]
    %v1142 = vld [vmem:[#allocation2 + $0x220] sm:$0xff]
    %v1143 = vld [vmem:[#allocation2 + $0x228] sm:$0xff]
    %v1144 = vld [vmem:[#allocation2 + $0x230] sm:$0xff]
    %v1145 = vld [vmem:[#allocation2 + $0x238] sm:$0xff]
    %v1146 = vld [vmem:[#allocation2 + $0x240] sm:$0xff]
    %v1147 = vld [vmem:[#allocation2 + $0x248] sm:$0xff]
    %v1148 = vld [vmem:[#allocation2 + $0x250] sm:$0xff]
    %v1149 = vld [vmem:[#allocation2 + $0x258] sm:$0xff]
    %v1150 = vld [vmem:[#allocation2 + $0x260] sm:$0xff]
    %v1151 = vld [vmem:[#allocation2 + $0x268] sm:$0xff]
    %v1152 = vld [vmem:[#allocation2 + $0x270] sm:$0xff]
    %v1153 = vld [vmem:[#allocation2 + $0x278] sm:$0xff]
    %v1154 = vld [vmem:[#allocation2 + $0x280] sm:$0xff]
    %v1155 = vld [vmem:[#allocation2 + $0x288] sm:$0xff]
    %v1156 = vld [vmem:[#allocation2 + $0x290] sm:$0xff]
    %v1157 = vld [vmem:[#allocation2 + $0x298] sm:$0xff]
    %v1158 = vld [vmem:[#allocation2 + $0x2a0] sm:$0xff]
    %v1159 = vld [vmem:[#allocation2 + $0x2a8] sm:$0xff]
    %v1160 = vld [vmem:[#allocation2 + $0x2b0] sm:$0xff]
    %v1161 = vld [vmem:[#allocation2 + $0x2b8] sm:$0xff]
    %v1162 = vld [vmem:[#allocation2 + $0x2c0] sm:$0xff]
    %v1163 = vld [vmem:[#allocation2 + $0x2c8] sm:$0xff]
    %v1164 = vld [vmem:[#allocation2 + $0x2d0] sm:$0xff]
    %v1165 = vld [vmem:[#allocation2 + $0x2d8] sm:$0xff]
    %v1166 = vld [vmem:[#allocation2 + $0x2e0] sm:$0xff]
    %v1167 = vld [vmem:[#allocation2 + $0x2e8] sm:$0xff]
    %v1168 = vld [vmem:[#allocation2 + $0x2f0] sm:$0xff]
    %v1169 = vld [vmem:[#allocation2 + $0x2f8] sm:$0xff]
    %v1170 = vld [vmem:[#allocation2 + $0x300] sm:$0xff]
    %v1171 = vld [vmem:[#allocation2 + $0x308] sm:$0xff]
    %v1172 = vld [vmem:[#allocation2 + $0x310] sm:$0xff]
    %v1173 = vld [vmem:[#allocation2 + $0x318] sm:$0xff]
    %v1174 = vld [vmem:[#allocation2 + $0x320] sm:$0xff]
    %v1175 = vld [vmem:[#allocation2 + $0x328] sm:$0xff]
    %v1176 = vld [vmem:[#allocation2 + $0x330] sm:$0xff]
    %v1177 = vld [vmem:[#allocation2 + $0x338] sm:$0xff]
    %v1178 = vld [vmem:[#allocation2 + $0x340] sm:$0xff]
    %v1179 = vld [vmem:[#allocation2 + $0x348] sm:$0xff]
    %v1180 = vld [vmem:[#allocation2 + $0x350] sm:$0xff]
    %v1181 = vld [vmem:[#allocation2 + $0x358] sm:$0xff]
    %v1182 = vld [vmem:[#allocation2 + $0x360] sm:$0xff]
    %v1183 = vld [vmem:[#allocation2 + $0x368] sm:$0xff]
    %v1184 = vld [vmem:[#allocation2 + $0x370] sm:$0xff]
    %v1185 = vld [vmem:[#allocation2 + $0x378] sm:$0xff]
    %v1186 = vld [vmem:[#allocation2 + $0x380] sm:$0xff]
    %v1187 = vld [vmem:[#allocation2 + $0x388] sm:$0xff]
    %v1188 = vld [vmem:[#allocation2 + $0x390] sm:$0xff]
    %v1189 = vld [vmem:[#allocation2 + $0x398] sm:$0xff]
    %v1190 = vld [vmem:[#allocation2 + $0x3a0] sm:$0xff]
    %v1191 = vld [vmem:[#allocation2 + $0x3a8] sm:$0xff]
    %v1192 = vld [vmem:[#allocation2 + $0x3b0] sm:$0xff]
    %v1193 = vld [vmem:[#allocation2 + $0x3b8] sm:$0xff]
    %v1194 = vld [vmem:[#allocation2 + $0x3c0] sm:$0xff]
    %v1195 = vld [vmem:[#allocation2 + $0x3c8] sm:$0xff]
    %v1196 = vld [vmem:[#allocation2 + $0x3d0] sm:$0xff]
    %v1197 = vld [vmem:[#allocation2 + $0x3d8] sm:$0xff]
    %v1198 = vld [vmem:[#allocation2 + $0x3e0] sm:$0xff]
    %v1199 = vld [vmem:[#allocation2 + $0x3e8] sm:$0xff]
    %v1200 = vld [vmem:[#allocation2 + $0x3f0] sm:$0xff]
    %v1201 = vld [vmem:[#allocation2 + $0x3f8] sm:$0xff]
    %v1202 = vld [vmem:[%s12] sm:$0xff]
    %v1203 = vld [vmem:[%s13] sm:$0xff]
    %v1204 = vld [vmem:[%s14] sm:$0xff]
    %v1205 = vpack.c.bf16 %v1066, %v1066
    %v1206 = vpack.c.bf16 %v1067, %v1067
    %v1207 = vpack.c.bf16 %v1068, %v1068
    %v1208 = vpack.c.bf16 %v1069, %v1069
    %v1209 = vunpack.c.l.s8.bf16 %v1074
    %v1210 = vunpack.c.l.s8.bf16 %v1075
    %v1211 = vunpack.c.l.s8.bf16 %v1076
    %v1212 = vunpack.c.l.s8.bf16 %v1077
    %v1213 = vunpack.c.l.s8.bf16 %v1078
    %v1214 = vunpack.c.l.s8.bf16 %v1079
    %v1215 = vunpack.c.l.s8.bf16 %v1080
    %v1216 = vunpack.c.l.s8.bf16 %v1081
    %v1217 = vunpack.c.h.s8.bf16 %v1074
    %v1218 = vunpack.c.h.s8.bf16 %v1075
    %v1219 = vunpack.c.h.s8.bf16 %v1076
    %v1220 = vunpack.c.h.s8.bf16 %v1077
    %v1221 = vunpack.c.h.s8.bf16 %v1078
    %v1222 = vunpack.c.h.s8.bf16 %v1079
    %v1223 = vunpack.c.h.s8.bf16 %v1080
    %v1224 = vunpack.c.h.s8.bf16 %v1081
    %v1225 = vunpack.c.l.s8.bf16 %v1082
    %v1226 = vunpack.c.l.s8.bf16 %v1083
    %v1227 = vunpack.c.l.s8.bf16 %v1084
    %v1228 = vunpack.c.l.s8.bf16 %v1085
    %v1229 = vunpack.c.l.s8.bf16 %v1086
    %v1230 = vunpack.c.l.s8.bf16 %v1087
    %v1231 = vunpack.c.l.s8.bf16 %v1088
    %v1232 = vunpack.c.l.s8.bf16 %v1089
    %v1233 = vunpack.c.h.s8.bf16 %v1082
    %v1234 = vunpack.c.h.s8.bf16 %v1083
    %v1235 = vunpack.c.h.s8.bf16 %v1084
    %v1236 = vunpack.c.h.s8.bf16 %v1085
    %v1237 = vunpack.c.h.s8.bf16 %v1086
    %v1238 = vunpack.c.h.s8.bf16 %v1087
    %v1239 = vunpack.c.h.s8.bf16 %v1088
    %v1240 = vunpack.c.h.s8.bf16 %v1089
    %v1241 = vunpack.c.l.s8.bf16 %v1090
    %v1242 = vunpack.c.l.s8.bf16 %v1091
    %v1243 = vunpack.c.l.s8.bf16 %v1092
    %v1244 = vunpack.c.l.s8.bf16 %v1093
    %v1245 = vunpack.c.l.s8.bf16 %v1094
    %v1246 = vunpack.c.l.s8.bf16 %v1095
    %v1247 = vunpack.c.l.s8.bf16 %v1096
    %v1248 = vunpack.c.l.s8.bf16 %v1097
    %v1249 = vunpack.c.h.s8.bf16 %v1090
    %v1250 = vunpack.c.h.s8.bf16 %v1091
    %v1251 = vunpack.c.h.s8.bf16 %v1092
    %v1252 = vunpack.c.h.s8.bf16 %v1093
    %v1253 = vunpack.c.h.s8.bf16 %v1094
    %v1254 = vunpack.c.h.s8.bf16 %v1095
    %v1255 = vunpack.c.h.s8.bf16 %v1096
    %v1256 = vunpack.c.h.s8.bf16 %v1097
    %v1257 = vunpack.c.l.s8.bf16 %v1098
    %v1258 = vunpack.c.l.s8.bf16 %v1099
    %v1259 = vunpack.c.l.s8.bf16 %v1100
    %v1260 = vunpack.c.l.s8.bf16 %v1101
    %v1261 = vunpack.c.l.s8.bf16 %v1102
    %v1262 = vunpack.c.l.s8.bf16 %v1103
    %v1263 = vunpack.c.l.s8.bf16 %v1104
    %v1264 = vunpack.c.l.s8.bf16 %v1105
    %v1265 = vunpack.c.h.s8.bf16 %v1098
    %v1266 = vunpack.c.h.s8.bf16 %v1099
    %v1267 = vunpack.c.h.s8.bf16 %v1100
    %v1268 = vunpack.c.h.s8.bf16 %v1101
    %v1269 = vunpack.c.h.s8.bf16 %v1102
    %v1270 = vunpack.c.h.s8.bf16 %v1103
    %v1271 = vunpack.c.h.s8.bf16 %v1104
    %v1272 = vunpack.c.h.s8.bf16 %v1105
    %v1273 = vunpack.c.l.s8.bf16 %v1106
    %v1274 = vunpack.c.l.s8.bf16 %v1107
    %v1275 = vunpack.c.l.s8.bf16 %v1108
    %v1276 = vunpack.c.l.s8.bf16 %v1109
    %v1277 = vunpack.c.l.s8.bf16 %v1110
    %v1278 = vunpack.c.l.s8.bf16 %v1111
    %v1279 = vunpack.c.l.s8.bf16 %v1112
    %v1280 = vunpack.c.l.s8.bf16 %v1113
    %v1281 = vunpack.c.h.s8.bf16 %v1106
    %v1282 = vunpack.c.h.s8.bf16 %v1107
    %v1283 = vunpack.c.h.s8.bf16 %v1108
    %v1284 = vunpack.c.h.s8.bf16 %v1109
    %v1285 = vunpack.c.h.s8.bf16 %v1110
    %v1286 = vunpack.c.h.s8.bf16 %v1111
    %v1287 = vunpack.c.h.s8.bf16 %v1112
    %v1288 = vunpack.c.h.s8.bf16 %v1113
    %v1289 = vunpack.c.l.s8.bf16 %v1114
    %v1290 = vunpack.c.l.s8.bf16 %v1115
    %v1291 = vunpack.c.l.s8.bf16 %v1116
    %v1292 = vunpack.c.l.s8.bf16 %v1117
    %v1293 = vunpack.c.l.s8.bf16 %v1118
    %v1294 = vunpack.c.l.s8.bf16 %v1119
    %v1295 = vunpack.c.l.s8.bf16 %v1120
    %v1296 = vunpack.c.l.s8.bf16 %v1121
    %v1297 = vunpack.c.h.s8.bf16 %v1114
    %v1298 = vunpack.c.h.s8.bf16 %v1115
    %v1299 = vunpack.c.h.s8.bf16 %v1116
    %v1300 = vunpack.c.h.s8.bf16 %v1117
    %v1301 = vunpack.c.h.s8.bf16 %v1118
    %v1302 = vunpack.c.h.s8.bf16 %v1119
    %v1303 = vunpack.c.h.s8.bf16 %v1120
    %v1304 = vunpack.c.h.s8.bf16 %v1121
    %v1305 = vunpack.c.l.s8.bf16 %v1122
    %v1306 = vunpack.c.l.s8.bf16 %v1123
    %v1307 = vunpack.c.l.s8.bf16 %v1124
    %v1308 = vunpack.c.l.s8.bf16 %v1125
    %v1309 = vunpack.c.l.s8.bf16 %v1126
    %v1310 = vunpack.c.l.s8.bf16 %v1127
    %v1311 = vunpack.c.l.s8.bf16 %v1128
    %v1312 = vunpack.c.l.s8.bf16 %v1129
    %v1313 = vunpack.c.h.s8.bf16 %v1122
    %v1314 = vunpack.c.h.s8.bf16 %v1123
    %v1315 = vunpack.c.h.s8.bf16 %v1124
    %v1316 = vunpack.c.h.s8.bf16 %v1125
    %v1317 = vunpack.c.h.s8.bf16 %v1126
    %v1318 = vunpack.c.h.s8.bf16 %v1127
    %v1319 = vunpack.c.h.s8.bf16 %v1128
    %v1320 = vunpack.c.h.s8.bf16 %v1129
    %v1321 = vunpack.c.l.s8.bf16 %v1130
    %v1322 = vunpack.c.l.s8.bf16 %v1131
    %v1323 = vunpack.c.l.s8.bf16 %v1132
    %v1324 = vunpack.c.l.s8.bf16 %v1133
    %v1325 = vunpack.c.l.s8.bf16 %v1134
    %v1326 = vunpack.c.l.s8.bf16 %v1135
    %v1327 = vunpack.c.l.s8.bf16 %v1136
    %v1328 = vunpack.c.l.s8.bf16 %v1137
    %v1329 = vunpack.c.h.s8.bf16 %v1130
    %v1330 = vunpack.c.h.s8.bf16 %v1131
    %v1331 = vunpack.c.h.s8.bf16 %v1132
    %v1332 = vunpack.c.h.s8.bf16 %v1133
    %v1333 = vunpack.c.h.s8.bf16 %v1134
    %v1334 = vunpack.c.h.s8.bf16 %v1135
    %v1335 = vunpack.c.h.s8.bf16 %v1136
    %v1336 = vunpack.c.h.s8.bf16 %v1137
    %v1337 = vunpack.c.l.s8.bf16 %v1138
    %v1338 = vunpack.c.l.s8.bf16 %v1139
    %v1339 = vunpack.c.l.s8.bf16 %v1140
    %v1340 = vunpack.c.l.s8.bf16 %v1141
    %v1341 = vunpack.c.l.s8.bf16 %v1142
    %v1342 = vunpack.c.l.s8.bf16 %v1143
    %v1343 = vunpack.c.l.s8.bf16 %v1144
    %v1344 = vunpack.c.l.s8.bf16 %v1145
    %v1345 = vunpack.c.h.s8.bf16 %v1138
    %v1346 = vunpack.c.h.s8.bf16 %v1139
    %v1347 = vunpack.c.h.s8.bf16 %v1140
    %v1348 = vunpack.c.h.s8.bf16 %v1141
    %v1349 = vunpack.c.h.s8.bf16 %v1142
    %v1350 = vunpack.c.h.s8.bf16 %v1143
    %v1351 = vunpack.c.h.s8.bf16 %v1144
    %v1352 = vunpack.c.h.s8.bf16 %v1145
    %v1353 = vunpack.c.l.s8.bf16 %v1146
    %v1354 = vunpack.c.l.s8.bf16 %v1147
    %v1355 = vunpack.c.l.s8.bf16 %v1148
    %v1356 = vunpack.c.l.s8.bf16 %v1149
    %v1357 = vunpack.c.l.s8.bf16 %v1150
    %v1358 = vunpack.c.l.s8.bf16 %v1151
    %v1359 = vunpack.c.l.s8.bf16 %v1152
    %v1360 = vunpack.c.l.s8.bf16 %v1153
    %v1361 = vunpack.c.h.s8.bf16 %v1146
    %v1362 = vunpack.c.h.s8.bf16 %v1147
    %v1363 = vunpack.c.h.s8.bf16 %v1148
    %v1364 = vunpack.c.h.s8.bf16 %v1149
    %v1365 = vunpack.c.h.s8.bf16 %v1150
    %v1366 = vunpack.c.h.s8.bf16 %v1151
    %v1367 = vunpack.c.h.s8.bf16 %v1152
    %v1368 = vunpack.c.h.s8.bf16 %v1153
    %v1369 = vunpack.c.l.s8.bf16 %v1154
    %v1370 = vunpack.c.l.s8.bf16 %v1155
    %v1371 = vunpack.c.l.s8.bf16 %v1156
    %v1372 = vunpack.c.l.s8.bf16 %v1157
    %v1373 = vunpack.c.l.s8.bf16 %v1158
    %v1374 = vunpack.c.l.s8.bf16 %v1159
    %v1375 = vunpack.c.l.s8.bf16 %v1160
    %v1376 = vunpack.c.l.s8.bf16 %v1161
    %v1377 = vunpack.c.h.s8.bf16 %v1154
    %v1378 = vunpack.c.h.s8.bf16 %v1155
    %v1379 = vunpack.c.h.s8.bf16 %v1156
    %v1380 = vunpack.c.h.s8.bf16 %v1157
    %v1381 = vunpack.c.h.s8.bf16 %v1158
    %v1382 = vunpack.c.h.s8.bf16 %v1159
    %v1383 = vunpack.c.h.s8.bf16 %v1160
    %v1384 = vunpack.c.h.s8.bf16 %v1161
    %v1385 = vunpack.c.l.s8.bf16 %v1162
    %v1386 = vunpack.c.l.s8.bf16 %v1163
    %v1387 = vunpack.c.l.s8.bf16 %v1164
    %v1388 = vunpack.c.l.s8.bf16 %v1165
    %v1389 = vunpack.c.l.s8.bf16 %v1166
    %v1390 = vunpack.c.l.s8.bf16 %v1167
    %v1391 = vunpack.c.l.s8.bf16 %v1168
    %v1392 = vunpack.c.l.s8.bf16 %v1169
    %v1393 = vunpack.c.h.s8.bf16 %v1162
    %v1394 = vunpack.c.h.s8.bf16 %v1163
    %v1395 = vunpack.c.h.s8.bf16 %v1164
    %v1396 = vunpack.c.h.s8.bf16 %v1165
    %v1397 = vunpack.c.h.s8.bf16 %v1166
    %v1398 = vunpack.c.h.s8.bf16 %v1167
    %v1399 = vunpack.c.h.s8.bf16 %v1168
    %v1400 = vunpack.c.h.s8.bf16 %v1169
    %v1401 = vunpack.c.l.s8.bf16 %v1170
    %v1402 = vunpack.c.l.s8.bf16 %v1171
    %v1403 = vunpack.c.l.s8.bf16 %v1172
    %v1404 = vunpack.c.l.s8.bf16 %v1173
    %v1405 = vunpack.c.l.s8.bf16 %v1174
    %v1406 = vunpack.c.l.s8.bf16 %v1175
    %v1407 = vunpack.c.l.s8.bf16 %v1176
    %v1408 = vunpack.c.l.s8.bf16 %v1177
    %v1409 = vunpack.c.h.s8.bf16 %v1170
    %v1410 = vunpack.c.h.s8.bf16 %v1171
    %v1411 = vunpack.c.h.s8.bf16 %v1172
    %v1412 = vunpack.c.h.s8.bf16 %v1173
    %v1413 = vunpack.c.h.s8.bf16 %v1174
    %v1414 = vunpack.c.h.s8.bf16 %v1175
    %v1415 = vunpack.c.h.s8.bf16 %v1176
    %v1416 = vunpack.c.h.s8.bf16 %v1177
    %v1417 = vunpack.c.l.s8.bf16 %v1178
    %v1418 = vunpack.c.l.s8.bf16 %v1179
    %v1419 = vunpack.c.l.s8.bf16 %v1180
    %v1420 = vunpack.c.l.s8.bf16 %v1181
    %v1421 = vunpack.c.l.s8.bf16 %v1182
    %v1422 = vunpack.c.l.s8.bf16 %v1183
    %v1423 = vunpack.c.l.s8.bf16 %v1184
    %v1424 = vunpack.c.l.s8.bf16 %v1185
    %v1425 = vunpack.c.h.s8.bf16 %v1178
    %v1426 = vunpack.c.h.s8.bf16 %v1179
    %v1427 = vunpack.c.h.s8.bf16 %v1180
    %v1428 = vunpack.c.h.s8.bf16 %v1181
    %v1429 = vunpack.c.h.s8.bf16 %v1182
    %v1430 = vunpack.c.h.s8.bf16 %v1183
    %v1431 = vunpack.c.h.s8.bf16 %v1184
    %v1432 = vunpack.c.h.s8.bf16 %v1185
    %v1433 = vunpack.c.l.s8.bf16 %v1186
    %v1434 = vunpack.c.l.s8.bf16 %v1187
    %v1435 = vunpack.c.l.s8.bf16 %v1188
    %v1436 = vunpack.c.l.s8.bf16 %v1189
    %v1437 = vunpack.c.l.s8.bf16 %v1190
    %v1438 = vunpack.c.l.s8.bf16 %v1191
    %v1439 = vunpack.c.l.s8.bf16 %v1192
    %v1440 = vunpack.c.l.s8.bf16 %v1193
    %v1441 = vunpack.c.h.s8.bf16 %v1186
    %v1442 = vunpack.c.h.s8.bf16 %v1187
    %v1443 = vunpack.c.h.s8.bf16 %v1188
    %v1444 = vunpack.c.h.s8.bf16 %v1189
    %v1445 = vunpack.c.h.s8.bf16 %v1190
    %v1446 = vunpack.c.h.s8.bf16 %v1191
    %v1447 = vunpack.c.h.s8.bf16 %v1192
    %v1448 = vunpack.c.h.s8.bf16 %v1193
    %v1449 = vunpack.c.l.s8.bf16 %v1194
    %v1450 = vunpack.c.l.s8.bf16 %v1195
    %v1451 = vunpack.c.l.s8.bf16 %v1196
    %v1452 = vunpack.c.l.s8.bf16 %v1197
    %v1453 = vunpack.c.l.s8.bf16 %v1198
    %v1454 = vunpack.c.l.s8.bf16 %v1199
    %v1455 = vunpack.c.l.s8.bf16 %v1200
    %v1456 = vunpack.c.l.s8.bf16 %v1201
    %v1457 = vunpack.c.h.s8.bf16 %v1194
    %v1458 = vunpack.c.h.s8.bf16 %v1195
    %v1459 = vunpack.c.h.s8.bf16 %v1196
    %v1460 = vunpack.c.h.s8.bf16 %v1197
    %v1461 = vunpack.c.h.s8.bf16 %v1198
    %v1462 = vunpack.c.h.s8.bf16 %v1199
    %v1463 = vunpack.c.h.s8.bf16 %v1200
    %v1464 = vunpack.c.h.s8.bf16 %v1201
    %1465 = vmatprep.subr.bf16.mxu0 %v1210
    %1466 = vmatpush1.bf16.msra.mxu0 %v1209
    %1467 = vmatprep.subr.bf16.mxu0 %v1218
    %1468 = vmatpush1.bf16.msra.mxu0 %v1217
    %1469 = vmatprep.subr.bf16.mxu0 %v1226
    %1470 = vmatpush1.bf16.msra.mxu0 %v1225
    %1471 = vmatprep.subr.bf16.mxu0 %v1234
    %1472 = vmatpush1.bf16.msra.mxu0 %v1233
    %1473 = vmatprep.subr.bf16.mxu0 %v1242
    %1474 = vmatpush1.bf16.msra.mxu0 %v1241
    %1475 = vmatprep.subr.bf16.mxu0 %v1250
    %1476 = vmatpush1.bf16.msra.mxu0 %v1249
    %1477 = vmatprep.subr.bf16.mxu0 %v1258
    %1478 = vmatpush1.bf16.msra.mxu0 %v1257
    %1479 = vmatprep.subr.bf16.mxu0 %v1266
    %1480 = vmatpush1.bf16.msra.mxu0 %v1265
    %1481 = vmatprep.subr.bf16.mxu0 %v1274
    %1482 = vmatpush1.bf16.msra.mxu0 %v1273
    %1483 = vmatprep.subr.bf16.mxu0 %v1282
    %1484 = vmatpush1.bf16.msra.mxu0 %v1281
    %1485 = vmatprep.subr.bf16.mxu0 %v1290
    %1486 = vmatpush1.bf16.msra.mxu0 %v1289
    %1487 = vmatprep.subr.bf16.mxu0 %v1298
    %1488 = vmatpush1.bf16.msra.mxu0 %v1297
    %1489 = vmatprep.subr.bf16.mxu0 %v1306
    %1490 = vmatpush1.bf16.msra.mxu0 %v1305
    %1491 = vmatprep.subr.bf16.mxu0 %v1314
    %1492 = vmatpush1.bf16.msra.mxu0 %v1313
    %1493 = vmatprep.subr.bf16.mxu0 %v1322
    %1494 = vmatpush1.bf16.msra.mxu0 %v1321
    %1495 = vmatprep.subr.bf16.mxu0 %v1330
    %1496 = vmatpush1.bf16.msra.mxu0 %v1329
    %1497 = vmatprep.mubr.bf16.mxu0 %v1206
    %1498 = vmatmul.mubr.bf16.gmra.mrb[0].mxu0 %v1205
    %v1499 = vpop.f32.mrb[0].mxu0
    %v1500 = vadd.f32 0.0, %v1499
    %v1501 = vpop.f32.mrb[0].mxu0
    %v1502 = vadd.f32 0.0, %v1501
    %v1503 = vpop.f32.mrb[0].mxu0
    %v1504 = vpop.f32.mrb[0].mxu0
    %1505 = vdwg.mxu0
    %1506 = vmatprep.subr.bf16.mxu0 %v1338
    %1507 = vmatpush1.bf16.msra.mxu0 %v1337
    %1508 = vmatprep.subr.bf16.mxu0 %v1346
    %1509 = vmatpush1.bf16.msra.mxu0 %v1345
    %1510 = vmatprep.subr.bf16.mxu0 %v1354
    %1511 = vmatpush1.bf16.msra.mxu0 %v1353
    %1512 = vmatprep.subr.bf16.mxu0 %v1362
    %1513 = vmatpush1.bf16.msra.mxu0 %v1361
    %1514 = vmatprep.subr.bf16.mxu0 %v1370
    %1515 = vmatpush1.bf16.msra.mxu0 %v1369
    %1516 = vmatprep.subr.bf16.mxu0 %v1378
    %1517 = vmatpush1.bf16.msra.mxu0 %v1377
    %1518 = vmatprep.subr.bf16.mxu0 %v1386
    %1519 = vmatpush1.bf16.msra.mxu0 %v1385
    %1520 = vmatprep.subr.bf16.mxu0 %v1394
    %1521 = vmatpush1.bf16.msra.mxu0 %v1393
    %1522 = vmatprep.subr.bf16.mxu0 %v1402
    %1523 = vmatpush1.bf16.msra.mxu0 %v1401
    %1524 = vmatprep.subr.bf16.mxu0 %v1410
    %1525 = vmatpush1.bf16.msra.mxu0 %v1409
    %1526 = vmatprep.subr.bf16.mxu0 %v1418
    %1527 = vmatpush1.bf16.msra.mxu0 %v1417
    %1528 = vmatprep.subr.bf16.mxu0 %v1426
    %1529 = vmatpush1.bf16.msra.mxu0 %v1425
    %1530 = vmatprep.subr.bf16.mxu0 %v1434
    %1531 = vmatpush1.bf16.msra.mxu0 %v1433
    %1532 = vmatprep.subr.bf16.mxu0 %v1442
    %1533 = vmatpush1.bf16.msra.mxu0 %v1441
    %1534 = vmatprep.subr.bf16.mxu0 %v1450
    %1535 = vmatpush1.bf16.msra.mxu0 %v1449
    %1536 = vmatprep.subr.bf16.mxu0 %v1458
    %1537 = vmatpush1.bf16.msra.mxu0 %v1457
    %1538 = vmatprep.mubr.bf16.mxu0 %v1208
    %1539 = vmatmul.mubr.bf16.gmra.mrb[0].mxu0 %v1207
    %v1540 = vpop.f32.mrb[0].mxu0
    %v1541 = vadd.f32 %v1500, %v1540
    %v1542 = vpop.f32.mrb[0].mxu0
    %v1543 = vadd.f32 %v1502, %v1542
    %v1544 = vpop.f32.mrb[0].mxu0
    %v1545 = vpop.f32.mrb[0].mxu0
    %1546 = vdwg.mxu0
    %1547 = vmatprep.subr.bf16.mxu0 %v1212
    %1548 = vmatpush1.bf16.msra.mxu0 %v1211
    %1549 = vmatprep.subr.bf16.mxu0 %v1220
    %1550 = vmatpush1.bf16.msra.mxu0 %v1219
    %1551 = vmatprep.subr.bf16.mxu0 %v1228
    %1552 = vmatpush1.bf16.msra.mxu0 %v1227
    %1553 = vmatprep.subr.bf16.mxu0 %v1236
    %1554 = vmatpush1.bf16.msra.mxu0 %v1235
    %1555 = vmatprep.subr.bf16.mxu0 %v1244
    %1556 = vmatpush1.bf16.msra.mxu0 %v1243
    %1557 = vmatprep.subr.bf16.mxu0 %v1252
    %1558 = vmatpush1.bf16.msra.mxu0 %v1251
    %1559 = vmatprep.subr.bf16.mxu0 %v1260
    %1560 = vmatpush1.bf16.msra.mxu0 %v1259
    %1561 = vmatprep.subr.bf16.mxu0 %v1268
    %1562 = vmatpush1.bf16.msra.mxu0 %v1267
    %1563 = vmatprep.subr.bf16.mxu0 %v1276
    %1564 = vmatpush1.bf16.msra.mxu0 %v1275
    %1565 = vmatprep.subr.bf16.mxu0 %v1284
    %1566 = vmatpush1.bf16.msra.mxu0 %v1283
    %1567 = vmatprep.subr.bf16.mxu0 %v1292
    %1568 = vmatpush1.bf16.msra.mxu0 %v1291
    %1569 = vmatprep.subr.bf16.mxu0 %v1300
    %1570 = vmatpush1.bf16.msra.mxu0 %v1299
    %1571 = vmatprep.subr.bf16.mxu0 %v1308
    %1572 = vmatpush1.bf16.msra.mxu0 %v1307
    %1573 = vmatprep.subr.bf16.mxu0 %v1316
    %1574 = vmatpush1.bf16.msra.mxu0 %v1315
    %1575 = vmatprep.subr.bf16.mxu0 %v1324
    %1576 = vmatpush1.bf16.msra.mxu0 %v1323
    %1577 = vmatprep.subr.bf16.mxu0 %v1332
    %1578 = vmatpush1.bf16.msra.mxu0 %v1331
    %1579 = vmatprep.mubr.bf16.mxu0 %v1206
    %1580 = vmatmul.mubr.bf16.gmra.mrb[0].mxu0 %v1205
    %v1581 = vpop.f32.mrb[0].mxu0
    %v1582 = vadd.f32 0.0, %v1581
    %v1583 = vpop.f32.mrb[0].mxu0
    %v1584 = vadd.f32 0.0, %v1583
    %v1585 = vpop.f32.mrb[0].mxu0
    %v1586 = vpop.f32.mrb[0].mxu0
    %1587 = vdwg.mxu0
    %1588 = vmatprep.subr.bf16.mxu0 %v1340
    %1589 = vmatpush1.bf16.msra.mxu0 %v1339
    %1590 = vmatprep.subr.bf16.mxu0 %v1348
    %1591 = vmatpush1.bf16.msra.mxu0 %v1347
    %1592 = vmatprep.subr.bf16.mxu0 %v1356
    %1593 = vmatpush1.bf16.msra.mxu0 %v1355
    %1594 = vmatprep.subr.bf16.mxu0 %v1364
    %1595 = vmatpush1.bf16.msra.mxu0 %v1363
    %1596 = vmatprep.subr.bf16.mxu0 %v1372
    %1597 = vmatpush1.bf16.msra.mxu0 %v1371
    %1598 = vmatprep.subr.bf16.mxu0 %v1380
    %1599 = vmatpush1.bf16.msra.mxu0 %v1379
    %1600 = vmatprep.subr.bf16.mxu0 %v1388
    %1601 = vmatpush1.bf16.msra.mxu0 %v1387
    %1602 = vmatprep.subr.bf16.mxu0 %v1396
    %1603 = vmatpush1.bf16.msra.mxu0 %v1395
    %1604 = vmatprep.subr.bf16.mxu0 %v1404
    %1605 = vmatpush1.bf16.msra.mxu0 %v1403
    %1606 = vmatprep.subr.bf16.mxu0 %v1412
    %1607 = vmatpush1.bf16.msra.mxu0 %v1411
    %1608 = vmatprep.subr.bf16.mxu0 %v1420
    %1609 = vmatpush1.bf16.msra.mxu0 %v1419
    %1610 = vmatprep.subr.bf16.mxu0 %v1428
    %1611 = vmatpush1.bf16.msra.mxu0 %v1427
    %1612 = vmatprep.subr.bf16.mxu0 %v1436
    %1613 = vmatpush1.bf16.msra.mxu0 %v1435
    %1614 = vmatprep.subr.bf16.mxu0 %v1444
    %1615 = vmatpush1.bf16.msra.mxu0 %v1443
    %1616 = vmatprep.subr.bf16.mxu0 %v1452
    %1617 = vmatpush1.bf16.msra.mxu0 %v1451
    %1618 = vmatprep.subr.bf16.mxu0 %v1460
    %1619 = vmatpush1.bf16.msra.mxu0 %v1459
    %1620 = vmatprep.mubr.bf16.mxu0 %v1208
    %1621 = vmatmul.mubr.bf16.gmra.mrb[0].mxu0 %v1207
    %v1622 = vpop.f32.mrb[0].mxu0
    %v1623 = vadd.f32 %v1582, %v1622
    %v1624 = vpop.f32.mrb[0].mxu0
    %v1625 = vadd.f32 %v1584, %v1624
    %v1626 = vpop.f32.mrb[0].mxu0
    %v1627 = vpop.f32.mrb[0].mxu0
    %1628 = vdwg.mxu0
    %1629 = vmatprep.subr.bf16.mxu0 %v1214
    %1630 = vmatpush1.bf16.msra.mxu0 %v1213
    %1631 = vmatprep.subr.bf16.mxu0 %v1222
    %1632 = vmatpush1.bf16.msra.mxu0 %v1221
    %1633 = vmatprep.subr.bf16.mxu0 %v1230
    %1634 = vmatpush1.bf16.msra.mxu0 %v1229
    %1635 = vmatprep.subr.bf16.mxu0 %v1238
    %1636 = vmatpush1.bf16.msra.mxu0 %v1237
    %1637 = vmatprep.subr.bf16.mxu0 %v1246
    %1638 = vmatpush1.bf16.msra.mxu0 %v1245
    %1639 = vmatprep.subr.bf16.mxu0 %v1254
    %1640 = vmatpush1.bf16.msra.mxu0 %v1253
    %1641 = vmatprep.subr.bf16.mxu0 %v1262
    %1642 = vmatpush1.bf16.msra.mxu0 %v1261
    %1643 = vmatprep.subr.bf16.mxu0 %v1270
    %1644 = vmatpush1.bf16.msra.mxu0 %v1269
    %1645 = vmatprep.subr.bf16.mxu0 %v1278
    %1646 = vmatpush1.bf16.msra.mxu0 %v1277
    %1647 = vmatprep.subr.bf16.mxu0 %v1286
    %1648 = vmatpush1.bf16.msra.mxu0 %v1285
    %1649 = vmatprep.subr.bf16.mxu0 %v1294
    %1650 = vmatpush1.bf16.msra.mxu0 %v1293
    %1651 = vmatprep.subr.bf16.mxu0 %v1302
    %1652 = vmatpush1.bf16.msra.mxu0 %v1301
    %1653 = vmatprep.subr.bf16.mxu0 %v1310
    %1654 = vmatpush1.bf16.msra.mxu0 %v1309
    %1655 = vmatprep.subr.bf16.mxu0 %v1318
    %1656 = vmatpush1.bf16.msra.mxu0 %v1317
    %1657 = vmatprep.subr.bf16.mxu0 %v1326
    %1658 = vmatpush1.bf16.msra.mxu0 %v1325
    %1659 = vmatprep.subr.bf16.mxu0 %v1334
    %1660 = vmatpush1.bf16.msra.mxu0 %v1333
    %1661 = vmatprep.mubr.bf16.mxu0 %v1206
    %1662 = vmatmul.mubr.bf16.gmra.mrb[0].mxu0 %v1205
    %v1663 = vpop.f32.mrb[0].mxu0
    %v1664 = vadd.f32 0.0, %v1663
    %v1665 = vpop.f32.mrb[0].mxu0
    %v1666 = vadd.f32 0.0, %v1665
    %v1667 = vpop.f32.mrb[0].mxu0
    %v1668 = vpop.f32.mrb[0].mxu0
    %1669 = vdwg.mxu0
    %1670 = vmatprep.subr.bf16.mxu0 %v1342
    %1671 = vmatpush1.bf16.msra.mxu0 %v1341
    %1672 = vmatprep.subr.bf16.mxu0 %v1350
    %1673 = vmatpush1.bf16.msra.mxu0 %v1349
    %1674 = vmatprep.subr.bf16.mxu0 %v1358
    %1675 = vmatpush1.bf16.msra.mxu0 %v1357
    %1676 = vmatprep.subr.bf16.mxu0 %v1366
    %1677 = vmatpush1.bf16.msra.mxu0 %v1365
    %1678 = vmatprep.subr.bf16.mxu0 %v1374
    %1679 = vmatpush1.bf16.msra.mxu0 %v1373
    %1680 = vmatprep.subr.bf16.mxu0 %v1382
    %1681 = vmatpush1.bf16.msra.mxu0 %v1381
    %1682 = vmatprep.subr.bf16.mxu0 %v1390
    %1683 = vmatpush1.bf16.msra.mxu0 %v1389
    %1684 = vmatprep.subr.bf16.mxu0 %v1398
    %1685 = vmatpush1.bf16.msra.mxu0 %v1397
    %1686 = vmatprep.subr.bf16.mxu0 %v1406
    %1687 = vmatpush1.bf16.msra.mxu0 %v1405
    %1688 = vmatprep.subr.bf16.mxu0 %v1414
    %1689 = vmatpush1.bf16.msra.mxu0 %v1413
    %1690 = vmatprep.subr.bf16.mxu0 %v1422
    %1691 = vmatpush1.bf16.msra.mxu0 %v1421
    %1692 = vmatprep.subr.bf16.mxu0 %v1430
    %1693 = vmatpush1.bf16.msra.mxu0 %v1429
    %1694 = vmatprep.subr.bf16.mxu0 %v1438
    %1695 = vmatpush1.bf16.msra.mxu0 %v1437
    %1696 = vmatprep.subr.bf16.mxu0 %v1446
    %1697 = vmatpush1.bf16.msra.mxu0 %v1445
    %1698 = vmatprep.subr.bf16.mxu0 %v1454
    %1699 = vmatpush1.bf16.msra.mxu0 %v1453
    %1700 = vmatprep.subr.bf16.mxu0 %v1462
    %1701 = vmatpush1.bf16.msra.mxu0 %v1461
    %1702 = vmatprep.mubr.bf16.mxu0 %v1208
    %1703 = vmatmul.mubr.bf16.gmra.mrb[0].mxu0 %v1207
    %v1704 = vpop.f32.mrb[0].mxu0
    %v1705 = vadd.f32 %v1664, %v1704
    %v1706 = vpop.f32.mrb[0].mxu0
    %v1707 = vadd.f32 %v1666, %v1706
    %v1708 = vpop.f32.mrb[0].mxu0
    %v1709 = vpop.f32.mrb[0].mxu0
    %1710 = vdwg.mxu0
    %1711 = vmatprep.subr.bf16.mxu0 %v1216
    %1712 = vmatpush1.bf16.msra.mxu0 %v1215
    %1713 = vmatprep.subr.bf16.mxu0 %v1224
    %1714 = vmatpush1.bf16.msra.mxu0 %v1223
    %1715 = vmatprep.subr.bf16.mxu0 %v1232
    %1716 = vmatpush1.bf16.msra.mxu0 %v1231
    %1717 = vmatprep.subr.bf16.mxu0 %v1240
    %1718 = vmatpush1.bf16.msra.mxu0 %v1239
    %1719 = vmatprep.subr.bf16.mxu0 %v1248
    %1720 = vmatpush1.bf16.msra.mxu0 %v1247
    %1721 = vmatprep.subr.bf16.mxu0 %v1256
    %1722 = vmatpush1.bf16.msra.mxu0 %v1255
    %1723 = vmatprep.subr.bf16.mxu0 %v1264
    %1724 = vmatpush1.bf16.msra.mxu0 %v1263
    %1725 = vmatprep.subr.bf16.mxu0 %v1272
    %1726 = vmatpush1.bf16.msra.mxu0 %v1271
    %1727 = vmatprep.subr.bf16.mxu0 %v1280
    %1728 = vmatpush1.bf16.msra.mxu0 %v1279
    %1729 = vmatprep.subr.bf16.mxu0 %v1288
    %1730 = vmatpush1.bf16.msra.mxu0 %v1287
    %1731 = vmatprep.subr.bf16.mxu0 %v1296
    %1732 = vmatpush1.bf16.msra.mxu0 %v1295
    %1733 = vmatprep.subr.bf16.mxu0 %v1304
    %1734 = vmatpush1.bf16.msra.mxu0 %v1303
    %1735 = vmatprep.subr.bf16.mxu0 %v1312
    %1736 = vmatpush1.bf16.msra.mxu0 %v1311
    %1737 = vmatprep.subr.bf16.mxu0 %v1320
    %1738 = vmatpush1.bf16.msra.mxu0 %v1319
    %1739 = vmatprep.subr.bf16.mxu0 %v1328
    %1740 = vmatpush1.bf16.msra.mxu0 %v1327
    %1741 = vmatprep.subr.bf16.mxu0 %v1336
    %1742 = vmatpush1.bf16.msra.mxu0 %v1335
    %1743 = vmatprep.mubr.bf16.mxu0 %v1206
    %1744 = vmatmul.mubr.bf16.gmra.mrb[0].mxu0 %v1205
    %v1745 = vpop.f32.mrb[0].mxu0
    %v1746 = vadd.f32 0.0, %v1745
    %v1747 = vpop.f32.mrb[0].mxu0
    %v1748 = vadd.f32 0.0, %v1747
    %v1749 = vpop.f32.mrb[0].mxu0
    %v1750 = vpop.f32.mrb[0].mxu0
    %1751 = vdwg.mxu0
    %1752 = vmatprep.subr.bf16.mxu0 %v1344
    %1753 = vmatpush1.bf16.msra.mxu0 %v1343
    %1754 = vmatprep.subr.bf16.mxu0 %v1352
    %1755 = vmatpush1.bf16.msra.mxu0 %v1351
    %1756 = vmatprep.subr.bf16.mxu0 %v1360
    %1757 = vmatpush1.bf16.msra.mxu0 %v1359
    %1758 = vmatprep.subr.bf16.mxu0 %v1368
    %1759 = vmatpush1.bf16.msra.mxu0 %v1367
    %1760 = vmatprep.subr.bf16.mxu0 %v1376
    %1761 = vmatpush1.bf16.msra.mxu0 %v1375
    %1762 = vmatprep.subr.bf16.mxu0 %v1384
    %1763 = vmatpush1.bf16.msra.mxu0 %v1383
    %1764 = vmatprep.subr.bf16.mxu0 %v1392
    %1765 = vmatpush1.bf16.msra.mxu0 %v1391
    %1766 = vmatprep.subr.bf16.mxu0 %v1400
    %1767 = vmatpush1.bf16.msra.mxu0 %v1399
    %1768 = vmatprep.subr.bf16.mxu0 %v1408
    %1769 = vmatpush1.bf16.msra.mxu0 %v1407
    %1770 = vmatprep.subr.bf16.mxu0 %v1416
    %1771 = vmatpush1.bf16.msra.mxu0 %v1415
    %1772 = vmatprep.subr.bf16.mxu0 %v1424
    %1773 = vmatpush1.bf16.msra.mxu0 %v1423
    %1774 = vmatprep.subr.bf16.mxu0 %v1432
    %1775 = vmatpush1.bf16.msra.mxu0 %v1431
    %1776 = vmatprep.subr.bf16.mxu0 %v1440
    %1777 = vmatpush1.bf16.msra.mxu0 %v1439
    %1778 = vmatprep.subr.bf16.mxu0 %v1448
    %1779 = vmatpush1.bf16.msra.mxu0 %v1447
    %1780 = vmatprep.subr.bf16.mxu0 %v1456
    %1781 = vmatpush1.bf16.msra.mxu0 %v1455
    %1782 = vmatprep.subr.bf16.mxu0 %v1464
    %1783 = vmatpush1.bf16.msra.mxu0 %v1463
    %1784 = vmatprep.mubr.bf16.mxu0 %v1208
    %1785 = vmatmul.mubr.bf16.gmra.mrb[0].mxu0 %v1207
    %v1786 = vpop.f32.mrb[0].mxu0
    %v1787 = vadd.f32 %v1746, %v1786
    %v1788 = vpop.f32.mrb[0].mxu0
    %v1789 = vadd.f32 %v1748, %v1788
    %v1790 = vpop.f32.mrb[0].mxu0
    %v1791 = vpop.f32.mrb[0].mxu0
    %1792 = vdwg.mxu0
    %v1793 = vrot.slane %v1541, 4
    %v1794 = vadd.f32 %v1541, %v1793
    %v1795 = vrot.slane %v1794, 2
    %v1796 = vadd.f32 %v1794, %v1795
    %v1797 = vrot.slane %v1796, 1
    %v1798 = vadd.f32 %v1796, %v1797
    %v1799 = vrot.slane %v1543, 4
    %v1800 = vadd.f32 %v1543, %v1799
    %v1801 = vrot.slane %v1800, 2
    %v1802 = vadd.f32 %v1800, %v1801
    %v1803 = vrot.slane %v1802, 1
    %v1804 = vadd.f32 %v1802, %v1803
    %v1805 = vrot.slane %v1623, 4
    %v1806 = vadd.f32 %v1623, %v1805
    %v1807 = vrot.slane %v1806, 2
    %v1808 = vadd.f32 %v1806, %v1807
    %v1809 = vrot.slane %v1808, 1
    %v1810 = vadd.f32 %v1808, %v1809
    %v1811 = vrot.slane %v1625, 4
    %v1812 = vadd.f32 %v1625, %v1811
    %v1813 = vrot.slane %v1812, 2
    %v1814 = vadd.f32 %v1812, %v1813
    %v1815 = vrot.slane %v1814, 1
    %v1816 = vadd.f32 %v1814, %v1815
    %v1817 = vrot.slane %v1705, 4
    %v1818 = vadd.f32 %v1705, %v1817
    %v1819 = vrot.slane %v1818, 2
    %v1820 = vadd.f32 %v1818, %v1819
    %v1821 = vrot.slane %v1820, 1
    %v1822 = vadd.f32 %v1820, %v1821
    %v1823 = vrot.slane %v1707, 4
    %v1824 = vadd.f32 %v1707, %v1823
    %v1825 = vrot.slane %v1824, 2
    %v1826 = vadd.f32 %v1824, %v1825
    %v1827 = vrot.slane %v1826, 1
    %v1828 = vadd.f32 %v1826, %v1827
    %v1829 = vrot.slane %v1787, 4
    %v1830 = vadd.f32 %v1787, %v1829
    %v1831 = vrot.slane %v1830, 2
    %v1832 = vadd.f32 %v1830, %v1831
    %v1833 = vrot.slane %v1832, 1
    %v1834 = vadd.f32 %v1832, %v1833
    %v1835 = vrot.slane %v1789, 4
    %v1836 = vadd.f32 %v1789, %v1835
    %v1837 = vrot.slane %v1836, 2
    %v1838 = vadd.f32 %v1836, %v1837
    %v1839 = vrot.slane %v1838, 1
    %v1840 = vadd.f32 %v1838, %v1839
    %v1841 = vmul.f32 %v1798, 0.125
    %v1842 = vmul.f32 %v1804, 0.125
    %v1843 = vmul.f32 %v1810, 0.125
    %v1844 = vmul.f32 %v1816, 0.125
    %v1845 = vmul.f32 %v1822, 0.125
    %v1846 = vmul.f32 %v1828, 0.125
    %v1847 = vmul.f32 %v1834, 0.125
    %v1848 = vmul.f32 %v1840, 0.125
    %v1849 = vmul.f32 %v1541, %v1541
    %v1850 = vmul.f32 %v1543, %v1543
    %v1851 = vmul.f32 %v1623, %v1623
    %v1852 = vmul.f32 %v1625, %v1625
    %v1853 = vmul.f32 %v1705, %v1705
    %v1854 = vmul.f32 %v1707, %v1707
    %v1855 = vmul.f32 %v1787, %v1787
    %v1856 = vmul.f32 %v1789, %v1789
    %v1857 = vrot.slane %v1849, 4
    %v1858 = vadd.f32 %v1849, %v1857
    %v1859 = vrot.slane %v1858, 2
    %v1860 = vadd.f32 %v1858, %v1859
    %v1861 = vrot.slane %v1860, 1
    %v1862 = vadd.f32 %v1860, %v1861
    %v1863 = vrot.slane %v1850, 4
    %v1864 = vadd.f32 %v1850, %v1863
    %v1865 = vrot.slane %v1864, 2
    %v1866 = vadd.f32 %v1864, %v1865
    %v1867 = vrot.slane %v1866, 1
    %v1868 = vadd.f32 %v1866, %v1867
    %v1869 = vrot.slane %v1851, 4
    %v1870 = vadd.f32 %v1851, %v1869
    %v1871 = vrot.slane %v1870, 2
    %v1872 = vadd.f32 %v1870, %v1871
    %v1873 = vrot.slane %v1872, 1
    %v1874 = vadd.f32 %v1872, %v1873
    %v1875 = vrot.slane %v1852, 4
    %v1876 = vadd.f32 %v1852, %v1875
    %v1877 = vrot.slane %v1876, 2
    %v1878 = vadd.f32 %v1876, %v1877
    %v1879 = vrot.slane %v1878, 1
    %v1880 = vadd.f32 %v1878, %v1879
    %v1881 = vrot.slane %v1853, 4
    %v1882 = vadd.f32 %v1853, %v1881
    %v1883 = vrot.slane %v1882, 2
    %v1884 = vadd.f32 %v1882, %v1883
    %v1885 = vrot.slane %v1884, 1
    %v1886 = vadd.f32 %v1884, %v1885
    %v1887 = vrot.slane %v1854, 4
    %v1888 = vadd.f32 %v1854, %v1887
    %v1889 = vrot.slane %v1888, 2
    %v1890 = vadd.f32 %v1888, %v1889
    %v1891 = vrot.slane %v1890, 1
    %v1892 = vadd.f32 %v1890, %v1891
    %v1893 = vrot.slane %v1855, 4
    %v1894 = vadd.f32 %v1855, %v1893
    %v1895 = vrot.slane %v1894, 2
    %v1896 = vadd.f32 %v1894, %v1895
    %v1897 = vrot.slane %v1896, 1
    %v1898 = vadd.f32 %v1896, %v1897
    %v1899 = vrot.slane %v1856, 4
    %v1900 = vadd.f32 %v1856, %v1899
    %v1901 = vrot.slane %v1900, 2
    %v1902 = vadd.f32 %v1900, %v1901
    %v1903 = vrot.slane %v1902, 1
    %v1904 = vadd.f32 %v1902, %v1903
    %v1905 = vmul.f32 %v1862, 0.125
    %v1906 = vmul.f32 %v1868, 0.125
    %v1907 = vmul.f32 %v1874, 0.125
    %v1908 = vmul.f32 %v1880, 0.125
    %v1909 = vmul.f32 %v1886, 0.125
    %v1910 = vmul.f32 %v1892, 0.125
    %v1911 = vmul.f32 %v1898, 0.125
    %v1912 = vmul.f32 %v1904, 0.125
    %v1913 = vmul.f32 %v1841, %v1841
    %v1914 = vmul.f32 %v1842, %v1842
    %v1915 = vmul.f32 %v1843, %v1843
    %v1916 = vmul.f32 %v1844, %v1844
    %v1917 = vmul.f32 %v1845, %v1845
    %v1918 = vmul.f32 %v1846, %v1846
    %v1919 = vmul.f32 %v1847, %v1847
    %v1920 = vmul.f32 %v1848, %v1848
    %v1921 = vsub.f32 %v1905, %v1913
    %v1922 = vsub.f32 %v1906, %v1914
    %v1923 = vsub.f32 %v1907, %v1915
    %v1924 = vsub.f32 %v1908, %v1916
    %v1925 = vsub.f32 %v1909, %v1917
    %v1926 = vsub.f32 %v1910, %v1918
    %v1927 = vsub.f32 %v1911, %v1919
    %v1928 = vsub.f32 %v1912, %v1920
    %v1929 = vmul.f32 %v1203, %v1202
    %v1930 = vmul.f32 %v1202, %v1202
    %v1939 = vcombine.low %v1921, %v1922
    %v1940 = vcombine.low %v1923, %v1924
    %v1941 = vcombine.low %v1925, %v1926
    %v1942 = vcombine.low %v1927, %v1928
    %v1944 = vunpack.c.l.s4 1966171168
    %v1945 = vunpack.c.0.s8 %v1944
    %v1946 = vlaneseq
    %v1947 = vshrl.u32 %v1946, 7
    %v1948 = vsub.s32 %v1945, %v1947
    %v1949 = vrot.slane %v1939, %v1948
    %v1951 = vunpack.c.l.s4 1966171168
    %v1952 = vunpack.c.0.s8 %v1951
    %v1953 = vlaneseq
    %v1954 = vshrl.u32 %v1953, 7
    %v1955 = vsub.s32 %v1952, %v1954
    %v1956 = vrot.slane %v1940, %v1955
    %v1958 = vunpack.c.l.s4 1966171168
    %v1959 = vunpack.c.0.s8 %v1958
    %v1960 = vlaneseq
    %v1961 = vshrl.u32 %v1960, 7
    %v1962 = vsub.s32 %v1959, %v1961
    %v1963 = vrot.slane %v1941, %v1962
    %v1965 = vunpack.c.l.s4 1966171168
    %v1966 = vunpack.c.0.s8 %v1965
    %v1967 = vlaneseq
    %v1968 = vshrl.u32 %v1967, 7
    %v1969 = vsub.s32 %v1966, %v1968
    %v1970 = vrot.slane %v1942, %v1969
    %v1971 = vcombine.low %v1949, %v1956
    %v1972 = vcombine.low %v1963, %v1970
    %v1974 = vunpack.c.l.s4 1966171168
    %v1975 = vunpack.c.0.s8 %v1974
    %v1976 = vlaneseq
    %v1977 = vshrl.u32 %v1976, 7
    %v1978 = vsub.s32 %v1975, %v1977
    %v1979 = vrot.slane %v1971, %v1978
    %v1981 = vunpack.c.l.s4 1966171168
    %v1982 = vunpack.c.0.s8 %v1981
    %v1983 = vlaneseq
    %v1984 = vshrl.u32 %v1983, 7
    %v1985 = vsub.s32 %v1982, %v1984
    %v1986 = vrot.slane %v1972, %v1985
    %v1987 = vcombine.low %v1979, %v1986
    %v1989 = vmul.f32 %v1930, %v1987
    %v1990 = vadd.f32 %v1989, 0.8
    %v1991 = vrsqrt.pop %v1990
    %v1992 = vmul.f32 %v1929, %v1991
    %v1994 = vlaneseq
    %v1995 = vshrl.u32 %v1994, 7
    %v1996 = vsub.s32 0, %v1995
    %v1997 = vrot.slane %v1992, %v1996
    %v1998 = vlaneseq
    %v1999 = vshrl.u32 %v1998, 7
    %v2000 = vsub.s32 1, %v1999
    %v2001 = vrot.slane %v1992, %v2000
    %v2002 = vlaneseq
    %v2003 = vshrl.u32 %v2002, 7
    %v2004 = vsub.s32 2, %v2003
    %v2005 = vrot.slane %v1992, %v2004
    %v2006 = vlaneseq
    %v2007 = vshrl.u32 %v2006, 7
    %v2008 = vsub.s32 3, %v2007
    %v2009 = vrot.slane %v1992, %v2008
    %v2010 = vlaneseq
    %v2011 = vshrl.u32 %v2010, 7
    %v2012 = vsub.s32 4, %v2011
    %v2013 = vrot.slane %v1992, %v2012
    %v2014 = vlaneseq
    %v2015 = vshrl.u32 %v2014, 7
    %v2016 = vsub.s32 5, %v2015
    %v2017 = vrot.slane %v1992, %v2016
    %v2018 = vlaneseq
    %v2019 = vshrl.u32 %v2018, 7
    %v2020 = vsub.s32 6, %v2019
    %v2021 = vrot.slane %v1992, %v2020
    %v2022 = vlaneseq
    %v2023 = vshrl.u32 %v2022, 7
    %v2024 = vsub.s32 7, %v2023
    %v2025 = vrot.slane %v1992, %v2024
    %v2034 = vmul.f32 %v1841, %v1997
    %v2035 = vmul.f32 %v1842, %v2001
    %v2036 = vmul.f32 %v1843, %v2005
    %v2037 = vmul.f32 %v1844, %v2009
    %v2038 = vmul.f32 %v1845, %v2013
    %v2039 = vmul.f32 %v1846, %v2017
    %v2040 = vmul.f32 %v1847, %v2021
    %v2041 = vmul.f32 %v1848, %v2025
    %v2050 = vcombine.low %v2034, %v2035
    %v2051 = vcombine.low %v2036, %v2037
    %v2052 = vcombine.low %v2038, %v2039
    %v2053 = vcombine.low %v2040, %v2041
    %v2055 = vunpack.c.l.s4 1966171168
    %v2056 = vunpack.c.0.s8 %v2055
    %v2057 = vlaneseq
    %v2058 = vshrl.u32 %v2057, 7
    %v2059 = vsub.s32 %v2056, %v2058
    %v2060 = vrot.slane %v2050, %v2059
    %v2062 = vunpack.c.l.s4 1966171168
    %v2063 = vunpack.c.0.s8 %v2062
    %v2064 = vlaneseq
    %v2065 = vshrl.u32 %v2064, 7
    %v2066 = vsub.s32 %v2063, %v2065
    %v2067 = vrot.slane %v2051, %v2066
    %v2069 = vunpack.c.l.s4 1966171168
    %v2070 = vunpack.c.0.s8 %v2069
    %v2071 = vlaneseq
    %v2072 = vshrl.u32 %v2071, 7
    %v2073 = vsub.s32 %v2070, %v2072
    %v2074 = vrot.slane %v2052, %v2073
    %v2076 = vunpack.c.l.s4 1966171168
    %v2077 = vunpack.c.0.s8 %v2076
    %v2078 = vlaneseq
    %v2079 = vshrl.u32 %v2078, 7
    %v2080 = vsub.s32 %v2077, %v2079
    %v2081 = vrot.slane %v2053, %v2080
    %v2082 = vcombine.low %v2060, %v2067
    %v2083 = vcombine.low %v2074, %v2081
    %v2085 = vunpack.c.l.s4 1966171168
    %v2086 = vunpack.c.0.s8 %v2085
    %v2087 = vlaneseq
    %v2088 = vshrl.u32 %v2087, 7
    %v2089 = vsub.s32 %v2086, %v2088
    %v2090 = vrot.slane %v2082, %v2089
    %v2092 = vunpack.c.l.s4 1966171168
    %v2093 = vunpack.c.0.s8 %v2092
    %v2094 = vlaneseq
    %v2095 = vshrl.u32 %v2094, 7
    %v2096 = vsub.s32 %v2093, %v2095
    %v2097 = vrot.slane %v2083, %v2096
    %v2098 = vcombine.low %v2090, %v2097
    %v2100 = vsub.f32 %v1204, %v2098
    %v2101 = vmul.f32 %v1541, %v1997
    %v2102 = vmul.f32 %v1543, %v2001
    %v2103 = vmul.f32 %v1623, %v2005
    %v2104 = vmul.f32 %v1625, %v2009
    %v2105 = vmul.f32 %v1705, %v2013
    %v2106 = vmul.f32 %v1707, %v2017
    %v2107 = vmul.f32 %v1787, %v2021
    %v2108 = vmul.f32 %v1789, %v2025
    %v2110 = vlaneseq
    %v2111 = vshrl.u32 %v2110, 7
    %v2112 = vsub.s32 0, %v2111
    %v2113 = vrot.slane %v2100, %v2112
    %v2114 = vlaneseq
    %v2115 = vshrl.u32 %v2114, 7
    %v2116 = vsub.s32 1, %v2115
    %v2117 = vrot.slane %v2100, %v2116
    %v2118 = vlaneseq
    %v2119 = vshrl.u32 %v2118, 7
    %v2120 = vsub.s32 2, %v2119
    %v2121 = vrot.slane %v2100, %v2120
    %v2122 = vlaneseq
    %v2123 = vshrl.u32 %v2122, 7
    %v2124 = vsub.s32 3, %v2123
    %v2125 = vrot.slane %v2100, %v2124
    %v2126 = vlaneseq
    %v2127 = vshrl.u32 %v2126, 7
    %v2128 = vsub.s32 4, %v2127
    %v2129 = vrot.slane %v2100, %v2128
    %v2130 = vlaneseq
    %v2131 = vshrl.u32 %v2130, 7
    %v2132 = vsub.s32 5, %v2131
    %v2133 = vrot.slane %v2100, %v2132
    %v2134 = vlaneseq
    %v2135 = vshrl.u32 %v2134, 7
    %v2136 = vsub.s32 6, %v2135
    %v2137 = vrot.slane %v2100, %v2136
    %v2138 = vlaneseq
    %v2139 = vshrl.u32 %v2138, 7
    %v2140 = vsub.s32 7, %v2139
    %v2141 = vrot.slane %v2100, %v2140
    %v2150 = vadd.f32 %v2101, %v2113
    %v2151 = vadd.f32 %v2102, %v2117
    %v2152 = vadd.f32 %v2103, %v2121
    %v2153 = vadd.f32 %v2104, %v2125
    %v2154 = vadd.f32 %v2105, %v2129
    %v2155 = vadd.f32 %v2106, %v2133
    %v2156 = vadd.f32 %v2107, %v2137
    %v2157 = vadd.f32 %v2108, %v2141
    %vm2158 = vcmp.gt.f32.partialorder %v2150, 0.0
    %vm2159 = vcmp.gt.f32.partialorder %v2151, 0.0
    %vm2160 = vcmp.gt.f32.partialorder %v2152, 0.0
    %vm2161 = vcmp.gt.f32.partialorder %v2153, 0.0
    %vm2162 = vcmp.gt.f32.partialorder %v2154, 0.0
    %vm2163 = vcmp.gt.f32.partialorder %v2155, 0.0
    %vm2164 = vcmp.gt.f32.partialorder %v2156, 0.0
    %vm2165 = vcmp.gt.f32.partialorder %v2157, 0.0
    %v2166 = vmul.f32 %v2150, 0.2
    %v2167 = vmul.f32 %v2151, 0.2
    %v2168 = vmul.f32 %v2152, 0.2
    %v2169 = vmul.f32 %v2153, 0.2
    %v2170 = vmul.f32 %v2154, 0.2
    %v2171 = vmul.f32 %v2155, 0.2
    %v2172 = vmul.f32 %v2156, 0.2
    %v2173 = vmul.f32 %v2157, 0.2
    %v2174 = vsel %vm2158, %v2150, %v2166
    %v2175 = vsel %vm2159, %v2151, %v2167
    %v2176 = vsel %vm2160, %v2152, %v2168
    %v2177 = vsel %vm2161, %v2153, %v2169
    %v2178 = vsel %vm2162, %v2154, %v2170
    %v2179 = vsel %vm2163, %v2155, %v2171
    %v2180 = vsel %vm2164, %v2156, %v2172
    %v2181 = vsel %vm2165, %v2157, %v2173
    %s2182 = smul.u32 2, 128
    %s2183 = smul.u32 %s2182, 7
    %s2184 = sshll.u32 %s2183, 4
    %2185 = dma.done %s204, %s2184
    %v2186 = vpack.c.bf16 %v2174, %v2174
    %v2187 = vpack.c.bf16 %v2175, %v2175
    %v2188 = vpack.c.bf16 %v2176, %v2176
    %v2189 = vpack.c.bf16 %v2177, %v2177
    %v2190 = vpack.c.bf16 %v2178, %v2178
    %v2191 = vpack.c.bf16 %v2179, %v2179
    %v2192 = vpack.c.bf16 %v2180, %v2180
    %v2193 = vpack.c.bf16 %v2181, %v2181
    %v2194 = vld [vmem:[#allocation3] sm:$0xff]
    %v2195 = vld [vmem:[#allocation3 + $0x8] sm:$0xff]
    %v2196 = vld [vmem:[#allocation3 + $0x10] sm:$0xff]
    %v2197 = vld [vmem:[#allocation3 + $0x18] sm:$0xff]
    %v2198 = vld [vmem:[#allocation3 + $0x20] sm:$0xff]
    %v2199 = vld [vmem:[#allocation3 + $0x28] sm:$0xff]
    %v2200 = vld [vmem:[#allocation3 + $0x30] sm:$0xff]
    %v2201 = vld [vmem:[#allocation3 + $0x38] sm:$0xff]
    %v2202 = vld [vmem:[#allocation3 + $0x40] sm:$0xff]
    %v2203 = vld [vmem:[#allocation3 + $0x48] sm:$0xff]
    %v2204 = vld [vmem:[#allocation3 + $0x50] sm:$0xff]
    %v2205 = vld [vmem:[#allocation3 + $0x58] sm:$0xff]
    %v2206 = vld [vmem:[#allocation3 + $0x60] sm:$0xff]
    %v2207 = vld [vmem:[#allocation3 + $0x68] sm:$0xff]
    %v2208 = vld [vmem:[#allocation3 + $0x70] sm:$0xff]
    %v2209 = vld [vmem:[#allocation3 + $0x78] sm:$0xff]
    %v2210 = vld [vmem:[#allocation3 + $0x80] sm:$0xff]
    %v2211 = vld [vmem:[#allocation3 + $0x88] sm:$0xff]
    %v2212 = vld [vmem:[#allocation3 + $0x90] sm:$0xff]
    %v2213 = vld [vmem:[#allocation3 + $0x98] sm:$0xff]
    %v2214 = vld [vmem:[#allocation3 + $0xa0] sm:$0xff]
    %v2215 = vld [vmem:[#allocation3 + $0xa8] sm:$0xff]
    %v2216 = vld [vmem:[#allocation3 + $0xb0] sm:$0xff]
    %v2217 = vld [vmem:[#allocation3 + $0xb8] sm:$0xff]
    %v2218 = vld [vmem:[#allocation3 + $0xc0] sm:$0xff]
    %v2219 = vld [vmem:[#allocation3 + $0xc8] sm:$0xff]
    %v2220 = vld [vmem:[#allocation3 + $0xd0] sm:$0xff]
    %v2221 = vld [vmem:[#allocation3 + $0xd8] sm:$0xff]
    %v2222 = vld [vmem:[#allocation3 + $0xe0] sm:$0xff]
    %v2223 = vld [vmem:[#allocation3 + $0xe8] sm:$0xff]
    %v2224 = vld [vmem:[#allocation3 + $0xf0] sm:$0xff]
    %v2225 = vld [vmem:[#allocation3 + $0xf8] sm:$0xff]
    %v2226 = vld [vmem:[#allocation3 + $0x100] sm:$0xff]
    %v2227 = vld [vmem:[#allocation3 + $0x108] sm:$0xff]
    %v2228 = vld [vmem:[#allocation3 + $0x110] sm:$0xff]
    %v2229 = vld [vmem:[#allocation3 + $0x118] sm:$0xff]
    %v2230 = vld [vmem:[#allocation3 + $0x120] sm:$0xff]
    %v2231 = vld [vmem:[#allocation3 + $0x128] sm:$0xff]
    %v2232 = vld [vmem:[#allocation3 + $0x130] sm:$0xff]
    %v2233 = vld [vmem:[#allocation3 + $0x138] sm:$0xff]
    %v2234 = vld [vmem:[#allocation3 + $0x140] sm:$0xff]
    %v2235 = vld [vmem:[#allocation3 + $0x148] sm:$0xff]
    %v2236 = vld [vmem:[#allocation3 + $0x150] sm:$0xff]
    %v2237 = vld [vmem:[#allocation3 + $0x158] sm:$0xff]
    %v2238 = vld [vmem:[#allocation3 + $0x160] sm:$0xff]
    %v2239 = vld [vmem:[#allocation3 + $0x168] sm:$0xff]
    %v2240 = vld [vmem:[#allocation3 + $0x170] sm:$0xff]
    %v2241 = vld [vmem:[#allocation3 + $0x178] sm:$0xff]
    %v2242 = vld [vmem:[#allocation3 + $0x180] sm:$0xff]
    %v2243 = vld [vmem:[#allocation3 + $0x188] sm:$0xff]
    %v2244 = vld [vmem:[#allocation3 + $0x190] sm:$0xff]
    %v2245 = vld [vmem:[#allocation3 + $0x198] sm:$0xff]
    %v2246 = vld [vmem:[#allocation3 + $0x1a0] sm:$0xff]
    %v2247 = vld [vmem:[#allocation3 + $0x1a8] sm:$0xff]
    %v2248 = vld [vmem:[#allocation3 + $0x1b0] sm:$0xff]
    %v2249 = vld [vmem:[#allocation3 + $0x1b8] sm:$0xff]
    %v2250 = vld [vmem:[#allocation3 + $0x1c0] sm:$0xff]
    %v2251 = vld [vmem:[#allocation3 + $0x1c8] sm:$0xff]
    %v2252 = vld [vmem:[#allocation3 + $0x1d0] sm:$0xff]
    %v2253 = vld [vmem:[#allocation3 + $0x1d8] sm:$0xff]
    %v2254 = vld [vmem:[#allocation3 + $0x1e0] sm:$0xff]
    %v2255 = vld [vmem:[#allocation3 + $0x1e8] sm:$0xff]
    %v2256 = vld [vmem:[#allocation3 + $0x1f0] sm:$0xff]
    %v2257 = vld [vmem:[#allocation3 + $0x1f8] sm:$0xff]
    %v2258 = vld [vmem:[#allocation3 + $0x200] sm:$0xff]
    %v2259 = vld [vmem:[#allocation3 + $0x208] sm:$0xff]
    %v2260 = vld [vmem:[#allocation3 + $0x210] sm:$0xff]
    %v2261 = vld [vmem:[#allocation3 + $0x218] sm:$0xff]
    %v2262 = vld [vmem:[#allocation3 + $0x220] sm:$0xff]
    %v2263 = vld [vmem:[#allocation3 + $0x228] sm:$0xff]
    %v2264 = vld [vmem:[#allocation3 + $0x230] sm:$0xff]
    %v2265 = vld [vmem:[#allocation3 + $0x238] sm:$0xff]
    %v2266 = vld [vmem:[#allocation3 + $0x240] sm:$0xff]
    %v2267 = vld [vmem:[#allocation3 + $0x248] sm:$0xff]
    %v2268 = vld [vmem:[#allocation3 + $0x250] sm:$0xff]
    %v2269 = vld [vmem:[#allocation3 + $0x258] sm:$0xff]
    %v2270 = vld [vmem:[#allocation3 + $0x260] sm:$0xff]
    %v2271 = vld [vmem:[#allocation3 + $0x268] sm:$0xff]
    %v2272 = vld [vmem:[#allocation3 + $0x270] sm:$0xff]
    %v2273 = vld [vmem:[#allocation3 + $0x278] sm:$0xff]
    %v2274 = vld [vmem:[#allocation3 + $0x280] sm:$0xff]
    %v2275 = vld [vmem:[#allocation3 + $0x288] sm:$0xff]
    %v2276 = vld [vmem:[#allocation3 + $0x290] sm:$0xff]
    %v2277 = vld [vmem:[#allocation3 + $0x298] sm:$0xff]
    %v2278 = vld [vmem:[#allocation3 + $0x2a0] sm:$0xff]
    %v2279 = vld [vmem:[#allocation3 + $0x2a8] sm:$0xff]
    %v2280 = vld [vmem:[#allocation3 + $0x2b0] sm:$0xff]
    %v2281 = vld [vmem:[#allocation3 + $0x2b8] sm:$0xff]
    %v2282 = vld [vmem:[#allocation3 + $0x2c0] sm:$0xff]
    %v2283 = vld [vmem:[#allocation3 + $0x2c8] sm:$0xff]
    %v2284 = vld [vmem:[#allocation3 + $0x2d0] sm:$0xff]
    %v2285 = vld [vmem:[#allocation3 + $0x2d8] sm:$0xff]
    %v2286 = vld [vmem:[#allocation3 + $0x2e0] sm:$0xff]
    %v2287 = vld [vmem:[#allocation3 + $0x2e8] sm:$0xff]
    %v2288 = vld [vmem:[#allocation3 + $0x2f0] sm:$0xff]
    %v2289 = vld [vmem:[#allocation3 + $0x2f8] sm:$0xff]
    %v2290 = vld [vmem:[#allocation3 + $0x300] sm:$0xff]
    %v2291 = vld [vmem:[#allocation3 + $0x308] sm:$0xff]
    %v2292 = vld [vmem:[#allocation3 + $0x310] sm:$0xff]
    %v2293 = vld [vmem:[#allocation3 + $0x318] sm:$0xff]
    %v2294 = vld [vmem:[#allocation3 + $0x320] sm:$0xff]
    %v2295 = vld [vmem:[#allocation3 + $0x328] sm:$0xff]
    %v2296 = vld [vmem:[#allocation3 + $0x330] sm:$0xff]
    %v2297 = vld [vmem:[#allocation3 + $0x338] sm:$0xff]
    %v2298 = vld [vmem:[#allocation3 + $0x340] sm:$0xff]
    %v2299 = vld [vmem:[#allocation3 + $0x348] sm:$0xff]
    %v2300 = vld [vmem:[#allocation3 + $0x350] sm:$0xff]
    %v2301 = vld [vmem:[#allocation3 + $0x358] sm:$0xff]
    %v2302 = vld [vmem:[#allocation3 + $0x360] sm:$0xff]
    %v2303 = vld [vmem:[#allocation3 + $0x368] sm:$0xff]
    %v2304 = vld [vmem:[#allocation3 + $0x370] sm:$0xff]
    %v2305 = vld [vmem:[#allocation3 + $0x378] sm:$0xff]
    %v2306 = vld [vmem:[#allocation3 + $0x380] sm:$0xff]
    %v2307 = vld [vmem:[#allocation3 + $0x388] sm:$0xff]
    %v2308 = vld [vmem:[#allocation3 + $0x390] sm:$0xff]
    %v2309 = vld [vmem:[#allocation3 + $0x398] sm:$0xff]
    %v2310 = vld [vmem:[#allocation3 + $0x3a0] sm:$0xff]
    %v2311 = vld [vmem:[#allocation3 + $0x3a8] sm:$0xff]
    %v2312 = vld [vmem:[#allocation3 + $0x3b0] sm:$0xff]
    %v2313 = vld [vmem:[#allocation3 + $0x3b8] sm:$0xff]
    %v2314 = vld [vmem:[#allocation3 + $0x3c0] sm:$0xff]
    %v2315 = vld [vmem:[#allocation3 + $0x3c8] sm:$0xff]
    %v2316 = vld [vmem:[#allocation3 + $0x3d0] sm:$0xff]
    %v2317 = vld [vmem:[#allocation3 + $0x3d8] sm:$0xff]
    %v2318 = vld [vmem:[#allocation3 + $0x3e0] sm:$0xff]
    %v2319 = vld [vmem:[#allocation3 + $0x3e8] sm:$0xff]
    %v2320 = vld [vmem:[#allocation3 + $0x3f0] sm:$0xff]
    %v2321 = vld [vmem:[#allocation3 + $0x3f8] sm:$0xff]
    %v2322 = vld [vmem:[#allocation3 + $0x400] sm:$0xff]
    %v2323 = vld [vmem:[#allocation3 + $0x408] sm:$0xff]
    %v2324 = vld [vmem:[#allocation3 + $0x410] sm:$0xff]
    %v2325 = vld [vmem:[#allocation3 + $0x418] sm:$0xff]
    %v2326 = vld [vmem:[#allocation3 + $0x420] sm:$0xff]
    %v2327 = vld [vmem:[#allocation3 + $0x428] sm:$0xff]
    %v2328 = vld [vmem:[#allocation3 + $0x430] sm:$0xff]
    %v2329 = vld [vmem:[#allocation3 + $0x438] sm:$0xff]
    %v2330 = vld [vmem:[#allocation3 + $0x440] sm:$0xff]
    %v2331 = vld [vmem:[#allocation3 + $0x448] sm:$0xff]
    %v2332 = vld [vmem:[#allocation3 + $0x450] sm:$0xff]
    %v2333 = vld [vmem:[#allocation3 + $0x458] sm:$0xff]
    %v2334 = vld [vmem:[#allocation3 + $0x460] sm:$0xff]
    %v2335 = vld [vmem:[#allocation3 + $0x468] sm:$0xff]
    %v2336 = vld [vmem:[#allocation3 + $0x470] sm:$0xff]
    %v2337 = vld [vmem:[#allocation3 + $0x478] sm:$0xff]
    %v2338 = vld [vmem:[#allocation3 + $0x480] sm:$0xff]
    %v2339 = vld [vmem:[#allocation3 + $0x488] sm:$0xff]
    %v2340 = vld [vmem:[#allocation3 + $0x490] sm:$0xff]
    %v2341 = vld [vmem:[#allocation3 + $0x498] sm:$0xff]
    %v2342 = vld [vmem:[#allocation3 + $0x4a0] sm:$0xff]
    %v2343 = vld [vmem:[#allocation3 + $0x4a8] sm:$0xff]
    %v2344 = vld [vmem:[#allocation3 + $0x4b0] sm:$0xff]
    %v2345 = vld [vmem:[#allocation3 + $0x4b8] sm:$0xff]
    %v2346 = vld [vmem:[#allocation3 + $0x4c0] sm:$0xff]
    %v2347 = vld [vmem:[#allocation3 + $0x4c8] sm:$0xff]
    %v2348 = vld [vmem:[#allocation3 + $0x4d0] sm:$0xff]
    %v2349 = vld [vmem:[#allocation3 + $0x4d8] sm:$0xff]
    %v2350 = vld [vmem:[#allocation3 + $0x4e0] sm:$0xff]
    %v2351 = vld [vmem:[#allocation3 + $0x4e8] sm:$0xff]
    %v2352 = vld [vmem:[#allocation3 + $0x4f0] sm:$0xff]
    %v2353 = vld [vmem:[#allocation3 + $0x4f8] sm:$0xff]
    %v2354 = vld [vmem:[#allocation3 + $0x500] sm:$0xff]
    %v2355 = vld [vmem:[#allocation3 + $0x508] sm:$0xff]
    %v2356 = vld [vmem:[#allocation3 + $0x510] sm:$0xff]
    %v2357 = vld [vmem:[#allocation3 + $0x518] sm:$0xff]
    %v2358 = vld [vmem:[#allocation3 + $0x520] sm:$0xff]
    %v2359 = vld [vmem:[#allocation3 + $0x528] sm:$0xff]
    %v2360 = vld [vmem:[#allocation3 + $0x530] sm:$0xff]
    %v2361 = vld [vmem:[#allocation3 + $0x538] sm:$0xff]
    %v2362 = vld [vmem:[#allocation3 + $0x540] sm:$0xff]
    %v2363 = vld [vmem:[#allocation3 + $0x548] sm:$0xff]
    %v2364 = vld [vmem:[#allocation3 + $0x550] sm:$0xff]
    %v2365 = vld [vmem:[#allocation3 + $0x558] sm:$0xff]
    %v2366 = vld [vmem:[#allocation3 + $0x560] sm:$0xff]
    %v2367 = vld [vmem:[#allocation3 + $0x568] sm:$0xff]
    %v2368 = vld [vmem:[#allocation3 + $0x570] sm:$0xff]
    %v2369 = vld [vmem:[#allocation3 + $0x578] sm:$0xff]
    %v2370 = vld [vmem:[#allocation3 + $0x580] sm:$0xff]
    %v2371 = vld [vmem:[#allocation3 + $0x588] sm:$0xff]
    %v2372 = vld [vmem:[#allocation3 + $0x590] sm:$0xff]
    %v2373 = vld [vmem:[#allocation3 + $0x598] sm:$0xff]
    %v2374 = vld [vmem:[#allocation3 + $0x5a0] sm:$0xff]
    %v2375 = vld [vmem:[#allocation3 + $0x5a8] sm:$0xff]
    %v2376 = vld [vmem:[#allocation3 + $0x5b0] sm:$0xff]
    %v2377 = vld [vmem:[#allocation3 + $0x5b8] sm:$0xff]
    %v2378 = vld [vmem:[#allocation3 + $0x5c0] sm:$0xff]
    %v2379 = vld [vmem:[#allocation3 + $0x5c8] sm:$0xff]
    %v2380 = vld [vmem:[#allocation3 + $0x5d0] sm:$0xff]
    %v2381 = vld [vmem:[#allocation3 + $0x5d8] sm:$0xff]
    %v2382 = vld [vmem:[#allocation3 + $0x5e0] sm:$0xff]
    %v2383 = vld [vmem:[#allocation3 + $0x5e8] sm:$0xff]
    %v2384 = vld [vmem:[#allocation3 + $0x5f0] sm:$0xff]
    %v2385 = vld [vmem:[#allocation3 + $0x5f8] sm:$0xff]
    %v2386 = vld [vmem:[#allocation3 + $0x600] sm:$0xff]
    %v2387 = vld [vmem:[#allocation3 + $0x608] sm:$0xff]
    %v2388 = vld [vmem:[#allocation3 + $0x610] sm:$0xff]
    %v2389 = vld [vmem:[#allocation3 + $0x618] sm:$0xff]
    %v2390 = vld [vmem:[#allocation3 + $0x620] sm:$0xff]
    %v2391 = vld [vmem:[#allocation3 + $0x628] sm:$0xff]
    %v2392 = vld [vmem:[#allocation3 + $0x630] sm:$0xff]
    %v2393 = vld [vmem:[#allocation3 + $0x638] sm:$0xff]
    %v2394 = vld [vmem:[#allocation3 + $0x640] sm:$0xff]
    %v2395 = vld [vmem:[#allocation3 + $0x648] sm:$0xff]
    %v2396 = vld [vmem:[#allocation3 + $0x650] sm:$0xff]
    %v2397 = vld [vmem:[#allocation3 + $0x658] sm:$0xff]
    %v2398 = vld [vmem:[#allocation3 + $0x660] sm:$0xff]
    %v2399 = vld [vmem:[#allocation3 + $0x668] sm:$0xff]
    %v2400 = vld [vmem:[#allocation3 + $0x670] sm:$0xff]
    %v2401 = vld [vmem:[#allocation3 + $0x678] sm:$0xff]
    %v2402 = vld [vmem:[#allocation3 + $0x680] sm:$0xff]
    %v2403 = vld [vmem:[#allocation3 + $0x688] sm:$0xff]
    %v2404 = vld [vmem:[#allocation3 + $0x690] sm:$0xff]
    %v2405 = vld [vmem:[#allocation3 + $0x698] sm:$0xff]
    %v2406 = vld [vmem:[#allocation3 + $0x6a0] sm:$0xff]
    %v2407 = vld [vmem:[#allocation3 + $0x6a8] sm:$0xff]
    %v2408 = vld [vmem:[#allocation3 + $0x6b0] sm:$0xff]
    %v2409 = vld [vmem:[#allocation3 + $0x6b8] sm:$0xff]
    %v2410 = vld [vmem:[#allocation3 + $0x6c0] sm:$0xff]
    %v2411 = vld [vmem:[#allocation3 + $0x6c8] sm:$0xff]
    %v2412 = vld [vmem:[#allocation3 + $0x6d0] sm:$0xff]
    %v2413 = vld [vmem:[#allocation3 + $0x6d8] sm:$0xff]
    %v2414 = vld [vmem:[#allocation3 + $0x6e0] sm:$0xff]
    %v2415 = vld [vmem:[#allocation3 + $0x6e8] sm:$0xff]
    %v2416 = vld [vmem:[#allocation3 + $0x6f0] sm:$0xff]
    %v2417 = vld [vmem:[#allocation3 + $0x6f8] sm:$0xff]
    %v2418 = vunpack.c.l.s8.bf16 %v2194
    %v2419 = vunpack.c.l.s8.bf16 %v2195
    %v2420 = vunpack.c.l.s8.bf16 %v2196
    %v2421 = vunpack.c.l.s8.bf16 %v2197
    %v2422 = vunpack.c.l.s8.bf16 %v2198
    %v2423 = vunpack.c.l.s8.bf16 %v2199
    %v2424 = vunpack.c.l.s8.bf16 %v2200
    %v2425 = vunpack.c.h.s8.bf16 %v2194
    %v2426 = vunpack.c.h.s8.bf16 %v2195
    %v2427 = vunpack.c.h.s8.bf16 %v2196
    %v2428 = vunpack.c.h.s8.bf16 %v2197
    %v2429 = vunpack.c.h.s8.bf16 %v2198
    %v2430 = vunpack.c.h.s8.bf16 %v2199
    %v2431 = vunpack.c.h.s8.bf16 %v2200
    %v2432 = vunpack.c.l.s8.bf16 %v2201
    %v2433 = vunpack.c.l.s8.bf16 %v2202
    %v2434 = vunpack.c.l.s8.bf16 %v2203
    %v2435 = vunpack.c.l.s8.bf16 %v2204
    %v2436 = vunpack.c.l.s8.bf16 %v2205
    %v2437 = vunpack.c.l.s8.bf16 %v2206
    %v2438 = vunpack.c.l.s8.bf16 %v2207
    %v2439 = vunpack.c.h.s8.bf16 %v2201
    %v2440 = vunpack.c.h.s8.bf16 %v2202
    %v2441 = vunpack.c.h.s8.bf16 %v2203
    %v2442 = vunpack.c.h.s8.bf16 %v2204
    %v2443 = vunpack.c.h.s8.bf16 %v2205
    %v2444 = vunpack.c.h.s8.bf16 %v2206
    %v2445 = vunpack.c.h.s8.bf16 %v2207
    %v2446 = vunpack.c.l.s8.bf16 %v2208
    %v2447 = vunpack.c.l.s8.bf16 %v2209
    %v2448 = vunpack.c.l.s8.bf16 %v2210
    %v2449 = vunpack.c.l.s8.bf16 %v2211
    %v2450 = vunpack.c.l.s8.bf16 %v2212
    %v2451 = vunpack.c.l.s8.bf16 %v2213
    %v2452 = vunpack.c.l.s8.bf16 %v2214
    %v2453 = vunpack.c.h.s8.bf16 %v2208
    %v2454 = vunpack.c.h.s8.bf16 %v2209
    %v2455 = vunpack.c.h.s8.bf16 %v2210
    %v2456 = vunpack.c.h.s8.bf16 %v2211
    %v2457 = vunpack.c.h.s8.bf16 %v2212
    %v2458 = vunpack.c.h.s8.bf16 %v2213
    %v2459 = vunpack.c.h.s8.bf16 %v2214
    %v2460 = vunpack.c.l.s8.bf16 %v2215
    %v2461 = vunpack.c.l.s8.bf16 %v2216
    %v2462 = vunpack.c.l.s8.bf16 %v2217
    %v2463 = vunpack.c.l.s8.bf16 %v2218
    %v2464 = vunpack.c.l.s8.bf16 %v2219
    %v2465 = vunpack.c.l.s8.bf16 %v2220
    %v2466 = vunpack.c.l.s8.bf16 %v2221
    %v2467 = vunpack.c.h.s8.bf16 %v2215
    %v2468 = vunpack.c.h.s8.bf16 %v2216
    %v2469 = vunpack.c.h.s8.bf16 %v2217
    %v2470 = vunpack.c.h.s8.bf16 %v2218
    %v2471 = vunpack.c.h.s8.bf16 %v2219
    %v2472 = vunpack.c.h.s8.bf16 %v2220
    %v2473 = vunpack.c.h.s8.bf16 %v2221
    %v2474 = vunpack.c.l.s8.bf16 %v2222
    %v2475 = vunpack.c.l.s8.bf16 %v2223
    %v2476 = vunpack.c.l.s8.bf16 %v2224
    %v2477 = vunpack.c.l.s8.bf16 %v2225
    %v2478 = vunpack.c.l.s8.bf16 %v2226
    %v2479 = vunpack.c.l.s8.bf16 %v2227
    %v2480 = vunpack.c.l.s8.bf16 %v2228
    %v2481 = vunpack.c.h.s8.bf16 %v2222
    %v2482 = vunpack.c.h.s8.bf16 %v2223
    %v2483 = vunpack.c.h.s8.bf16 %v2224
    %v2484 = vunpack.c.h.s8.bf16 %v2225
    %v2485 = vunpack.c.h.s8.bf16 %v2226
    %v2486 = vunpack.c.h.s8.bf16 %v2227
    %v2487 = vunpack.c.h.s8.bf16 %v2228
    %v2488 = vunpack.c.l.s8.bf16 %v2229
    %v2489 = vunpack.c.l.s8.bf16 %v2230
    %v2490 = vunpack.c.l.s8.bf16 %v2231
    %v2491 = vunpack.c.l.s8.bf16 %v2232
    %v2492 = vunpack.c.l.s8.bf16 %v2233
    %v2493 = vunpack.c.l.s8.bf16 %v2234
    %v2494 = vunpack.c.l.s8.bf16 %v2235
    %v2495 = vunpack.c.h.s8.bf16 %v2229
    %v2496 = vunpack.c.h.s8.bf16 %v2230
    %v2497 = vunpack.c.h.s8.bf16 %v2231
    %v2498 = vunpack.c.h.s8.bf16 %v2232
    %v2499 = vunpack.c.h.s8.bf16 %v2233
    %v2500 = vunpack.c.h.s8.bf16 %v2234
    %v2501 = vunpack.c.h.s8.bf16 %v2235
    %v2502 = vunpack.c.l.s8.bf16 %v2236
    %v2503 = vunpack.c.l.s8.bf16 %v2237
    %v2504 = vunpack.c.l.s8.bf16 %v2238
    %v2505 = vunpack.c.l.s8.bf16 %v2239
    %v2506 = vunpack.c.l.s8.bf16 %v2240
    %v2507 = vunpack.c.l.s8.bf16 %v2241
    %v2508 = vunpack.c.l.s8.bf16 %v2242
    %v2509 = vunpack.c.h.s8.bf16 %v2236
    %v2510 = vunpack.c.h.s8.bf16 %v2237
    %v2511 = vunpack.c.h.s8.bf16 %v2238
    %v2512 = vunpack.c.h.s8.bf16 %v2239
    %v2513 = vunpack.c.h.s8.bf16 %v2240
    %v2514 = vunpack.c.h.s8.bf16 %v2241
    %v2515 = vunpack.c.h.s8.bf16 %v2242
    %v2516 = vunpack.c.l.s8.bf16 %v2243
    %v2517 = vunpack.c.l.s8.bf16 %v2244
    %v2518 = vunpack.c.l.s8.bf16 %v2245
    %v2519 = vunpack.c.l.s8.bf16 %v2246
    %v2520 = vunpack.c.l.s8.bf16 %v2247
    %v2521 = vunpack.c.l.s8.bf16 %v2248
    %v2522 = vunpack.c.l.s8.bf16 %v2249
    %v2523 = vunpack.c.h.s8.bf16 %v2243
    %v2524 = vunpack.c.h.s8.bf16 %v2244
    %v2525 = vunpack.c.h.s8.bf16 %v2245
    %v2526 = vunpack.c.h.s8.bf16 %v2246
    %v2527 = vunpack.c.h.s8.bf16 %v2247
    %v2528 = vunpack.c.h.s8.bf16 %v2248
    %v2529 = vunpack.c.h.s8.bf16 %v2249
    %v2530 = vunpack.c.l.s8.bf16 %v2250
    %v2531 = vunpack.c.l.s8.bf16 %v2251
    %v2532 = vunpack.c.l.s8.bf16 %v2252
    %v2533 = vunpack.c.l.s8.bf16 %v2253
    %v2534 = vunpack.c.l.s8.bf16 %v2254
    %v2535 = vunpack.c.l.s8.bf16 %v2255
    %v2536 = vunpack.c.l.s8.bf16 %v2256
    %v2537 = vunpack.c.h.s8.bf16 %v2250
    %v2538 = vunpack.c.h.s8.bf16 %v2251
    %v2539 = vunpack.c.h.s8.bf16 %v2252
    %v2540 = vunpack.c.h.s8.bf16 %v2253
    %v2541 = vunpack.c.h.s8.bf16 %v2254
    %v2542 = vunpack.c.h.s8.bf16 %v2255
    %v2543 = vunpack.c.h.s8.bf16 %v2256
    %v2544 = vunpack.c.l.s8.bf16 %v2257
    %v2545 = vunpack.c.l.s8.bf16 %v2258
    %v2546 = vunpack.c.l.s8.bf16 %v2259
    %v2547 = vunpack.c.l.s8.bf16 %v2260
    %v2548 = vunpack.c.l.s8.bf16 %v2261
    %v2549 = vunpack.c.l.s8.bf16 %v2262
    %v2550 = vunpack.c.l.s8.bf16 %v2263
    %v2551 = vunpack.c.h.s8.bf16 %v2257
    %v2552 = vunpack.c.h.s8.bf16 %v2258
    %v2553 = vunpack.c.h.s8.bf16 %v2259
    %v2554 = vunpack.c.h.s8.bf16 %v2260
    %v2555 = vunpack.c.h.s8.bf16 %v2261
    %v2556 = vunpack.c.h.s8.bf16 %v2262
    %v2557 = vunpack.c.h.s8.bf16 %v2263
    %v2558 = vunpack.c.l.s8.bf16 %v2264
    %v2559 = vunpack.c.l.s8.bf16 %v2265
    %v2560 = vunpack.c.l.s8.bf16 %v2266
    %v2561 = vunpack.c.l.s8.bf16 %v2267
    %v2562 = vunpack.c.l.s8.bf16 %v2268
    %v2563 = vunpack.c.l.s8.bf16 %v2269
    %v2564 = vunpack.c.l.s8.bf16 %v2270
    %v2565 = vunpack.c.h.s8.bf16 %v2264
    %v2566 = vunpack.c.h.s8.bf16 %v2265
    %v2567 = vunpack.c.h.s8.bf16 %v2266
    %v2568 = vunpack.c.h.s8.bf16 %v2267
    %v2569 = vunpack.c.h.s8.bf16 %v2268
    %v2570 = vunpack.c.h.s8.bf16 %v2269
    %v2571 = vunpack.c.h.s8.bf16 %v2270
    %v2572 = vunpack.c.l.s8.bf16 %v2271
    %v2573 = vunpack.c.l.s8.bf16 %v2272
    %v2574 = vunpack.c.l.s8.bf16 %v2273
    %v2575 = vunpack.c.l.s8.bf16 %v2274
    %v2576 = vunpack.c.l.s8.bf16 %v2275
    %v2577 = vunpack.c.l.s8.bf16 %v2276
    %v2578 = vunpack.c.l.s8.bf16 %v2277
    %v2579 = vunpack.c.h.s8.bf16 %v2271
    %v2580 = vunpack.c.h.s8.bf16 %v2272
    %v2581 = vunpack.c.h.s8.bf16 %v2273
    %v2582 = vunpack.c.h.s8.bf16 %v2274
    %v2583 = vunpack.c.h.s8.bf16 %v2275
    %v2584 = vunpack.c.h.s8.bf16 %v2276
    %v2585 = vunpack.c.h.s8.bf16 %v2277
    %v2586 = vunpack.c.l.s8.bf16 %v2278
    %v2587 = vunpack.c.l.s8.bf16 %v2279
    %v2588 = vunpack.c.l.s8.bf16 %v2280
    %v2589 = vunpack.c.l.s8.bf16 %v2281
    %v2590 = vunpack.c.l.s8.bf16 %v2282
    %v2591 = vunpack.c.l.s8.bf16 %v2283
    %v2592 = vunpack.c.l.s8.bf16 %v2284
    %v2593 = vunpack.c.h.s8.bf16 %v2278
    %v2594 = vunpack.c.h.s8.bf16 %v2279
    %v2595 = vunpack.c.h.s8.bf16 %v2280
    %v2596 = vunpack.c.h.s8.bf16 %v2281
    %v2597 = vunpack.c.h.s8.bf16 %v2282
    %v2598 = vunpack.c.h.s8.bf16 %v2283
    %v2599 = vunpack.c.h.s8.bf16 %v2284
    %v2600 = vunpack.c.l.s8.bf16 %v2285
    %v2601 = vunpack.c.l.s8.bf16 %v2286
    %v2602 = vunpack.c.l.s8.bf16 %v2287
    %v2603 = vunpack.c.l.s8.bf16 %v2288
    %v2604 = vunpack.c.l.s8.bf16 %v2289
    %v2605 = vunpack.c.l.s8.bf16 %v2290
    %v2606 = vunpack.c.l.s8.bf16 %v2291
    %v2607 = vunpack.c.h.s8.bf16 %v2285
    %v2608 = vunpack.c.h.s8.bf16 %v2286
    %v2609 = vunpack.c.h.s8.bf16 %v2287
    %v2610 = vunpack.c.h.s8.bf16 %v2288
    %v2611 = vunpack.c.h.s8.bf16 %v2289
    %v2612 = vunpack.c.h.s8.bf16 %v2290
    %v2613 = vunpack.c.h.s8.bf16 %v2291
    %v2614 = vunpack.c.l.s8.bf16 %v2292
    %v2615 = vunpack.c.l.s8.bf16 %v2293
    %v2616 = vunpack.c.l.s8.bf16 %v2294
    %v2617 = vunpack.c.l.s8.bf16 %v2295
    %v2618 = vunpack.c.l.s8.bf16 %v2296
    %v2619 = vunpack.c.l.s8.bf16 %v2297
    %v2620 = vunpack.c.l.s8.bf16 %v2298
    %v2621 = vunpack.c.h.s8.bf16 %v2292
    %v2622 = vunpack.c.h.s8.bf16 %v2293
    %v2623 = vunpack.c.h.s8.bf16 %v2294
    %v2624 = vunpack.c.h.s8.bf16 %v2295
    %v2625 = vunpack.c.h.s8.bf16 %v2296
    %v2626 = vunpack.c.h.s8.bf16 %v2297
    %v2627 = vunpack.c.h.s8.bf16 %v2298
    %v2628 = vunpack.c.l.s8.bf16 %v2299
    %v2629 = vunpack.c.l.s8.bf16 %v2300
    %v2630 = vunpack.c.l.s8.bf16 %v2301
    %v2631 = vunpack.c.l.s8.bf16 %v2302
    %v2632 = vunpack.c.l.s8.bf16 %v2303
    %v2633 = vunpack.c.l.s8.bf16 %v2304
    %v2634 = vunpack.c.l.s8.bf16 %v2305
    %v2635 = vunpack.c.h.s8.bf16 %v2299
    %v2636 = vunpack.c.h.s8.bf16 %v2300
    %v2637 = vunpack.c.h.s8.bf16 %v2301
    %v2638 = vunpack.c.h.s8.bf16 %v2302
    %v2639 = vunpack.c.h.s8.bf16 %v2303
    %v2640 = vunpack.c.h.s8.bf16 %v2304
    %v2641 = vunpack.c.h.s8.bf16 %v2305
    %v2642 = vunpack.c.l.s8.bf16 %v2306
    %v2643 = vunpack.c.l.s8.bf16 %v2307
    %v2644 = vunpack.c.l.s8.bf16 %v2308
    %v2645 = vunpack.c.l.s8.bf16 %v2309
    %v2646 = vunpack.c.l.s8.bf16 %v2310
    %v2647 = vunpack.c.l.s8.bf16 %v2311
    %v2648 = vunpack.c.l.s8.bf16 %v2312
    %v2649 = vunpack.c.h.s8.bf16 %v2306
    %v2650 = vunpack.c.h.s8.bf16 %v2307
    %v2651 = vunpack.c.h.s8.bf16 %v2308
    %v2652 = vunpack.c.h.s8.bf16 %v2309
    %v2653 = vunpack.c.h.s8.bf16 %v2310
    %v2654 = vunpack.c.h.s8.bf16 %v2311
    %v2655 = vunpack.c.h.s8.bf16 %v2312
    %v2656 = vunpack.c.l.s8.bf16 %v2313
    %v2657 = vunpack.c.l.s8.bf16 %v2314
    %v2658 = vunpack.c.l.s8.bf16 %v2315
    %v2659 = vunpack.c.l.s8.bf16 %v2316
    %v2660 = vunpack.c.l.s8.bf16 %v2317
    %v2661 = vunpack.c.l.s8.bf16 %v2318
    %v2662 = vunpack.c.l.s8.bf16 %v2319
    %v2663 = vunpack.c.h.s8.bf16 %v2313
    %v2664 = vunpack.c.h.s8.bf16 %v2314
    %v2665 = vunpack.c.h.s8.bf16 %v2315
    %v2666 = vunpack.c.h.s8.bf16 %v2316
    %v2667 = vunpack.c.h.s8.bf16 %v2317
    %v2668 = vunpack.c.h.s8.bf16 %v2318
    %v2669 = vunpack.c.h.s8.bf16 %v2319
    %v2670 = vunpack.c.l.s8.bf16 %v2320
    %v2671 = vunpack.c.l.s8.bf16 %v2321
    %v2672 = vunpack.c.l.s8.bf16 %v2322
    %v2673 = vunpack.c.l.s8.bf16 %v2323
    %v2674 = vunpack.c.l.s8.bf16 %v2324
    %v2675 = vunpack.c.l.s8.bf16 %v2325
    %v2676 = vunpack.c.l.s8.bf16 %v2326
    %v2677 = vunpack.c.h.s8.bf16 %v2320
    %v2678 = vunpack.c.h.s8.bf16 %v2321
    %v2679 = vunpack.c.h.s8.bf16 %v2322
    %v2680 = vunpack.c.h.s8.bf16 %v2323
    %v2681 = vunpack.c.h.s8.bf16 %v2324
    %v2682 = vunpack.c.h.s8.bf16 %v2325
    %v2683 = vunpack.c.h.s8.bf16 %v2326
    %v2684 = vunpack.c.l.s8.bf16 %v2327
    %v2685 = vunpack.c.l.s8.bf16 %v2328
    %v2686 = vunpack.c.l.s8.bf16 %v2329
    %v2687 = vunpack.c.l.s8.bf16 %v2330
    %v2688 = vunpack.c.l.s8.bf16 %v2331
    %v2689 = vunpack.c.l.s8.bf16 %v2332
    %v2690 = vunpack.c.l.s8.bf16 %v2333
    %v2691 = vunpack.c.h.s8.bf16 %v2327
    %v2692 = vunpack.c.h.s8.bf16 %v2328
    %v2693 = vunpack.c.h.s8.bf16 %v2329
    %v2694 = vunpack.c.h.s8.bf16 %v2330
    %v2695 = vunpack.c.h.s8.bf16 %v2331
    %v2696 = vunpack.c.h.s8.bf16 %v2332
    %v2697 = vunpack.c.h.s8.bf16 %v2333
    %v2698 = vunpack.c.l.s8.bf16 %v2334
    %v2699 = vunpack.c.l.s8.bf16 %v2335
    %v2700 = vunpack.c.l.s8.bf16 %v2336
    %v2701 = vunpack.c.l.s8.bf16 %v2337
    %v2702 = vunpack.c.l.s8.bf16 %v2338
    %v2703 = vunpack.c.l.s8.bf16 %v2339
    %v2704 = vunpack.c.l.s8.bf16 %v2340
    %v2705 = vunpack.c.h.s8.bf16 %v2334
    %v2706 = vunpack.c.h.s8.bf16 %v2335
    %v2707 = vunpack.c.h.s8.bf16 %v2336
    %v2708 = vunpack.c.h.s8.bf16 %v2337
    %v2709 = vunpack.c.h.s8.bf16 %v2338
    %v2710 = vunpack.c.h.s8.bf16 %v2339
    %v2711 = vunpack.c.h.s8.bf16 %v2340
    %v2712 = vunpack.c.l.s8.bf16 %v2341
    %v2713 = vunpack.c.l.s8.bf16 %v2342
    %v2714 = vunpack.c.l.s8.bf16 %v2343
    %v2715 = vunpack.c.l.s8.bf16 %v2344
    %v2716 = vunpack.c.l.s8.bf16 %v2345
    %v2717 = vunpack.c.l.s8.bf16 %v2346
    %v2718 = vunpack.c.l.s8.bf16 %v2347
    %v2719 = vunpack.c.h.s8.bf16 %v2341
    %v2720 = vunpack.c.h.s8.bf16 %v2342
    %v2721 = vunpack.c.h.s8.bf16 %v2343
    %v2722 = vunpack.c.h.s8.bf16 %v2344
    %v2723 = vunpack.c.h.s8.bf16 %v2345
    %v2724 = vunpack.c.h.s8.bf16 %v2346
    %v2725 = vunpack.c.h.s8.bf16 %v2347
    %v2726 = vunpack.c.l.s8.bf16 %v2348
    %v2727 = vunpack.c.l.s8.bf16 %v2349
    %v2728 = vunpack.c.l.s8.bf16 %v2350
    %v2729 = vunpack.c.l.s8.bf16 %v2351
    %v2730 = vunpack.c.l.s8.bf16 %v2352
    %v2731 = vunpack.c.l.s8.bf16 %v2353
    %v2732 = vunpack.c.l.s8.bf16 %v2354
    %v2733 = vunpack.c.h.s8.bf16 %v2348
    %v2734 = vunpack.c.h.s8.bf16 %v2349
    %v2735 = vunpack.c.h.s8.bf16 %v2350
    %v2736 = vunpack.c.h.s8.bf16 %v2351
    %v2737 = vunpack.c.h.s8.bf16 %v2352
    %v2738 = vunpack.c.h.s8.bf16 %v2353
    %v2739 = vunpack.c.h.s8.bf16 %v2354
    %v2740 = vunpack.c.l.s8.bf16 %v2355
    %v2741 = vunpack.c.l.s8.bf16 %v2356
    %v2742 = vunpack.c.l.s8.bf16 %v2357
    %v2743 = vunpack.c.l.s8.bf16 %v2358
    %v2744 = vunpack.c.l.s8.bf16 %v2359
    %v2745 = vunpack.c.l.s8.bf16 %v2360
    %v2746 = vunpack.c.l.s8.bf16 %v2361
    %v2747 = vunpack.c.h.s8.bf16 %v2355
    %v2748 = vunpack.c.h.s8.bf16 %v2356
    %v2749 = vunpack.c.h.s8.bf16 %v2357
    %v2750 = vunpack.c.h.s8.bf16 %v2358
    %v2751 = vunpack.c.h.s8.bf16 %v2359
    %v2752 = vunpack.c.h.s8.bf16 %v2360
    %v2753 = vunpack.c.h.s8.bf16 %v2361
    %v2754 = vunpack.c.l.s8.bf16 %v2362
    %v2755 = vunpack.c.l.s8.bf16 %v2363
    %v2756 = vunpack.c.l.s8.bf16 %v2364
    %v2757 = vunpack.c.l.s8.bf16 %v2365
    %v2758 = vunpack.c.l.s8.bf16 %v2366
    %v2759 = vunpack.c.l.s8.bf16 %v2367
    %v2760 = vunpack.c.l.s8.bf16 %v2368
    %v2761 = vunpack.c.h.s8.bf16 %v2362
    %v2762 = vunpack.c.h.s8.bf16 %v2363
    %v2763 = vunpack.c.h.s8.bf16 %v2364
    %v2764 = vunpack.c.h.s8.bf16 %v2365
    %v2765 = vunpack.c.h.s8.bf16 %v2366
    %v2766 = vunpack.c.h.s8.bf16 %v2367
    %v2767 = vunpack.c.h.s8.bf16 %v2368
    %v2768 = vunpack.c.l.s8.bf16 %v2369
    %v2769 = vunpack.c.l.s8.bf16 %v2370
    %v2770 = vunpack.c.l.s8.bf16 %v2371
    %v2771 = vunpack.c.l.s8.bf16 %v2372
    %v2772 = vunpack.c.l.s8.bf16 %v2373
    %v2773 = vunpack.c.l.s8.bf16 %v2374
    %v2774 = vunpack.c.l.s8.bf16 %v2375
    %v2775 = vunpack.c.h.s8.bf16 %v2369
    %v2776 = vunpack.c.h.s8.bf16 %v2370
    %v2777 = vunpack.c.h.s8.bf16 %v2371
    %v2778 = vunpack.c.h.s8.bf16 %v2372
    %v2779 = vunpack.c.h.s8.bf16 %v2373
    %v2780 = vunpack.c.h.s8.bf16 %v2374
    %v2781 = vunpack.c.h.s8.bf16 %v2375
    %v2782 = vunpack.c.l.s8.bf16 %v2376
    %v2783 = vunpack.c.l.s8.bf16 %v2377
    %v2784 = vunpack.c.l.s8.bf16 %v2378
    %v2785 = vunpack.c.l.s8.bf16 %v2379
    %v2786 = vunpack.c.l.s8.bf16 %v2380
    %v2787 = vunpack.c.l.s8.bf16 %v2381
    %v2788 = vunpack.c.l.s8.bf16 %v2382
    %v2789 = vunpack.c.h.s8.bf16 %v2376
    %v2790 = vunpack.c.h.s8.bf16 %v2377
    %v2791 = vunpack.c.h.s8.bf16 %v2378
    %v2792 = vunpack.c.h.s8.bf16 %v2379
    %v2793 = vunpack.c.h.s8.bf16 %v2380
    %v2794 = vunpack.c.h.s8.bf16 %v2381
    %v2795 = vunpack.c.h.s8.bf16 %v2382
    %v2796 = vunpack.c.l.s8.bf16 %v2383
    %v2797 = vunpack.c.l.s8.bf16 %v2384
    %v2798 = vunpack.c.l.s8.bf16 %v2385
    %v2799 = vunpack.c.l.s8.bf16 %v2386
    %v2800 = vunpack.c.l.s8.bf16 %v2387
    %v2801 = vunpack.c.l.s8.bf16 %v2388
    %v2802 = vunpack.c.l.s8.bf16 %v2389
    %v2803 = vunpack.c.h.s8.bf16 %v2383
    %v2804 = vunpack.c.h.s8.bf16 %v2384
    %v2805 = vunpack.c.h.s8.bf16 %v2385
    %v2806 = vunpack.c.h.s8.bf16 %v2386
    %v2807 = vunpack.c.h.s8.bf16 %v2387
    %v2808 = vunpack.c.h.s8.bf16 %v2388
    %v2809 = vunpack.c.h.s8.bf16 %v2389
    %v2810 = vunpack.c.l.s8.bf16 %v2390
    %v2811 = vunpack.c.l.s8.bf16 %v2391
    %v2812 = vunpack.c.l.s8.bf16 %v2392
    %v2813 = vunpack.c.l.s8.bf16 %v2393
    %v2814 = vunpack.c.l.s8.bf16 %v2394
    %v2815 = vunpack.c.l.s8.bf16 %v2395
    %v2816 = vunpack.c.l.s8.bf16 %v2396
    %v2817 = vunpack.c.h.s8.bf16 %v2390
    %v2818 = vunpack.c.h.s8.bf16 %v2391
    %v2819 = vunpack.c.h.s8.bf16 %v2392
    %v2820 = vunpack.c.h.s8.bf16 %v2393
    %v2821 = vunpack.c.h.s8.bf16 %v2394
    %v2822 = vunpack.c.h.s8.bf16 %v2395
    %v2823 = vunpack.c.h.s8.bf16 %v2396
    %v2824 = vunpack.c.l.s8.bf16 %v2397
    %v2825 = vunpack.c.l.s8.bf16 %v2398
    %v2826 = vunpack.c.l.s8.bf16 %v2399
    %v2827 = vunpack.c.l.s8.bf16 %v2400
    %v2828 = vunpack.c.l.s8.bf16 %v2401
    %v2829 = vunpack.c.l.s8.bf16 %v2402
    %v2830 = vunpack.c.l.s8.bf16 %v2403
    %v2831 = vunpack.c.h.s8.bf16 %v2397
    %v2832 = vunpack.c.h.s8.bf16 %v2398
    %v2833 = vunpack.c.h.s8.bf16 %v2399
    %v2834 = vunpack.c.h.s8.bf16 %v2400
    %v2835 = vunpack.c.h.s8.bf16 %v2401
    %v2836 = vunpack.c.h.s8.bf16 %v2402
    %v2837 = vunpack.c.h.s8.bf16 %v2403
    %v2838 = vunpack.c.l.s8.bf16 %v2404
    %v2839 = vunpack.c.l.s8.bf16 %v2405
    %v2840 = vunpack.c.l.s8.bf16 %v2406
    %v2841 = vunpack.c.l.s8.bf16 %v2407
    %v2842 = vunpack.c.l.s8.bf16 %v2408
    %v2843 = vunpack.c.l.s8.bf16 %v2409
    %v2844 = vunpack.c.l.s8.bf16 %v2410
    %v2845 = vunpack.c.h.s8.bf16 %v2404
    %v2846 = vunpack.c.h.s8.bf16 %v2405
    %v2847 = vunpack.c.h.s8.bf16 %v2406
    %v2848 = vunpack.c.h.s8.bf16 %v2407
    %v2849 = vunpack.c.h.s8.bf16 %v2408
    %v2850 = vunpack.c.h.s8.bf16 %v2409
    %v2851 = vunpack.c.h.s8.bf16 %v2410
    %v2852 = vunpack.c.l.s8.bf16 %v2411
    %v2853 = vunpack.c.l.s8.bf16 %v2412
    %v2854 = vunpack.c.l.s8.bf16 %v2413
    %v2855 = vunpack.c.l.s8.bf16 %v2414
    %v2856 = vunpack.c.l.s8.bf16 %v2415
    %v2857 = vunpack.c.l.s8.bf16 %v2416
    %v2858 = vunpack.c.l.s8.bf16 %v2417
    %v2859 = vunpack.c.h.s8.bf16 %v2411
    %v2860 = vunpack.c.h.s8.bf16 %v2412
    %v2861 = vunpack.c.h.s8.bf16 %v2413
    %v2862 = vunpack.c.h.s8.bf16 %v2414
    %v2863 = vunpack.c.h.s8.bf16 %v2415
    %v2864 = vunpack.c.h.s8.bf16 %v2416
    %v2865 = vunpack.c.h.s8.bf16 %v2417
    %2866 = vmatprep.subr.bf16.mxu0 %v2419
    %2867 = vmatpush1.bf16.msra.mxu0 %v2418
    %2868 = vmatprep.subr.bf16.mxu0 %v2426
    %2869 = vmatpush1.bf16.msra.mxu0 %v2425
    %2870 = vmatprep.subr.bf16.mxu0 %v2433
    %2871 = vmatpush1.bf16.msra.mxu0 %v2432
    %2872 = vmatprep.subr.bf16.mxu0 %v2440
    %2873 = vmatpush1.bf16.msra.mxu0 %v2439
    %2874 = vmatprep.subr.bf16.mxu0 %v2447
    %2875 = vmatpush1.bf16.msra.mxu0 %v2446
    %2876 = vmatprep.subr.bf16.mxu0 %v2454
    %2877 = vmatpush1.bf16.msra.mxu0 %v2453
    %2878 = vmatprep.subr.bf16.mxu0 %v2461
    %2879 = vmatpush1.bf16.msra.mxu0 %v2460
    %2880 = vmatprep.subr.bf16.mxu0 %v2468
    %2881 = vmatpush1.bf16.msra.mxu0 %v2467
    %2882 = vmatprep.subr.bf16.mxu0 %v2475
    %2883 = vmatpush1.bf16.msra.mxu0 %v2474
    %2884 = vmatprep.subr.bf16.mxu0 %v2482
    %2885 = vmatpush1.bf16.msra.mxu0 %v2481
    %2886 = vmatprep.subr.bf16.mxu0 %v2489
    %2887 = vmatpush1.bf16.msra.mxu0 %v2488
    %2888 = vmatprep.subr.bf16.mxu0 %v2496
    %2889 = vmatpush1.bf16.msra.mxu0 %v2495
    %2890 = vmatprep.subr.bf16.mxu0 %v2503
    %2891 = vmatpush1.bf16.msra.mxu0 %v2502
    %2892 = vmatprep.subr.bf16.mxu0 %v2510
    %2893 = vmatpush1.bf16.msra.mxu0 %v2509
    %2894 = vmatprep.subr.bf16.mxu0 %v2517
    %2895 = vmatpush1.bf16.msra.mxu0 %v2516
    %2896 = vmatprep.subr.bf16.mxu0 %v2524
    %2897 = vmatpush1.bf16.msra.mxu0 %v2523
    %2898 = vmatprep.mubr.bf16.mxu0 %v2187
    %2899 = vmatmul.mubr.bf16.gmra.mrb[0].mxu0 %v2186
    %v2900 = vpop.f32.mrb[0].mxu0
    %v2901 = vadd.f32 0.0, %v2900
    %v2902 = vpop.f32.mrb[0].mxu0
    %v2903 = vadd.f32 0.0, %v2902
    %v2904 = vpop.f32.mrb[0].mxu0
    %v2905 = vpop.f32.mrb[0].mxu0
    %2906 = vdwg.mxu0
    %2907 = vmatprep.subr.bf16.mxu0 %v2531
    %2908 = vmatpush1.bf16.msra.mxu0 %v2530
    %2909 = vmatprep.subr.bf16.mxu0 %v2538
    %2910 = vmatpush1.bf16.msra.mxu0 %v2537
    %2911 = vmatprep.subr.bf16.mxu0 %v2545
    %2912 = vmatpush1.bf16.msra.mxu0 %v2544
    %2913 = vmatprep.subr.bf16.mxu0 %v2552
    %2914 = vmatpush1.bf16.msra.mxu0 %v2551
    %2915 = vmatprep.subr.bf16.mxu0 %v2559
    %2916 = vmatpush1.bf16.msra.mxu0 %v2558
    %2917 = vmatprep.subr.bf16.mxu0 %v2566
    %2918 = vmatpush1.bf16.msra.mxu0 %v2565
    %2919 = vmatprep.subr.bf16.mxu0 %v2573
    %2920 = vmatpush1.bf16.msra.mxu0 %v2572
    %2921 = vmatprep.subr.bf16.mxu0 %v2580
    %2922 = vmatpush1.bf16.msra.mxu0 %v2579
    %2923 = vmatprep.subr.bf16.mxu0 %v2587
    %2924 = vmatpush1.bf16.msra.mxu0 %v2586
    %2925 = vmatprep.subr.bf16.mxu0 %v2594
    %2926 = vmatpush1.bf16.msra.mxu0 %v2593
    %2927 = vmatprep.subr.bf16.mxu0 %v2601
    %2928 = vmatpush1.bf16.msra.mxu0 %v2600
    %2929 = vmatprep.subr.bf16.mxu0 %v2608
    %2930 = vmatpush1.bf16.msra.mxu0 %v2607
    %2931 = vmatprep.subr.bf16.mxu0 %v2615
    %2932 = vmatpush1.bf16.msra.mxu0 %v2614
    %2933 = vmatprep.subr.bf16.mxu0 %v2622
    %2934 = vmatpush1.bf16.msra.mxu0 %v2621
    %2935 = vmatprep.subr.bf16.mxu0 %v2629
    %2936 = vmatpush1.bf16.msra.mxu0 %v2628
    %2937 = vmatprep.subr.bf16.mxu0 %v2636
    %2938 = vmatpush1.bf16.msra.mxu0 %v2635
    %2939 = vmatprep.mubr.bf16.mxu0 %v2189
    %2940 = vmatmul.mubr.bf16.gmra.mrb[0].mxu0 %v2188
    %v2941 = vpop.f32.mrb[0].mxu0
    %v2942 = vadd.f32 %v2901, %v2941
    %v2943 = vpop.f32.mrb[0].mxu0
    %v2944 = vadd.f32 %v2903, %v2943
    %v2945 = vpop.f32.mrb[0].mxu0
    %v2946 = vpop.f32.mrb[0].mxu0
    %2947 = vdwg.mxu0
    %2948 = vmatprep.subr.bf16.mxu0 %v2643
    %2949 = vmatpush1.bf16.msra.mxu0 %v2642
    %2950 = vmatprep.subr.bf16.mxu0 %v2650
    %2951 = vmatpush1.bf16.msra.mxu0 %v2649
    %2952 = vmatprep.subr.bf16.mxu0 %v2657
    %2953 = vmatpush1.bf16.msra.mxu0 %v2656
    %2954 = vmatprep.subr.bf16.mxu0 %v2664
    %2955 = vmatpush1.bf16.msra.mxu0 %v2663
    %2956 = vmatprep.subr.bf16.mxu0 %v2671
    %2957 = vmatpush1.bf16.msra.mxu0 %v2670
    %2958 = vmatprep.subr.bf16.mxu0 %v2678
    %2959 = vmatpush1.bf16.msra.mxu0 %v2677
    %2960 = vmatprep.subr.bf16.mxu0 %v2685
    %2961 = vmatpush1.bf16.msra.mxu0 %v2684
    %2962 = vmatprep.subr.bf16.mxu0 %v2692
    %2963 = vmatpush1.bf16.msra.mxu0 %v2691
    %2964 = vmatprep.subr.bf16.mxu0 %v2699
    %2965 = vmatpush1.bf16.msra.mxu0 %v2698
    %2966 = vmatprep.subr.bf16.mxu0 %v2706
    %2967 = vmatpush1.bf16.msra.mxu0 %v2705
    %2968 = vmatprep.subr.bf16.mxu0 %v2713
    %2969 = vmatpush1.bf16.msra.mxu0 %v2712
    %2970 = vmatprep.subr.bf16.mxu0 %v2720
    %2971 = vmatpush1.bf16.msra.mxu0 %v2719
    %2972 = vmatprep.subr.bf16.mxu0 %v2727
    %2973 = vmatpush1.bf16.msra.mxu0 %v2726
    %2974 = vmatprep.subr.bf16.mxu0 %v2734
    %2975 = vmatpush1.bf16.msra.mxu0 %v2733
    %2976 = vmatprep.subr.bf16.mxu0 %v2741
    %2977 = vmatpush1.bf16.msra.mxu0 %v2740
    %2978 = vmatprep.subr.bf16.mxu0 %v2748
    %2979 = vmatpush1.bf16.msra.mxu0 %v2747
    %2980 = vmatprep.mubr.bf16.mxu0 %v2191
    %2981 = vmatmul.mubr.bf16.gmra.mrb[0].mxu0 %v2190
    %v2982 = vpop.f32.mrb[0].mxu0
    %v2983 = vadd.f32 %v2942, %v2982
    %v2984 = vpop.f32.mrb[0].mxu0
    %v2985 = vadd.f32 %v2944, %v2984
    %v2986 = vpop.f32.mrb[0].mxu0
    %v2987 = vpop.f32.mrb[0].mxu0
    %2988 = vdwg.mxu0
    %2989 = vmatprep.subr.bf16.mxu0 %v2755
    %2990 = vmatpush1.bf16.msra.mxu0 %v2754
    %2991 = vmatprep.subr.bf16.mxu0 %v2762
    %2992 = vmatpush1.bf16.msra.mxu0 %v2761
    %2993 = vmatprep.subr.bf16.mxu0 %v2769
    %2994 = vmatpush1.bf16.msra.mxu0 %v2768
    %2995 = vmatprep.subr.bf16.mxu0 %v2776
    %2996 = vmatpush1.bf16.msra.mxu0 %v2775
    %2997 = vmatprep.subr.bf16.mxu0 %v2783
    %2998 = vmatpush1.bf16.msra.mxu0 %v2782
    %2999 = vmatprep.subr.bf16.mxu0 %v2790
    %3000 = vmatpush1.bf16.msra.mxu0 %v2789
    %3001 = vmatprep.subr.bf16.mxu0 %v2797
    %3002 = vmatpush1.bf16.msra.mxu0 %v2796
    %3003 = vmatprep.subr.bf16.mxu0 %v2804
    %3004 = vmatpush1.bf16.msra.mxu0 %v2803
    %3005 = vmatprep.subr.bf16.mxu0 %v2811
    %3006 = vmatpush1.bf16.msra.mxu0 %v2810
    %3007 = vmatprep.subr.bf16.mxu0 %v2818
    %3008 = vmatpush1.bf16.msra.mxu0 %v2817
    %3009 = vmatprep.subr.bf16.mxu0 %v2825
    %3010 = vmatpush1.bf16.msra.mxu0 %v2824
    %3011 = vmatprep.subr.bf16.mxu0 %v2832
    %3012 = vmatpush1.bf16.msra.mxu0 %v2831
    %3013 = vmatprep.subr.bf16.mxu0 %v2839
    %3014 = vmatpush1.bf16.msra.mxu0 %v2838
    %3015 = vmatprep.subr.bf16.mxu0 %v2846
    %3016 = vmatpush1.bf16.msra.mxu0 %v2845
    %3017 = vmatprep.subr.bf16.mxu0 %v2853
    %3018 = vmatpush1.bf16.msra.mxu0 %v2852
    %3019 = vmatprep.subr.bf16.mxu0 %v2860
    %3020 = vmatpush1.bf16.msra.mxu0 %v2859
    %3021 = vmatprep.mubr.bf16.mxu0 %v2193
    %3022 = vmatmul.mubr.bf16.gmra.mrb[0].mxu0 %v2192
    %v3023 = vpop.f32.mrb[0].mxu0
    %v3024 = vadd.f32 %v2983, %v3023
    %v3025 = vpop.f32.mrb[0].mxu0
    %v3026 = vadd.f32 %v2985, %v3025
    %v3027 = vpop.f32.mrb[0].mxu0
    %v3028 = vpop.f32.mrb[0].mxu0
    %3029 = vdwg.mxu0
    %3030 = vmatprep.subr.bf16.mxu0 %v2421
    %3031 = vmatpush1.bf16.msra.mxu0 %v2420
    %3032 = vmatprep.subr.bf16.mxu0 %v2428
    %3033 = vmatpush1.bf16.msra.mxu0 %v2427
    %3034 = vmatprep.subr.bf16.mxu0 %v2435
    %3035 = vmatpush1.bf16.msra.mxu0 %v2434
    %3036 = vmatprep.subr.bf16.mxu0 %v2442
    %3037 = vmatpush1.bf16.msra.mxu0 %v2441
    %3038 = vmatprep.subr.bf16.mxu0 %v2449
    %3039 = vmatpush1.bf16.msra.mxu0 %v2448
    %3040 = vmatprep.subr.bf16.mxu0 %v2456
    %3041 = vmatpush1.bf16.msra.mxu0 %v2455
    %3042 = vmatprep.subr.bf16.mxu0 %v2463
    %3043 = vmatpush1.bf16.msra.mxu0 %v2462
    %3044 = vmatprep.subr.bf16.mxu0 %v2470
    %3045 = vmatpush1.bf16.msra.mxu0 %v2469
    %3046 = vmatprep.subr.bf16.mxu0 %v2477
    %3047 = vmatpush1.bf16.msra.mxu0 %v2476
    %3048 = vmatprep.subr.bf16.mxu0 %v2484
    %3049 = vmatpush1.bf16.msra.mxu0 %v2483
    %3050 = vmatprep.subr.bf16.mxu0 %v2491
    %3051 = vmatpush1.bf16.msra.mxu0 %v2490
    %3052 = vmatprep.subr.bf16.mxu0 %v2498
    %3053 = vmatpush1.bf16.msra.mxu0 %v2497
    %3054 = vmatprep.subr.bf16.mxu0 %v2505
    %3055 = vmatpush1.bf16.msra.mxu0 %v2504
    %3056 = vmatprep.subr.bf16.mxu0 %v2512
    %3057 = vmatpush1.bf16.msra.mxu0 %v2511
    %3058 = vmatprep.subr.bf16.mxu0 %v2519
    %3059 = vmatpush1.bf16.msra.mxu0 %v2518
    %3060 = vmatprep.subr.bf16.mxu0 %v2526
    %3061 = vmatpush1.bf16.msra.mxu0 %v2525
    %3062 = vmatprep.mubr.bf16.mxu0 %v2187
    %3063 = vmatmul.mubr.bf16.gmra.mrb[0].mxu0 %v2186
    %v3064 = vpop.f32.mrb[0].mxu0
    %v3065 = vadd.f32 0.0, %v3064
    %v3066 = vpop.f32.mrb[0].mxu0
    %v3067 = vadd.f32 0.0, %v3066
    %v3068 = vpop.f32.mrb[0].mxu0
    %v3069 = vpop.f32.mrb[0].mxu0
    %3070 = vdwg.mxu0
    %3071 = vmatprep.subr.bf16.mxu0 %v2533
    %3072 = vmatpush1.bf16.msra.mxu0 %v2532
    %3073 = vmatprep.subr.bf16.mxu0 %v2540
    %3074 = vmatpush1.bf16.msra.mxu0 %v2539
    %3075 = vmatprep.subr.bf16.mxu0 %v2547
    %3076 = vmatpush1.bf16.msra.mxu0 %v2546
    %3077 = vmatprep.subr.bf16.mxu0 %v2554
    %3078 = vmatpush1.bf16.msra.mxu0 %v2553
    %3079 = vmatprep.subr.bf16.mxu0 %v2561
    %3080 = vmatpush1.bf16.msra.mxu0 %v2560
    %3081 = vmatprep.subr.bf16.mxu0 %v2568
    %3082 = vmatpush1.bf16.msra.mxu0 %v2567
    %3083 = vmatprep.subr.bf16.mxu0 %v2575
    %3084 = vmatpush1.bf16.msra.mxu0 %v2574
    %3085 = vmatprep.subr.bf16.mxu0 %v2582
    %3086 = vmatpush1.bf16.msra.mxu0 %v2581
    %3087 = vmatprep.subr.bf16.mxu0 %v2589
    %3088 = vmatpush1.bf16.msra.mxu0 %v2588
    %3089 = vmatprep.subr.bf16.mxu0 %v2596
    %3090 = vmatpush1.bf16.msra.mxu0 %v2595
    %3091 = vmatprep.subr.bf16.mxu0 %v2603
    %3092 = vmatpush1.bf16.msra.mxu0 %v2602
    %3093 = vmatprep.subr.bf16.mxu0 %v2610
    %3094 = vmatpush1.bf16.msra.mxu0 %v2609
    %3095 = vmatprep.subr.bf16.mxu0 %v2617
    %3096 = vmatpush1.bf16.msra.mxu0 %v2616
    %3097 = vmatprep.subr.bf16.mxu0 %v2624
    %3098 = vmatpush1.bf16.msra.mxu0 %v2623
    %3099 = vmatprep.subr.bf16.mxu0 %v2631
    %3100 = vmatpush1.bf16.msra.mxu0 %v2630
    %3101 = vmatprep.subr.bf16.mxu0 %v2638
    %3102 = vmatpush1.bf16.msra.mxu0 %v2637
    %3103 = vmatprep.mubr.bf16.mxu0 %v2189
    %3104 = vmatmul.mubr.bf16.gmra.mrb[0].mxu0 %v2188
    %v3105 = vpop.f32.mrb[0].mxu0
    %v3106 = vadd.f32 %v3065, %v3105
    %v3107 = vpop.f32.mrb[0].mxu0
    %v3108 = vadd.f32 %v3067, %v3107
    %v3109 = vpop.f32.mrb[0].mxu0
    %v3110 = vpop.f32.mrb[0].mxu0
    %3111 = vdwg.mxu0
    %3112 = vmatprep.subr.bf16.mxu0 %v2645
    %3113 = vmatpush1.bf16.msra.mxu0 %v2644
    %3114 = vmatprep.subr.bf16.mxu0 %v2652
    %3115 = vmatpush1.bf16.msra.mxu0 %v2651
    %3116 = vmatprep.subr.bf16.mxu0 %v2659
    %3117 = vmatpush1.bf16.msra.mxu0 %v2658
    %3118 = vmatprep.subr.bf16.mxu0 %v2666
    %3119 = vmatpush1.bf16.msra.mxu0 %v2665
    %3120 = vmatprep.subr.bf16.mxu0 %v2673
    %3121 = vmatpush1.bf16.msra.mxu0 %v2672
    %3122 = vmatprep.subr.bf16.mxu0 %v2680
    %3123 = vmatpush1.bf16.msra.mxu0 %v2679
    %3124 = vmatprep.subr.bf16.mxu0 %v2687
    %3125 = vmatpush1.bf16.msra.mxu0 %v2686
    %3126 = vmatprep.subr.bf16.mxu0 %v2694
    %3127 = vmatpush1.bf16.msra.mxu0 %v2693
    %3128 = vmatprep.subr.bf16.mxu0 %v2701
    %3129 = vmatpush1.bf16.msra.mxu0 %v2700
    %3130 = vmatprep.subr.bf16.mxu0 %v2708
    %3131 = vmatpush1.bf16.msra.mxu0 %v2707
    %3132 = vmatprep.subr.bf16.mxu0 %v2715
    %3133 = vmatpush1.bf16.msra.mxu0 %v2714
    %3134 = vmatprep.subr.bf16.mxu0 %v2722
    %3135 = vmatpush1.bf16.msra.mxu0 %v2721
    %3136 = vmatprep.subr.bf16.mxu0 %v2729
    %3137 = vmatpush1.bf16.msra.mxu0 %v2728
    %3138 = vmatprep.subr.bf16.mxu0 %v2736
    %3139 = vmatpush1.bf16.msra.mxu0 %v2735
    %3140 = vmatprep.subr.bf16.mxu0 %v2743
    %3141 = vmatpush1.bf16.msra.mxu0 %v2742
    %3142 = vmatprep.subr.bf16.mxu0 %v2750
    %3143 = vmatpush1.bf16.msra.mxu0 %v2749
    %3144 = vmatprep.mubr.bf16.mxu0 %v2191
    %3145 = vmatmul.mubr.bf16.gmra.mrb[0].mxu0 %v2190
    %v3146 = vpop.f32.mrb[0].mxu0
    %v3147 = vadd.f32 %v3106, %v3146
    %v3148 = vpop.f32.mrb[0].mxu0
    %v3149 = vadd.f32 %v3108, %v3148
    %v3150 = vpop.f32.mrb[0].mxu0
    %v3151 = vpop.f32.mrb[0].mxu0
    %3152 = vdwg.mxu0
    %3153 = vmatprep.subr.bf16.mxu0 %v2757
    %3154 = vmatpush1.bf16.msra.mxu0 %v2756
    %3155 = vmatprep.subr.bf16.mxu0 %v2764
    %3156 = vmatpush1.bf16.msra.mxu0 %v2763
    %3157 = vmatprep.subr.bf16.mxu0 %v2771
    %3158 = vmatpush1.bf16.msra.mxu0 %v2770
    %3159 = vmatprep.subr.bf16.mxu0 %v2778
    %3160 = vmatpush1.bf16.msra.mxu0 %v2777
    %3161 = vmatprep.subr.bf16.mxu0 %v2785
    %3162 = vmatpush1.bf16.msra.mxu0 %v2784
    %3163 = vmatprep.subr.bf16.mxu0 %v2792
    %3164 = vmatpush1.bf16.msra.mxu0 %v2791
    %3165 = vmatprep.subr.bf16.mxu0 %v2799
    %3166 = vmatpush1.bf16.msra.mxu0 %v2798
    %3167 = vmatprep.subr.bf16.mxu0 %v2806
    %3168 = vmatpush1.bf16.msra.mxu0 %v2805
    %3169 = vmatprep.subr.bf16.mxu0 %v2813
    %3170 = vmatpush1.bf16.msra.mxu0 %v2812
    %3171 = vmatprep.subr.bf16.mxu0 %v2820
    %3172 = vmatpush1.bf16.msra.mxu0 %v2819
    %3173 = vmatprep.subr.bf16.mxu0 %v2827
    %3174 = vmatpush1.bf16.msra.mxu0 %v2826
    %3175 = vmatprep.subr.bf16.mxu0 %v2834
    %3176 = vmatpush1.bf16.msra.mxu0 %v2833
    %3177 = vmatprep.subr.bf16.mxu0 %v2841
    %3178 = vmatpush1.bf16.msra.mxu0 %v2840
    %3179 = vmatprep.subr.bf16.mxu0 %v2848
    %3180 = vmatpush1.bf16.msra.mxu0 %v2847
    %3181 = vmatprep.subr.bf16.mxu0 %v2855
    %3182 = vmatpush1.bf16.msra.mxu0 %v2854
    %3183 = vmatprep.subr.bf16.mxu0 %v2862
    %3184 = vmatpush1.bf16.msra.mxu0 %v2861
    %3185 = vmatprep.mubr.bf16.mxu0 %v2193
    %3186 = vmatmul.mubr.bf16.gmra.mrb[0].mxu0 %v2192
    %v3187 = vpop.f32.mrb[0].mxu0
    %v3188 = vadd.f32 %v3147, %v3187
    %v3189 = vpop.f32.mrb[0].mxu0
    %v3190 = vadd.f32 %v3149, %v3189
    %v3191 = vpop.f32.mrb[0].mxu0
    %v3192 = vpop.f32.mrb[0].mxu0
    %3193 = vdwg.mxu0
    %3194 = vmatprep.subr.bf16.mxu0 %v2423
    %3195 = vmatpush1.bf16.msra.mxu0 %v2422
    %3196 = vmatprep.subr.bf16.mxu0 %v2430
    %3197 = vmatpush1.bf16.msra.mxu0 %v2429
    %3198 = vmatprep.subr.bf16.mxu0 %v2437
    %3199 = vmatpush1.bf16.msra.mxu0 %v2436
    %3200 = vmatprep.subr.bf16.mxu0 %v2444
    %3201 = vmatpush1.bf16.msra.mxu0 %v2443
    %3202 = vmatprep.subr.bf16.mxu0 %v2451
    %3203 = vmatpush1.bf16.msra.mxu0 %v2450
    %3204 = vmatprep.subr.bf16.mxu0 %v2458
    %3205 = vmatpush1.bf16.msra.mxu0 %v2457
    %3206 = vmatprep.subr.bf16.mxu0 %v2465
    %3207 = vmatpush1.bf16.msra.mxu0 %v2464
    %3208 = vmatprep.subr.bf16.mxu0 %v2472
    %3209 = vmatpush1.bf16.msra.mxu0 %v2471
    %3210 = vmatprep.subr.bf16.mxu0 %v2479
    %3211 = vmatpush1.bf16.msra.mxu0 %v2478
    %3212 = vmatprep.subr.bf16.mxu0 %v2486
    %3213 = vmatpush1.bf16.msra.mxu0 %v2485
    %3214 = vmatprep.subr.bf16.mxu0 %v2493
    %3215 = vmatpush1.bf16.msra.mxu0 %v2492
    %3216 = vmatprep.subr.bf16.mxu0 %v2500
    %3217 = vmatpush1.bf16.msra.mxu0 %v2499
    %3218 = vmatprep.subr.bf16.mxu0 %v2507
    %3219 = vmatpush1.bf16.msra.mxu0 %v2506
    %3220 = vmatprep.subr.bf16.mxu0 %v2514
    %3221 = vmatpush1.bf16.msra.mxu0 %v2513
    %3222 = vmatprep.subr.bf16.mxu0 %v2521
    %3223 = vmatpush1.bf16.msra.mxu0 %v2520
    %3224 = vmatprep.subr.bf16.mxu0 %v2528
    %3225 = vmatpush1.bf16.msra.mxu0 %v2527
    %3226 = vmatprep.mubr.bf16.mxu0 %v2187
    %3227 = vmatmul.mubr.bf16.gmra.mrb[0].mxu0 %v2186
    %v3228 = vpop.f32.mrb[0].mxu0
    %v3229 = vadd.f32 0.0, %v3228
    %v3230 = vpop.f32.mrb[0].mxu0
    %v3231 = vadd.f32 0.0, %v3230
    %v3232 = vpop.f32.mrb[0].mxu0
    %v3233 = vpop.f32.mrb[0].mxu0
    %3234 = vdwg.mxu0
    %3235 = vmatprep.subr.bf16.mxu0 %v2535
    %3236 = vmatpush1.bf16.msra.mxu0 %v2534
    %3237 = vmatprep.subr.bf16.mxu0 %v2542
    %3238 = vmatpush1.bf16.msra.mxu0 %v2541
    %3239 = vmatprep.subr.bf16.mxu0 %v2549
    %3240 = vmatpush1.bf16.msra.mxu0 %v2548
    %3241 = vmatprep.subr.bf16.mxu0 %v2556
    %3242 = vmatpush1.bf16.msra.mxu0 %v2555
    %3243 = vmatprep.subr.bf16.mxu0 %v2563
    %3244 = vmatpush1.bf16.msra.mxu0 %v2562
    %3245 = vmatprep.subr.bf16.mxu0 %v2570
    %3246 = vmatpush1.bf16.msra.mxu0 %v2569
    %3247 = vmatprep.subr.bf16.mxu0 %v2577
    %3248 = vmatpush1.bf16.msra.mxu0 %v2576
    %3249 = vmatprep.subr.bf16.mxu0 %v2584
    %3250 = vmatpush1.bf16.msra.mxu0 %v2583
    %3251 = vmatprep.subr.bf16.mxu0 %v2591
    %3252 = vmatpush1.bf16.msra.mxu0 %v2590
    %3253 = vmatprep.subr.bf16.mxu0 %v2598
    %3254 = vmatpush1.bf16.msra.mxu0 %v2597
    %3255 = vmatprep.subr.bf16.mxu0 %v2605
    %3256 = vmatpush1.bf16.msra.mxu0 %v2604
    %3257 = vmatprep.subr.bf16.mxu0 %v2612
    %3258 = vmatpush1.bf16.msra.mxu0 %v2611
    %3259 = vmatprep.subr.bf16.mxu0 %v2619
    %3260 = vmatpush1.bf16.msra.mxu0 %v2618
    %3261 = vmatprep.subr.bf16.mxu0 %v2626
    %3262 = vmatpush1.bf16.msra.mxu0 %v2625
    %3263 = vmatprep.subr.bf16.mxu0 %v2633
    %3264 = vmatpush1.bf16.msra.mxu0 %v2632
    %3265 = vmatprep.subr.bf16.mxu0 %v2640
    %3266 = vmatpush1.bf16.msra.mxu0 %v2639
    %3267 = vmatprep.mubr.bf16.mxu0 %v2189
    %3268 = vmatmul.mubr.bf16.gmra.mrb[0].mxu0 %v2188
    %v3269 = vpop.f32.mrb[0].mxu0
    %v3270 = vadd.f32 %v3229, %v3269
    %v3271 = vpop.f32.mrb[0].mxu0
    %v3272 = vadd.f32 %v3231, %v3271
    %v3273 = vpop.f32.mrb[0].mxu0
    %v3274 = vpop.f32.mrb[0].mxu0
    %3275 = vdwg.mxu0
    %3276 = vmatprep.subr.bf16.mxu0 %v2647
    %3277 = vmatpush1.bf16.msra.mxu0 %v2646
    %3278 = vmatprep.subr.bf16.mxu0 %v2654
    %3279 = vmatpush1.bf16.msra.mxu0 %v2653
    %3280 = vmatprep.subr.bf16.mxu0 %v2661
    %3281 = vmatpush1.bf16.msra.mxu0 %v2660
    %3282 = vmatprep.subr.bf16.mxu0 %v2668
    %3283 = vmatpush1.bf16.msra.mxu0 %v2667
    %3284 = vmatprep.subr.bf16.mxu0 %v2675
    %3285 = vmatpush1.bf16.msra.mxu0 %v2674
    %3286 = vmatprep.subr.bf16.mxu0 %v2682
    %3287 = vmatpush1.bf16.msra.mxu0 %v2681
    %3288 = vmatprep.subr.bf16.mxu0 %v2689
    %3289 = vmatpush1.bf16.msra.mxu0 %v2688
    %3290 = vmatprep.subr.bf16.mxu0 %v2696
    %3291 = vmatpush1.bf16.msra.mxu0 %v2695
    %3292 = vmatprep.subr.bf16.mxu0 %v2703
    %3293 = vmatpush1.bf16.msra.mxu0 %v2702
    %3294 = vmatprep.subr.bf16.mxu0 %v2710
    %3295 = vmatpush1.bf16.msra.mxu0 %v2709
    %3296 = vmatprep.subr.bf16.mxu0 %v2717
    %3297 = vmatpush1.bf16.msra.mxu0 %v2716
    %3298 = vmatprep.subr.bf16.mxu0 %v2724
    %3299 = vmatpush1.bf16.msra.mxu0 %v2723
    %3300 = vmatprep.subr.bf16.mxu0 %v2731
    %3301 = vmatpush1.bf16.msra.mxu0 %v2730
    %3302 = vmatprep.subr.bf16.mxu0 %v2738
    %3303 = vmatpush1.bf16.msra.mxu0 %v2737
    %3304 = vmatprep.subr.bf16.mxu0 %v2745
    %3305 = vmatpush1.bf16.msra.mxu0 %v2744
    %3306 = vmatprep.subr.bf16.mxu0 %v2752
    %3307 = vmatpush1.bf16.msra.mxu0 %v2751
    %3308 = vmatprep.mubr.bf16.mxu0 %v2191
    %3309 = vmatmul.mubr.bf16.gmra.mrb[0].mxu0 %v2190
    %v3310 = vpop.f32.mrb[0].mxu0
    %v3311 = vadd.f32 %v3270, %v3310
    %v3312 = vpop.f32.mrb[0].mxu0
    %v3313 = vadd.f32 %v3272, %v3312
    %v3314 = vpop.f32.mrb[0].mxu0
    %v3315 = vpop.f32.mrb[0].mxu0
    %3316 = vdwg.mxu0
    %3317 = vmatprep.subr.bf16.mxu0 %v2759
    %3318 = vmatpush1.bf16.msra.mxu0 %v2758
    %3319 = vmatprep.subr.bf16.mxu0 %v2766
    %3320 = vmatpush1.bf16.msra.mxu0 %v2765
    %3321 = vmatprep.subr.bf16.mxu0 %v2773
    %3322 = vmatpush1.bf16.msra.mxu0 %v2772
    %3323 = vmatprep.subr.bf16.mxu0 %v2780
    %3324 = vmatpush1.bf16.msra.mxu0 %v2779
    %3325 = vmatprep.subr.bf16.mxu0 %v2787
    %3326 = vmatpush1.bf16.msra.mxu0 %v2786
    %3327 = vmatprep.subr.bf16.mxu0 %v2794
    %3328 = vmatpush1.bf16.msra.mxu0 %v2793
    %3329 = vmatprep.subr.bf16.mxu0 %v2801
    %3330 = vmatpush1.bf16.msra.mxu0 %v2800
    %3331 = vmatprep.subr.bf16.mxu0 %v2808
    %3332 = vmatpush1.bf16.msra.mxu0 %v2807
    %3333 = vmatprep.subr.bf16.mxu0 %v2815
    %3334 = vmatpush1.bf16.msra.mxu0 %v2814
    %3335 = vmatprep.subr.bf16.mxu0 %v2822
    %3336 = vmatpush1.bf16.msra.mxu0 %v2821
    %3337 = vmatprep.subr.bf16.mxu0 %v2829
    %3338 = vmatpush1.bf16.msra.mxu0 %v2828
    %3339 = vmatprep.subr.bf16.mxu0 %v2836
    %3340 = vmatpush1.bf16.msra.mxu0 %v2835
    %3341 = vmatprep.subr.bf16.mxu0 %v2843
    %3342 = vmatpush1.bf16.msra.mxu0 %v2842
    %3343 = vmatprep.subr.bf16.mxu0 %v2850
    %3344 = vmatpush1.bf16.msra.mxu0 %v2849
    %3345 = vmatprep.subr.bf16.mxu0 %v2857
    %3346 = vmatpush1.bf16.msra.mxu0 %v2856
    %3347 = vmatprep.subr.bf16.mxu0 %v2864
    %3348 = vmatpush1.bf16.msra.mxu0 %v2863
    %3349 = vmatprep.mubr.bf16.mxu0 %v2193
    %3350 = vmatmul.mubr.bf16.gmra.mrb[0].mxu0 %v2192
    %v3351 = vpop.f32.mrb[0].mxu0
    %v3352 = vadd.f32 %v3311, %v3351
    %v3353 = vpop.f32.mrb[0].mxu0
    %v3354 = vadd.f32 %v3313, %v3353
    %v3355 = vpop.f32.mrb[0].mxu0
    %v3356 = vpop.f32.mrb[0].mxu0
    %3357 = vdwg.mxu0
    %3358 = vmatprep.subr.bf16.mxu0 0
    %3359 = vmatpush1.bf16.msra.mxu0 %v2424
    %3360 = vmatprep.subr.bf16.mxu0 0
    %3361 = vmatpush1.bf16.msra.mxu0 %v2431
    %3362 = vmatprep.subr.bf16.mxu0 0
    %3363 = vmatpush1.bf16.msra.mxu0 %v2438
    %3364 = vmatprep.subr.bf16.mxu0 0
    %3365 = vmatpush1.bf16.msra.mxu0 %v2445
    %3366 = vmatprep.subr.bf16.mxu0 0
    %3367 = vmatpush1.bf16.msra.mxu0 %v2452
    %3368 = vmatprep.subr.bf16.mxu0 0
    %3369 = vmatpush1.bf16.msra.mxu0 %v2459
    %3370 = vmatprep.subr.bf16.mxu0 0
    %3371 = vmatpush1.bf16.msra.mxu0 %v2466
    %3372 = vmatprep.subr.bf16.mxu0 0
    %3373 = vmatpush1.bf16.msra.mxu0 %v2473
    %3374 = vmatprep.subr.bf16.mxu0 0
    %3375 = vmatpush1.bf16.msra.mxu0 %v2480
    %3376 = vmatprep.subr.bf16.mxu0 0
    %3377 = vmatpush1.bf16.msra.mxu0 %v2487
    %3378 = vmatprep.subr.bf16.mxu0 0
    %3379 = vmatpush1.bf16.msra.mxu0 %v2494
    %3380 = vmatprep.subr.bf16.mxu0 0
    %3381 = vmatpush1.bf16.msra.mxu0 %v2501
    %3382 = vmatprep.subr.bf16.mxu0 0
    %3383 = vmatpush1.bf16.msra.mxu0 %v2508
    %3384 = vmatprep.subr.bf16.mxu0 0
    %3385 = vmatpush1.bf16.msra.mxu0 %v2515
    %3386 = vmatprep.subr.bf16.mxu0 0
    %3387 = vmatpush1.bf16.msra.mxu0 %v2522
    %3388 = vmatprep.subr.bf16.mxu0 0
    %3389 = vmatpush1.bf16.msra.mxu0 %v2529
    %3390 = vmatprep.mubr.bf16.mxu0 %v2187
    %3391 = vmatmul.mubr.bf16.gmra.mrb[0].mxu0 %v2186
    %v3392 = vpop.f32.mrb[0].mxu0
    %v3393 = vadd.f32 0.0, %v3392
    %v3394 = vpop.f32.mrb[0].mxu0
    %v3395 = vpop.f32.mrb[0].mxu0
    %v3396 = vpop.f32.mrb[0].mxu0
    %3397 = vdwg.mxu0
    %3398 = vmatprep.subr.bf16.mxu0 0
    %3399 = vmatpush1.bf16.msra.mxu0 %v2536
    %3400 = vmatprep.subr.bf16.mxu0 0
    %3401 = vmatpush1.bf16.msra.mxu0 %v2543
    %3402 = vmatprep.subr.bf16.mxu0 0
    %3403 = vmatpush1.bf16.msra.mxu0 %v2550
    %3404 = vmatprep.subr.bf16.mxu0 0
    %3405 = vmatpush1.bf16.msra.mxu0 %v2557
    %3406 = vmatprep.subr.bf16.mxu0 0
    %3407 = vmatpush1.bf16.msra.mxu0 %v2564
    %3408 = vmatprep.subr.bf16.mxu0 0
    %3409 = vmatpush1.bf16.msra.mxu0 %v2571
    %3410 = vmatprep.subr.bf16.mxu0 0
    %3411 = vmatpush1.bf16.msra.mxu0 %v2578
    %3412 = vmatprep.subr.bf16.mxu0 0
    %3413 = vmatpush1.bf16.msra.mxu0 %v2585
    %3414 = vmatprep.subr.bf16.mxu0 0
    %3415 = vmatpush1.bf16.msra.mxu0 %v2592
    %3416 = vmatprep.subr.bf16.mxu0 0
    %3417 = vmatpush1.bf16.msra.mxu0 %v2599
    %3418 = vmatprep.subr.bf16.mxu0 0
    %3419 = vmatpush1.bf16.msra.mxu0 %v2606
    %3420 = vmatprep.subr.bf16.mxu0 0
    %3421 = vmatpush1.bf16.msra.mxu0 %v2613
    %3422 = vmatprep.subr.bf16.mxu0 0
    %3423 = vmatpush1.bf16.msra.mxu0 %v2620
    %3424 = vmatprep.subr.bf16.mxu0 0
    %3425 = vmatpush1.bf16.msra.mxu0 %v2627
    %3426 = vmatprep.subr.bf16.mxu0 0
    %3427 = vmatpush1.bf16.msra.mxu0 %v2634
    %3428 = vmatprep.subr.bf16.mxu0 0
    %3429 = vmatpush1.bf16.msra.mxu0 %v2641
    %3430 = vmatprep.mubr.bf16.mxu0 %v2189
    %3431 = vmatmul.mubr.bf16.gmra.mrb[0].mxu0 %v2188
    %v3432 = vpop.f32.mrb[0].mxu0
    %v3433 = vadd.f32 %v3393, %v3432
    %v3434 = vpop.f32.mrb[0].mxu0
    %v3435 = vpop.f32.mrb[0].mxu0
    %v3436 = vpop.f32.mrb[0].mxu0
    %3437 = vdwg.mxu0
    %3438 = vmatprep.subr.bf16.mxu0 0
    %3439 = vmatpush1.bf16.msra.mxu0 %v2648
    %3440 = vmatprep.subr.bf16.mxu0 0
    %3441 = vmatpush1.bf16.msra.mxu0 %v2655
    %3442 = vmatprep.subr.bf16.mxu0 0
    %3443 = vmatpush1.bf16.msra.mxu0 %v2662
    %3444 = vmatprep.subr.bf16.mxu0 0
    %3445 = vmatpush1.bf16.msra.mxu0 %v2669
    %3446 = vmatprep.subr.bf16.mxu0 0
    %3447 = vmatpush1.bf16.msra.mxu0 %v2676
    %3448 = vmatprep.subr.bf16.mxu0 0
    %3449 = vmatpush1.bf16.msra.mxu0 %v2683
    %3450 = vmatprep.subr.bf16.mxu0 0
    %3451 = vmatpush1.bf16.msra.mxu0 %v2690
    %3452 = vmatprep.subr.bf16.mxu0 0
    %3453 = vmatpush1.bf16.msra.mxu0 %v2697
    %3454 = vmatprep.subr.bf16.mxu0 0
    %3455 = vmatpush1.bf16.msra.mxu0 %v2704
    %3456 = vmatprep.subr.bf16.mxu0 0
    %3457 = vmatpush1.bf16.msra.mxu0 %v2711
    %3458 = vmatprep.subr.bf16.mxu0 0
    %3459 = vmatpush1.bf16.msra.mxu0 %v2718
    %3460 = vmatprep.subr.bf16.mxu0 0
    %3461 = vmatpush1.bf16.msra.mxu0 %v2725
    %3462 = vmatprep.subr.bf16.mxu0 0
    %3463 = vmatpush1.bf16.msra.mxu0 %v2732
    %3464 = vmatprep.subr.bf16.mxu0 0
    %3465 = vmatpush1.bf16.msra.mxu0 %v2739
    %3466 = vmatprep.subr.bf16.mxu0 0
    %3467 = vmatpush1.bf16.msra.mxu0 %v2746
    %3468 = vmatprep.subr.bf16.mxu0 0
    %3469 = vmatpush1.bf16.msra.mxu0 %v2753
    %3470 = vmatprep.mubr.bf16.mxu0 %v2191
    %3471 = vmatmul.mubr.bf16.gmra.mrb[0].mxu0 %v2190
    %v3472 = vpop.f32.mrb[0].mxu0
    %v3473 = vadd.f32 %v3433, %v3472
    %v3474 = vpop.f32.mrb[0].mxu0
    %v3475 = vpop.f32.mrb[0].mxu0
    %v3476 = vpop.f32.mrb[0].mxu0
    %3477 = vdwg.mxu0
    %3478 = vmatprep.subr.bf16.mxu0 0
    %3479 = vmatpush1.bf16.msra.mxu0 %v2760
    %3480 = vmatprep.subr.bf16.mxu0 0
    %3481 = vmatpush1.bf16.msra.mxu0 %v2767
    %3482 = vmatprep.subr.bf16.mxu0 0
    %3483 = vmatpush1.bf16.msra.mxu0 %v2774
    %3484 = vmatprep.subr.bf16.mxu0 0
    %3485 = vmatpush1.bf16.msra.mxu0 %v2781
    %3486 = vmatprep.subr.bf16.mxu0 0
    %3487 = vmatpush1.bf16.msra.mxu0 %v2788
    %3488 = vmatprep.subr.bf16.mxu0 0
    %3489 = vmatpush1.bf16.msra.mxu0 %v2795
    %3490 = vmatprep.subr.bf16.mxu0 0
    %3491 = vmatpush1.bf16.msra.mxu0 %v2802
    %3492 = vmatprep.subr.bf16.mxu0 0
    %3493 = vmatpush1.bf16.msra.mxu0 %v2809
    %3494 = vmatprep.subr.bf16.mxu0 0
    %3495 = vmatpush1.bf16.msra.mxu0 %v2816
    %3496 = vmatprep.subr.bf16.mxu0 0
    %3497 = vmatpush1.bf16.msra.mxu0 %v2823
    %3498 = vmatprep.subr.bf16.mxu0 0
    %3499 = vmatpush1.bf16.msra.mxu0 %v2830
    %3500 = vmatprep.subr.bf16.mxu0 0
    %3501 = vmatpush1.bf16.msra.mxu0 %v2837
    %3502 = vmatprep.subr.bf16.mxu0 0
    %3503 = vmatpush1.bf16.msra.mxu0 %v2844
    %3504 = vmatprep.subr.bf16.mxu0 0
    %3505 = vmatpush1.bf16.msra.mxu0 %v2851
    %3506 = vmatprep.subr.bf16.mxu0 0
    %3507 = vmatpush1.bf16.msra.mxu0 %v2858
    %3508 = vmatprep.subr.bf16.mxu0 0
    %3509 = vmatpush1.bf16.msra.mxu0 %v2865
    %3510 = vmatprep.mubr.bf16.mxu0 %v2193
    %3511 = vmatmul.mubr.bf16.gmra.mrb[0].mxu0 %v2192
    %v3512 = vpop.f32.mrb[0].mxu0
    %v3513 = vadd.f32 %v3473, %v3512
    %v3514 = vpop.f32.mrb[0].mxu0
    %v3515 = vpop.f32.mrb[0].mxu0
    %v3516 = vpop.f32.mrb[0].mxu0
    %3517 = vdwg.mxu0
    %v3518 = vld [vmem:[%s15] sm:$0xff]
    %v3520 = vlaneseq
    %v3521 = vshrl.u32 %v3520, 7
    %v3522 = vsub.s32 0, %v3521
    %v3523 = vrot.slane %v3518, %v3522
    %v3524 = vlaneseq
    %v3525 = vshrl.u32 %v3524, 7
    %v3526 = vsub.s32 1, %v3525
    %v3527 = vrot.slane %v3518, %v3526
    %v3528 = vlaneseq
    %v3529 = vshrl.u32 %v3528, 7
    %v3530 = vsub.s32 2, %v3529
    %v3531 = vrot.slane %v3518, %v3530
    %v3532 = vlaneseq
    %v3533 = vshrl.u32 %v3532, 7
    %v3534 = vsub.s32 3, %v3533
    %v3535 = vrot.slane %v3518, %v3534
    %v3536 = vlaneseq
    %v3537 = vshrl.u32 %v3536, 7
    %v3538 = vsub.s32 4, %v3537
    %v3539 = vrot.slane %v3518, %v3538
    %v3540 = vlaneseq
    %v3541 = vshrl.u32 %v3540, 7
    %v3542 = vsub.s32 5, %v3541
    %v3543 = vrot.slane %v3518, %v3542
    %v3544 = vlaneseq
    %v3545 = vshrl.u32 %v3544, 7
    %v3546 = vsub.s32 6, %v3545
    %v3547 = vrot.slane %v3518, %v3546
    %v3555 = vmul.f32 %v3024, %v3523
    %v3556 = vmul.f32 %v3026, %v3527
    %v3557 = vmul.f32 %v3188, %v3531
    %v3558 = vmul.f32 %v3190, %v3535
    %v3559 = vmul.f32 %v3352, %v3539
    %v3560 = vmul.f32 %v3354, %v3543
    %v3561 = vmul.f32 %v3513, %v3547
    %v3562 = vld [vmem:[%s16] sm:$0xff]
    %v3564 = vlaneseq
    %v3565 = vshrl.u32 %v3564, 7
    %v3566 = vsub.s32 0, %v3565
    %v3567 = vrot.slane %v3562, %v3566
    %v3568 = vlaneseq
    %v3569 = vshrl.u32 %v3568, 7
    %v3570 = vsub.s32 1, %v3569
    %v3571 = vrot.slane %v3562, %v3570
    %v3572 = vlaneseq
    %v3573 = vshrl.u32 %v3572, 7
    %v3574 = vsub.s32 2, %v3573
    %v3575 = vrot.slane %v3562, %v3574
    %v3576 = vlaneseq
    %v3577 = vshrl.u32 %v3576, 7
    %v3578 = vsub.s32 3, %v3577
    %v3579 = vrot.slane %v3562, %v3578
    %v3580 = vlaneseq
    %v3581 = vshrl.u32 %v3580, 7
    %v3582 = vsub.s32 4, %v3581
    %v3583 = vrot.slane %v3562, %v3582
    %v3584 = vlaneseq
    %v3585 = vshrl.u32 %v3584, 7
    %v3586 = vsub.s32 5, %v3585
    %v3587 = vrot.slane %v3562, %v3586
    %v3588 = vlaneseq
    %v3589 = vshrl.u32 %v3588, 7
    %v3590 = vsub.s32 6, %v3589
    %v3591 = vrot.slane %v3562, %v3590
    %v3599 = vadd.f32 %v3555, %v3567
    %v3600 = vadd.f32 %v3556, %v3571
    %v3601 = vadd.f32 %v3557, %v3575
    %v3602 = vadd.f32 %v3558, %v3579
    %v3603 = vadd.f32 %v3559, %v3583
    %v3604 = vadd.f32 %v3560, %v3587
    %v3605 = vadd.f32 %v3561, %v3591
    %v3606 = vtanh.pop %v3599
    %v3607 = vtanh.pop %v3600
    %v3608 = vtanh.pop %v3601
    %v3609 = vtanh.pop %v3602
    %v3610 = vtanh.pop %v3603
    %v3611 = vtanh.pop %v3604
    %v3612 = vtanh.pop %v3605
    %v3613 = vpack.c.bf16 %v3606, %v3606
    %v3614 = vpack.c.bf16 %v3607, %v3607
    %v3615 = vpack.c.bf16 %v3608, %v3608
    %v3616 = vpack.c.bf16 %v3609, %v3609
    %v3617 = vpack.c.bf16 %v3610, %v3610
    %v3618 = vpack.c.bf16 %v3611, %v3611
    %v3619 = vpack.c.bf16 %v3612, %v3612
    %v3627 = vunpack.c.l.b16 %v3613
    %v3628 = vunpack.c.l.b16 %v3614
    %v3629 = vunpack.c.l.b16 %v3615
    %v3630 = vunpack.c.l.b16 %v3616
    %v3631 = vunpack.c.l.b16 %v3617
    %v3632 = vunpack.c.l.b16 %v3618
    %v3633 = vunpack.c.l.b16 %v3619
    %v3634 = vpack.c.b16 %v3628, %v3627
    %v3635 = vpack.c.b16 %v3630, %v3629
    %v3636 = vpack.c.b16 %v3632, %v3631
    %v3637 = vpack.c.b16 %v3633, %v3633
    %3642 = vst [vmem:[#allocation23] sm:$0xff] %v3634
    %3643 = vst [vmem:[#allocation23 + $0x8] sm:$0xff] %v3635
    %3644 = vst [vmem:[#allocation23 + $0x10] sm:$0xff] %v3636
    %3645 = vst [vmem:[#allocation23 + $0x18] sm:$0xf] %v3637
    // Predicated region
    $region122: #{tpu_custom_call.1} parent=1 // pred_check
      _
    $region123: #{tpu_custom_call.1} parent=1 // pred_check_branch
      %3647 = sbr.rel (0) target = $region125
    $region124: #{tpu_custom_call.1} parent=1 // pred_region
      %s3649 = ssub.s32 448, 448
      %3650 = vsyncadd [#allocation7], %s3649
      %s3652 = sshll.u32 [#allocation23], 4
      %s3653 = int_to_ptr.vmem [resolvable:$true] %s3652
      %3655 = dma.vmem_to_hbm [thread:$0]  %s3653, 448, %s19, [#allocation7]
    $region125: #{tpu_custom_call.1} parent=1 // pred_fallthru
      _
    // Predicated region
    $region126: #{tpu_custom_call.1} parent=1 // pred_check
      _
    $region127: #{tpu_custom_call.1} parent=1 // pred_check_branch
      %3657 = sbr.rel (0) target = $region129
    $region128: #{tpu_custom_call.1} parent=1 // pred_region
      %3658 = dma.done [#allocation7], 448
    $region129: #{tpu_custom_call.1} parent=1 // pred_fallthru
      _
    %3659 = vsyncpa [#allocation6], 1
    %3660 = vsyncpa [#allocation9], 1
    %3661 = vsyncpa [#allocation12], 1
    %3662 = vsyncpa [#allocation15], 1
    %3663 = vsyncpa [#allocation18], 1
    %3664 = vsyncpa [#allocation21], 1
    %3665 = vsyncpa [#allocation7], 1
  %3666 = vsyncmov [#allocation4]
  %s3667 = vpop.sfrf %3666
  %p3668 = scmp.eq.s32.totalorder %s3667, 0
  %p3669 = pneg %p3668
  %3671 = shalt.err (%p3669)
  %s3672 = scalar_lea.sflag [#allocation4], 1
  %3673 = vsyncmov %s3672
  %s3674 = vpop.sfrf %3673
  %p3675 = scmp.eq.s32.totalorder %s3674, 0
  %p3676 = pneg %p3675
  %3678 = shalt.err (%p3676)

</llo_original>
